<compile_context>
chip_gen: v7x
topology: tpu7x:2x2x1
jax: 0.10.0
libtpu: 0.0.40
codegen_flags: <defaults>
</compile_context>

<pallas_src>
import jax
import jax.numpy as jnp
import numpy as np
from jax import lax
from jax.experimental import pallas as pl
from jax.experimental.pallas import tpu as pltpu

N = 2                                  # batch
H = W = 28                             # spatial size (forced by Linear(14*14*32, 100))
C_OUT = 32
K = 5
POOL_HW = 14
ROWS = N * POOL_HW * POOL_HW           # 392 pooled positions, rows ordered (n, ph, pw)
TAPS6 = 36                             # 6x6 super-patch covering all 4 pool parities
FLAT = POOL_HW * POOL_HW * C_OUT       # 6272, feature order (ph, pw, c)
EPS = 1e-5


# --------------------------------------------------------------------------
# Kernels
# --------------------------------------------------------------------------
def conv_bn_relu_pool_kernel(p_ref, w_ref, shift_ref, out_ref):
    """Fused conv1 (single im2col matmul over all 4 pool parities) + folded BN
    + ReLU + 2x2 max-pool.

    p_ref:     (392, 36)  bf16  6x6 patches, rows ordered (n, ph, pw)
    w_ref:     (36, 128)  bf16  conv weights (BN scale folded), 4 parity blocks of 32 ch
    shift_ref: (1, 128)   f32   folded BN shift (includes conv bias), tiled x4
    out_ref:   (392, 32)  bf16  pooled activations
    """
    z = jnp.dot(p_ref[...], w_ref[...], preferred_element_type=jnp.float32)
    z = jnp.maximum(z + shift_ref[...], 0.0)            # (392, 128): 4 parity blocks
    # Max-pool = max over the 4 parity lane-blocks (shifts are multiples of 32,
    # so channel alignment is preserved); result lives in lanes [0, 32).
    m = jnp.maximum(z, pltpu.roll(z, 64, axis=1))
    m = jnp.maximum(m, pltpu.roll(m, 32, axis=1))
    out_ref[...] = m[:, :C_OUT].astype(out_ref.dtype)   # bf16 cast at store time


def mlp_kernel(x_ref, w1_ref, b1_ref, w2_ref, b2_ref, w3_ref, b3_ref, out_ref):
    """linear -> relu -> linear1 -> relu -> linear2.

    Activations/weights in bf16, accumulation + biases in f32."""
    h = jnp.dot(x_ref[...], w1_ref[...], preferred_element_type=jnp.float32) + b1_ref[...]
    h = jnp.maximum(h, 0.0).astype(jnp.bfloat16)
    h = jnp.dot(h, w2_ref[...], preferred_element_type=jnp.float32) + b2_ref[...]
    h = jnp.maximum(h, 0.0).astype(jnp.bfloat16)
    out_ref[...] = jnp.dot(h, w3_ref[...], preferred_element_type=jnp.float32) + b3_ref[...]


# --------------------------------------------------------------------------
# pallas_call wrappers
# --------------------------------------------------------------------------
def _full_spec(shape):
    nd = len(shape)
    return pl.BlockSpec(shape, lambda i, nd=nd: (0,) * nd)


def conv_stage(patches_bf16, w36_bf16, shift128_f32):
    return pl.pallas_call(
        conv_bn_relu_pool_kernel,
        out_shape=jax.ShapeDtypeStruct((ROWS, C_OUT), jnp.bfloat16),
        grid=(1,),
        in_specs=[_full_spec(patches_bf16.shape), _full_spec(w36_bf16.shape),
                  _full_spec(shift128_f32.shape)],
        out_specs=_full_spec((ROWS, C_OUT)),
        compiler_params=pltpu.CompilerParams(dimension_semantics=("arbitrary",)),
    )(patches_bf16, w36_bf16, shift128_f32)


def mlp_stage(flat_bf16, w1t, b1, w2t, b2, w3t, b3):
    return pl.pallas_call(
        mlp_kernel,
        out_shape=jax.ShapeDtypeStruct((N, 10), jnp.float32),
        grid=(1,),
        in_specs=[_full_spec(flat_bf16.shape), _full_spec(w1t.shape), _full_spec(b1.shape),
                  _full_spec(w2t.shape), _full_spec(b2.shape),
                  _full_spec(w3t.shape), _full_spec(b3.shape)],
        out_specs=_full_spec((N, 10)),
        compiler_params=pltpu.CompilerParams(dimension_semantics=("arbitrary",)),
    )(flat_bf16, w1t, b1, w2t, b2, w3t, b3)


# --------------------------------------------------------------------------
# Parameter init (PyTorch-layout params)
# --------------------------------------------------------------------------
def init_params(key):
    ks = jax.random.split(key, 12)
    wconv = jax.random.normal(ks[0], (32, 1, 5, 5), jnp.float32) * 0.1   # OIHW
    bconv = jax.random.normal(ks[1], (32,), jnp.float32) * 0.1
    gamma = 1.0 + 0.1 * jax.random.normal(ks[2], (32,), jnp.float32)
    beta  = 0.1 * jax.random.normal(ks[3], (32,), jnp.float32)
    rmean = 0.1 * jax.random.normal(ks[4], (32,), jnp.float32)
    rvar  = 0.9 + 0.1 * jnp.abs(jax.random.normal(ks[5], (32,), jnp.float32))
    w1 = jax.random.normal(ks[6], (100, FLAT), jnp.float32) * 0.02       # (out, in)
    b1 = jax.random.normal(ks[7], (100,), jnp.float32) * 0.02
    w2 = jax.random.normal(ks[8], (50, 100), jnp.float32) * 0.05
    b2 = jax.random.normal(ks[9], (50,), jnp.float32) * 0.05
    w3 = jax.random.normal(ks[10], (10, 50), jnp.float32) * 0.05
    b3 = jax.random.normal(ks[11], (10,), jnp.float32) * 0.05
    return (wconv, bconv, gamma, beta, rmean, rvar, w1, b1, w2, b2, w3, b3)


# --------------------------------------------------------------------------
# One-time parameter prep (hoisted OUT of the per-call forward)
# --------------------------------------------------------------------------
def prepare_params(params):
    """Fold BN into the conv weights, pack the 4 pool-parity weight blocks,
    permute/transpose the MLP weights and cast to bf16.  Run once."""
    (wconv, bconv, gamma, beta, rmean, rvar, w1, b1, w2, b2, w3, b3) = params

    # Fold BN scale into conv weights; build 4 parity blocks of the 6x6 weight.
    s = gamma * lax.rsqrt(rvar + EPS)
    shift = (bconv - rmean) * s + beta                        # includes conv bias
    w_sc = wconv[:, 0] * s[:, None, None]                     # (32, 5, 5)
    blocks = [jnp.pad(w_sc, ((0, 0), (dh, 1 - dh), (dw, 1 - dw))).reshape(C_OUT, TAPS6).T
              for dh in (0, 1) for dw in (0, 1)]              # 4 x (36, 32)
    w36 = jnp.concatenate(blocks, axis=1).astype(jnp.bfloat16)          # (36, 128)
    shift128 = jnp.tile(shift, 4).reshape(1, 4 * C_OUT)                 # (1, 128) f32

    # w1's input-feature axis is permuted from PyTorch (c, ph, pw) order to
    # (ph, pw, c) so that the flatten of the pooled activations is a free
    # row-major reshape.
    w1p = (w1.reshape(100, C_OUT, POOL_HW, POOL_HW)
             .transpose(0, 2, 3, 1).reshape(100, FLAT).T).astype(jnp.bfloat16)
    folded = (w36, shift128,
              w1p, b1.reshape(1, -1),
              w2.T.astype(jnp.bfloat16), b2.reshape(1, -1),
              w3.T.astype(jnp.bfloat16), b3.reshape(1, -1))
    # Materialize on device once so nothing is re-derived per forward call.
    return jax.tree_util.tree_map(jax.block_until_ready,
                                  jax.tree_util.tree_map(jnp.asarray, folded))


# --------------------------------------------------------------------------
# Forward: glue = one patches op (+ bf16 cast) + two free reshapes
# --------------------------------------------------------------------------
@jax.jit
def hdr_forward(x_nchw, folded):
    (w36, shift128, w1p, b1r, w2t, b2r, w3t, b3r) = folded

    # 6x6 / stride-2 patches: pooled pos (ph, pw) covers input rows 2ph-2..2ph+3,
    # cols 2pw-2..2pw+3 -> contains all four 2x2-pool parities' 5x5 conv patches.
    patches = lax.conv_general_dilated_patches(
        x_nchw, filter_shape=(6, 6), window_strides=(2, 2),
        padding=((2, 2), (2, 2)),
        dimension_numbers=('NCHW', 'OIHW', 'NHWC'))          # (N, 14, 14, 36)
    patches = patches.reshape(ROWS, TAPS6).astype(jnp.bfloat16)

    pooled = conv_stage(patches, w36, shift128)               # (392, 32) bf16

    flat = pooled.reshape(N, FLAT)                            # free row-major reshape
    return mlp_stage(flat, w1p, b1r, w2t, b2r, w3t, b3r)


@jax.jit
def hdr_reference(x_nchw, params):
    """Pure-JAX f32 reference mirroring the PyTorch forward (eval-mode BN)."""
    (wconv, bconv, gamma, beta, rmean, rvar, w1, b1, w2, b2, w3, b3) = params
    y = lax.conv_general_dilated(x_nchw, wconv, (1, 1), ((2, 2), (2, 2)),
                                 dimension_numbers=('NCHW', 'OIHW', 'NCHW'))
    y = y + bconv.reshape(1, 32, 1, 1)
    y = (y - rmean.reshape(1, 32, 1, 1)) / jnp.sqrt(rvar.reshape(1, 32, 1, 1) + EPS)
    y = y * gamma.reshape(1, 32, 1, 1) + beta.reshape(1, 32, 1, 1)
    y = jnp.maximum(y, 0.0)
    y = lax.reduce_window(y, -jnp.inf, lax.max, (1, 1, 2, 2), (1, 1, 2, 2), 'VALID')
    y = y.reshape(N, -1)
    y = jnp.maximum(y @ w1.T + b1, 0.0)
    y = jnp.maximum(y @ w2.T + b2, 0.0)
    return y @ w3.T + b3


if __name__ == "__main__":
    key = jax.random.PRNGKey(0)
    kx, kp = jax.random.split(key)
    x = jax.random.normal(kx, (N, 1, H, W), jnp.float32)
    params = init_params(kp)

    folded = prepare_params(params)          # one-time weight prep, outside the forward

    out = hdr_forward(x, folded)
    out = jax.block_until_ready(out)

    ref = jax.block_until_ready(hdr_reference(x, params))
    if not np.allclose(np.asarray(out), np.asarray(ref), rtol=1e-2, atol=1e-2):
        raise AssertionError("Pallas HDR forward does not match JAX reference")

    print("KERNEL_OK")
</pallas_src>

<mosaic_0001>
module attributes {stable_mosaic.version = 11 : i64} {
  func.func @conv_bn_relu_pool_kernel(%arg0: i32, %arg1: memref<392x36xbf16, #tpu.memory_space<vmem>>, %arg2: memref<36x128xbf16, #tpu.memory_space<vmem>>, %arg3: memref<1x128xf32, #tpu.memory_space<vmem>>, %arg4: memref<392x32xbf16, #tpu.memory_space<vmem>>) attributes {dimension_semantics = [#tpu.dimension_semantics<arbitrary>], iteration_bounds = array<i64: 1>, scalar_prefetch = 0 : i64, scratch_operands = 0 : i64, tpu.core_type = #tpu.core_type<tc>, window_params = [{pipeline_mode = #tpu.pipeline_mode<synchronous>, transform_indices = @transform_0, window_bounds = array<i64: 392, 36>}, {pipeline_mode = #tpu.pipeline_mode<synchronous>, transform_indices = @transform_1, window_bounds = array<i64: 36, 128>}, {pipeline_mode = #tpu.pipeline_mode<synchronous>, transform_indices = @transform_2, window_bounds = array<i64: 1, 128>}, {pipeline_mode = #tpu.pipeline_mode<synchronous>, transform_indices = @transform_3, window_bounds = array<i64: 392, 32>}]} {
    %c0 = arith.constant 0 : index
    %c0_0 = arith.constant 0 : index
    %0 = vector.load %arg1[%c0, %c0_0] : memref<392x36xbf16, #tpu.memory_space<vmem>>, vector<392x36xbf16>
    %c0_1 = arith.constant 0 : index
    %c0_2 = arith.constant 0 : index
    %1 = vector.load %arg2[%c0_1, %c0_2] : memref<36x128xbf16, #tpu.memory_space<vmem>>, vector<36x128xbf16>
    %cst = arith.constant dense<0.000000e+00> : vector<392x128xf32>
    %2 = tpu.matmul %0, %1, %cst {dimension_numbers = #tpu.dot_dimension_numbers<[1], [0], [0], [1], [0, 0, 1, 1], [], []>} : vector<392x36xbf16>, vector<36x128xbf16>, vector<392x128xf32> -> vector<392x128xf32>
    %c0_3 = arith.constant 0 : index
    %c0_4 = arith.constant 0 : index
    %3 = vector.load %arg3[%c0_3, %c0_4] : memref<1x128xf32, #tpu.memory_space<vmem>>, vector<1x128xf32>
    %4 = vector.broadcast %3 : vector<1x128xf32> to vector<392x128xf32>
    %5 = arith.addf %2, %4 : vector<392x128xf32>
    %cst_5 = arith.constant 0.000000e+00 : f32
    %6 = vector.broadcast %cst_5 : f32 to vector<392x128xf32>
    %7 = arith.maximumf %5, %6 : vector<392x128xf32>
    %c64_i32 = arith.constant 64 : i32
    %8 = tpu.dynamic_rotate %7 by %c64_i32 dim 1 : vector<392x128xf32>, i32 -> vector<392x128xf32>
    %9 = arith.maximumf %7, %8 : vector<392x128xf32>
    %c32_i32 = arith.constant 32 : i32
    %10 = tpu.dynamic_rotate %9 by %c32_i32 dim 1 : vector<392x128xf32>, i32 -> vector<392x128xf32>
    %11 = arith.maximumf %9, %10 : vector<392x128xf32>
    %12 = vector.extract_strided_slice %11 {offsets = [0, 0], sizes = [392, 32], strides = [1, 1]} : vector<392x128xf32> to vector<392x32xf32>
    %13 = arith.truncf %12 : vector<392x32xf32> to vector<392x32xbf16>
    %c0_6 = arith.constant 0 : index
    %c0_7 = arith.constant 0 : index
    %14 = vector.load %arg4[%c0_6, %c0_7] : memref<392x32xbf16, #tpu.memory_space<vmem>>, vector<392x32xbf16>
    tpu.vector_store %arg4[%c0_6, %c0_7], %13 {strides = array<i32>} : memref<392x32xbf16, #tpu.memory_space<vmem>>, vector<392x32xbf16>,
    return
  }
  func.func @transform_0(%arg0: i32) -> (i32, i32) {
    %c0_i32 = arith.constant 0 : i32
    %c0_i32_0 = arith.constant 0 : i32
    %c0_i32_1 = arith.constant 0 : i32
    return %c0_i32, %c0_i32_0 : i32, i32
  }
  func.func @transform_1(%arg0: i32) -> (i32, i32) {
    %c0_i32 = arith.constant 0 : i32
    %c0_i32_0 = arith.constant 0 : i32
    %c0_i32_1 = arith.constant 0 : i32
    return %c0_i32, %c0_i32_0 : i32, i32
  }
  func.func @transform_2(%arg0: i32) -> (i32, i32) {
    %c0_i32 = arith.constant 0 : i32
    %c0_i32_0 = arith.constant 0 : i32
    %c0_i32_1 = arith.constant 0 : i32
    return %c0_i32, %c0_i32_0 : i32, i32
  }
  func.func @transform_3(%arg0: i32) -> (i32, i32) {
    %c0_i32 = arith.constant 0 : i32
    %c0_i32_0 = arith.constant 0 : i32
    %c0_i32_1 = arith.constant 0 : i32
    return %c0_i32, %c0_i32_0 : i32, i32
  }
}

module attributes {stable_mosaic.version = 11 : i64} {
  func.func @mlp_kernel(%arg0: i32, %arg1: memref<2x6272xbf16, #tpu.memory_space<vmem>>, %arg2: memref<6272x100xbf16, #tpu.memory_space<vmem>>, %arg3: memref<1x100xf32, #tpu.memory_space<vmem>>, %arg4: memref<100x50xbf16, #tpu.memory_space<vmem>>, %arg5: memref<1x50xf32, #tpu.memory_space<vmem>>, %arg6: memref<50x10xbf16, #tpu.memory_space<vmem>>, %arg7: memref<1x10xf32, #tpu.memory_space<vmem>>, %arg8: memref<2x10xf32, #tpu.memory_space<vmem>>) attributes {dimension_semantics = [#tpu.dimension_semantics<arbitrary>], iteration_bounds = array<i64: 1>, scalar_prefetch = 0 : i64, scratch_operands = 0 : i64, tpu.core_type = #tpu.core_type<tc>, window_params = [{pipeline_mode = #tpu.pipeline_mode<synchronous>, transform_indices = @transform_0, window_bounds = array<i64: 2, 6272>}, {pipeline_mode = #tpu.pipeline_mode<synchronous>, transform_indices = @transform_1, window_bounds = array<i64: 6272, 100>}, {pipeline_mode = #tpu.pipeline_mode<synchronous>, transform_indices = @transform_2, window_bounds = array<i64: 1, 100>}, {pipeline_mode = #tpu.pipeline_mode<synchronous>, transform_indices = @transform_3, window_bounds = array<i64: 100, 50>}, {pipeline_mode = #tpu.pipeline_mode<synchronous>, transform_indices = @transform_4, window_bounds = array<i64: 1, 50>}, {pipeline_mode = #tpu.pipeline_mode<synchronous>, transform_indices = @transform_5, window_bounds = array<i64: 50, 10>}, {pipeline_mode = #tpu.pipeline_mode<synchronous>, transform_indices = @transform_6, window_bounds = array<i64: 1, 10>}, {pipeline_mode = #tpu.pipeline_mode<synchronous>, transform_indices = @transform_7, window_bounds = array<i64: 2, 10>}]} {
    %c0 = arith.constant 0 : index
    %c0_0 = arith.constant 0 : index
    %0 = vector.load %arg1[%c0, %c0_0] : memref<2x6272xbf16, #tpu.memory_space<vmem>>, vector<2x6272xbf16>
    %c0_1 = arith.constant 0 : index
    %c0_2 = arith.constant 0 : index
    %1 = vector.load %arg2[%c0_1, %c0_2] : memref<6272x100xbf16, #tpu.memory_space<vmem>>, vector<6272x100xbf16>
    %cst = arith.constant dense<0.000000e+00> : vector<2x100xf32>
    %2 = tpu.matmul %0, %1, %cst {dimension_numbers = #tpu.dot_dimension_numbers<[1], [0], [0], [1], [0, 0, 1, 1], [], []>} : vector<2x6272xbf16>, vector<6272x100xbf16>, vector<2x100xf32> -> vector<2x100xf32>
    %c0_3 = arith.constant 0 : index
    %c0_4 = arith.constant 0 : index
    %3 = vector.load %arg3[%c0_3, %c0_4] : memref<1x100xf32, #tpu.memory_space<vmem>>, vector<1x100xf32>
    %4 = vector.broadcast %3 : vector<1x100xf32> to vector<2x100xf32>
    %5 = arith.addf %2, %4 : vector<2x100xf32>
    %cst_5 = arith.constant 0.000000e+00 : f32
    %6 = vector.broadcast %cst_5 : f32 to vector<2x100xf32>
    %7 = arith.maximumf %5, %6 : vector<2x100xf32>
    %8 = arith.truncf %7 : vector<2x100xf32> to vector<2x100xbf16>
    %c0_6 = arith.constant 0 : index
    %c0_7 = arith.constant 0 : index
    %9 = vector.load %arg4[%c0_6, %c0_7] : memref<100x50xbf16, #tpu.memory_space<vmem>>, vector<100x50xbf16>
    %cst_8 = arith.constant dense<0.000000e+00> : vector<2x50xf32>
    %10 = tpu.matmul %8, %9, %cst_8 {dimension_numbers = #tpu.dot_dimension_numbers<[1], [0], [0], [1], [0, 0, 1, 1], [], []>} : vector<2x100xbf16>, vector<100x50xbf16>, vector<2x50xf32> -> vector<2x50xf32>
    %c0_9 = arith.constant 0 : index
    %c0_10 = arith.constant 0 : index
    %11 = vector.load %arg5[%c0_9, %c0_10] : memref<1x50xf32, #tpu.memory_space<vmem>>, vector<1x50xf32>
    %12 = vector.broadcast %11 : vector<1x50xf32> to vector<2x50xf32>
    %13 = arith.addf %10, %12 : vector<2x50xf32>
    %cst_11 = arith.constant 0.000000e+00 : f32
    %14 = vector.broadcast %cst_11 : f32 to vector<2x50xf32>
    %15 = arith.maximumf %13, %14 : vector<2x50xf32>
    %16 = arith.truncf %15 : vector<2x50xf32> to vector<2x50xbf16>
    %c0_12 = arith.constant 0 : index
    %c0_13 = arith.constant 0 : index
    %17 = vector.load %arg6[%c0_12, %c0_13] : memref<50x10xbf16, #tpu.memory_space<vmem>>, vector<50x10xbf16>
    %cst_14 = arith.constant dense<0.000000e+00> : vector<2x10xf32>
    %18 = tpu.matmul %16, %17, %cst_14 {dimension_numbers = #tpu.dot_dimension_numbers<[1], [0], [0], [1], [0, 0, 1, 1], [], []>} : vector<2x50xbf16>, vector<50x10xbf16>, vector<2x10xf32> -> vector<2x10xf32>
    %c0_15 = arith.constant 0 : index
    %c0_16 = arith.constant 0 : index
    %19 = vector.load %arg7[%c0_15, %c0_16] : memref<1x10xf32, #tpu.memory_space<vmem>>, vector<1x10xf32>
    %20 = vector.broadcast %19 : vector<1x10xf32> to vector<2x10xf32>
    %21 = arith.addf %18, %20 : vector<2x10xf32>
    %c0_17 = arith.constant 0 : index
    %c0_18 = arith.constant 0 : index
    %22 = vector.load %arg8[%c0_17, %c0_18] : memref<2x10xf32, #tpu.memory_space<vmem>>, vector<2x10xf32>
    tpu.vector_store %arg8[%c0_17, %c0_18], %21 {strides = array<i32>} : memref<2x10xf32, #tpu.memory_space<vmem>>, vector<2x10xf32>,
    return
  }
  func.func @transform_0(%arg0: i32) -> (i32, i32) {
    %c0_i32 = arith.constant 0 : i32
    %c0_i32_0 = arith.constant 0 : i32
    %c0_i32_1 = arith.constant 0 : i32
    return %c0_i32, %c0_i32_0 : i32, i32
  }
  func.func @transform_1(%arg0: i32) -> (i32, i32) {
    %c0_i32 = arith.constant 0 : i32
    %c0_i32_0 = arith.constant 0 : i32
    %c0_i32_1 = arith.constant 0 : i32
    return %c0_i32, %c0_i32_0 : i32, i32
  }
  func.func @transform_2(%arg0: i32) -> (i32, i32) {
    %c0_i32 = arith.constant 0 : i32
    %c0_i32_0 = arith.constant 0 : i32
    %c0_i32_1 = arith.constant 0 : i32
    return %c0_i32, %c0_i32_0 : i32, i32
  }
  func.func @transform_3(%arg0: i32) -> (i32, i32) {
    %c0_i32 = arith.constant 0 : i32
    %c0_i32_0 = arith.constant 0 : i32
    %c0_i32_1 = arith.constant 0 : i32
    return %c0_i32, %c0_i32_0 : i32, i32
  }
  func.func @transform_4(%arg0: i32) -> (i32, i32) {
    %c0_i32 = arith.constant 0 : i32
    %c0_i32_0 = arith.constant 0 : i32
    %c0_i32_1 = arith.constant 0 : i32
    return %c0_i32, %c0_i32_0 : i32, i32
  }
  func.func @transform_5(%arg0: i32) -> (i32, i32) {
    %c0_i32 = arith.constant 0 : i32
    %c0_i32_0 = arith.constant 0 : i32
    %c0_i32_1 = arith.constant 0 : i32
    return %c0_i32, %c0_i32_0 : i32, i32
  }
  func.func @transform_6(%arg0: i32) -> (i32, i32) {
    %c0_i32 = arith.constant 0 : i32
    %c0_i32_0 = arith.constant 0 : i32
    %c0_i32_1 = arith.constant 0 : i32
    return %c0_i32, %c0_i32_0 : i32, i32
  }
  func.func @transform_7(%arg0: i32) -> (i32, i32) {
    %c0_i32 = arith.constant 0 : i32
    %c0_i32_0 = arith.constant 0 : i32
    %c0_i32_1 = arith.constant 0 : i32
    return %c0_i32, %c0_i32_0 : i32, i32
  }
}

</mosaic_0001>

<llo_original>
// kernel: hdr_forward.2
$region0: #{hdr_forward.2}
  #allocation0 [shape = 'u32[]', space=smem, size = 0x4, offset = 0x4, fixed_abs, tag = 'smem constant byte address 0x4 - core index']
  #allocation1 [shape = 'u32[144,128]{1,0:T(1,128)}', space=vmem, size = 0x12000, scoped, tag = 'internal scratch']
  %s0 = inlined_call_operand.vmem [shape: bf16[392,36], index: 0, kind: input, shape index: {}]
  %s1 = inlined_call_operand.vmem [shape: bf16[36,128], index: 1, kind: input, shape index: {}]
  %s2 = inlined_call_operand.vmem [shape: f32[1,128], index: 2, kind: input, shape index: {}]
  %s3 = inlined_call_operand.vmem [shape: bf16[392,32], index: 3, kind: output, shape index: {}]
  %s4 = sld [smem:[#allocation0]]
  $region22: #{hdr_forward.2} parent=0
    _
  %s6 = ssub.s32 1, %s4
  %s7 = scalar_select 0, %s6, %s4
  // Predicated region
  $region2: #{hdr_forward.2} parent=0 // pred_check
    _
  $region3: #{hdr_forward.2} parent=0 // pred_check_branch
    %9 = sbr.rel (0) target = $region5
  $region4: #{hdr_forward.2} parent=0 // pred_region
    _
  $region5: #{hdr_forward.2} parent=0 // pred_fallthru
    _
  // Predicated region
  $region6: #{hdr_forward.2} parent=0 // pred_check
    _
  $region7: #{hdr_forward.2} parent=0 // pred_check_branch
    %11 = sbr.rel (0) target = $region9
  $region8: #{hdr_forward.2} parent=0 // pred_region
    _
  $region9: #{hdr_forward.2} parent=0 // pred_fallthru
    _
  // Predicated region
  $region10: #{hdr_forward.2} parent=0 // pred_check
    _
  $region11: #{hdr_forward.2} parent=0 // pred_check_branch
    %13 = sbr.rel (0) target = $region13
  $region12: #{hdr_forward.2} parent=0 // pred_region
    _
  $region13: #{hdr_forward.2} parent=0 // pred_fallthru
    _
  %v15 = vld [vmem:[%s0] sm:$0xf]
  %v16 = vld [vmem:[%s0 + $0x4] sm:$0xf]
  %v17 = vld [vmem:[%s0 + $0x8] sm:$0xf]
  %v18 = vld [vmem:[%s0 + $0xc] sm:$0xf]
  %v19 = vld [vmem:[%s0 + $0x10] sm:$0xf]
  %v20 = vld [vmem:[%s0 + $0x14] sm:$0xf]
  %v21 = vld [vmem:[%s0 + $0x18] sm:$0xf]
  %v22 = vld [vmem:[%s0 + $0x1c] sm:$0xf]
  %v23 = vld [vmem:[%s0 + $0x20] sm:$0xf]
  %v24 = vld [vmem:[%s0 + $0x24] sm:$0xf]
  %v25 = vld [vmem:[%s0 + $0x28] sm:$0xf]
  %v26 = vld [vmem:[%s0 + $0x2c] sm:$0xf]
  %v27 = vld [vmem:[%s0 + $0x30] sm:$0xf]
  %v28 = vld [vmem:[%s0 + $0x34] sm:$0xf]
  %v29 = vld [vmem:[%s0 + $0x38] sm:$0xf]
  %v30 = vld [vmem:[%s0 + $0x3c] sm:$0xf]
  %v31 = vld [vmem:[%s0 + $0x40] sm:$0xf]
  %v32 = vld [vmem:[%s0 + $0x44] sm:$0xf]
  %v33 = vld [vmem:[%s0 + $0x48] sm:$0xf]
  %v34 = vld [vmem:[%s0 + $0x4c] sm:$0xf]
  %v35 = vld [vmem:[%s0 + $0x50] sm:$0xf]
  %v36 = vld [vmem:[%s0 + $0x54] sm:$0xf]
  %v37 = vld [vmem:[%s0 + $0x58] sm:$0xf]
  %v38 = vld [vmem:[%s0 + $0x5c] sm:$0xf]
  %v39 = vld [vmem:[%s0 + $0x60] sm:$0xf]
  %v40 = vld [vmem:[%s0 + $0x64] sm:$0xf]
  %v41 = vld [vmem:[%s0 + $0x68] sm:$0xf]
  %v42 = vld [vmem:[%s0 + $0x6c] sm:$0xf]
  %v43 = vld [vmem:[%s0 + $0x70] sm:$0xf]
  %v44 = vld [vmem:[%s0 + $0x74] sm:$0xf]
  %v45 = vld [vmem:[%s0 + $0x78] sm:$0xf]
  %v46 = vld [vmem:[%s0 + $0x7c] sm:$0xf]
  %v47 = vld [vmem:[%s0 + $0x80] sm:$0xf]
  %v48 = vld [vmem:[%s0 + $0x84] sm:$0xf]
  %v49 = vld [vmem:[%s0 + $0x88] sm:$0xf]
  %v50 = vld [vmem:[%s0 + $0x8c] sm:$0xf]
  %v51 = vld [vmem:[%s0 + $0x90] sm:$0xf]
  %v52 = vld [vmem:[%s0 + $0x94] sm:$0xf]
  %v53 = vld [vmem:[%s0 + $0x98] sm:$0xf]
  %v54 = vld [vmem:[%s0 + $0x9c] sm:$0xf]
  %v55 = vld [vmem:[%s0 + $0xa0] sm:$0xf]
  %v56 = vld [vmem:[%s0 + $0xa4] sm:$0xf]
  %v57 = vld [vmem:[%s0 + $0xa8] sm:$0xf]
  %v58 = vld [vmem:[%s0 + $0xac] sm:$0xf]
  %v59 = vld [vmem:[%s0 + $0xb0] sm:$0xf]
  %v60 = vld [vmem:[%s0 + $0xb4] sm:$0xf]
  %v61 = vld [vmem:[%s0 + $0xb8] sm:$0xf]
  %v62 = vld [vmem:[%s0 + $0xbc] sm:$0xf]
  %v63 = vld [vmem:[%s0 + $0xc0] sm:$0xf]
  %v64 = vld [vmem:[%s1] sm:$0xf]
  %v65 = vld [vmem:[%s1 + $0x4] sm:$0xf]
  %v66 = vld [vmem:[%s1 + $0x8] sm:$0xf]
  %v67 = vld [vmem:[%s1 + $0xc] sm:$0xf]
  %v68 = vld [vmem:[%s1 + $0x10] sm:$0x3]
  %v69 = vld [vmem:[%s2] sm:$0x1]
  %v71 = vlaneseq
  %v72 = vshrl.u32 %v71, 7
  %v73 = vsub.s32 0, %v72
  %v74 = vrot.slane %v69, %v73
  %v125 = vunpack.c.l.b16 %v15
  %v126 = vunpack.c.l.b16 %v16
  %v127 = vunpack.c.l.b16 %v17
  %v128 = vunpack.c.l.b16 %v18
  %v129 = vunpack.c.l.b16 %v19
  %v130 = vunpack.c.l.b16 %v20
  %v131 = vunpack.c.l.b16 %v21
  %v132 = vunpack.c.l.b16 %v22
  %v133 = vunpack.c.l.b16 %v23
  %v134 = vunpack.c.l.b16 %v24
  %v135 = vunpack.c.l.b16 %v25
  %v136 = vunpack.c.l.b16 %v26
  %v137 = vunpack.c.l.b16 %v27
  %v138 = vunpack.c.l.b16 %v28
  %v139 = vunpack.c.l.b16 %v29
  %v140 = vunpack.c.l.b16 %v30
  %v141 = vunpack.c.l.b16 %v31
  %v142 = vunpack.c.l.b16 %v32
  %v143 = vunpack.c.l.b16 %v33
  %v144 = vunpack.c.l.b16 %v34
  %v145 = vunpack.c.l.b16 %v35
  %v146 = vunpack.c.l.b16 %v36
  %v147 = vunpack.c.l.b16 %v37
  %v148 = vunpack.c.l.b16 %v38
  %v149 = vunpack.c.l.b16 %v39
  %v150 = vunpack.c.l.b16 %v40
  %v151 = vunpack.c.l.b16 %v41
  %v152 = vunpack.c.l.b16 %v42
  %v153 = vunpack.c.l.b16 %v43
  %v154 = vunpack.c.l.b16 %v44
  %v155 = vunpack.c.l.b16 %v45
  %v156 = vunpack.c.l.b16 %v46
  %v157 = vunpack.c.l.b16 %v47
  %v158 = vunpack.c.l.b16 %v48
  %v159 = vunpack.c.l.b16 %v49
  %v160 = vunpack.c.l.b16 %v50
  %v161 = vunpack.c.l.b16 %v51
  %v162 = vunpack.c.l.b16 %v52
  %v163 = vunpack.c.l.b16 %v53
  %v164 = vunpack.c.l.b16 %v54
  %v165 = vunpack.c.l.b16 %v55
  %v166 = vunpack.c.l.b16 %v56
  %v167 = vunpack.c.l.b16 %v57
  %v168 = vunpack.c.l.b16 %v58
  %v169 = vunpack.c.l.b16 %v59
  %v170 = vunpack.c.l.b16 %v60
  %v171 = vunpack.c.l.b16 %v61
  %v172 = vunpack.c.l.b16 %v62
  %v173 = vunpack.c.l.b16 %v63
  %v174 = vpack.c.b16 %v126, %v125
  %v175 = vpack.c.b16 %v128, %v127
  %v176 = vpack.c.b16 %v130, %v129
  %v177 = vpack.c.b16 %v132, %v131
  %v178 = vpack.c.b16 %v134, %v133
  %v179 = vpack.c.b16 %v136, %v135
  %v180 = vpack.c.b16 %v138, %v137
  %v181 = vpack.c.b16 %v140, %v139
  %v182 = vpack.c.b16 %v142, %v141
  %v183 = vpack.c.b16 %v144, %v143
  %v184 = vpack.c.b16 %v146, %v145
  %v185 = vpack.c.b16 %v148, %v147
  %v186 = vpack.c.b16 %v150, %v149
  %v187 = vpack.c.b16 %v152, %v151
  %v188 = vpack.c.b16 %v154, %v153
  %v189 = vpack.c.b16 %v156, %v155
  %v190 = vpack.c.b16 %v158, %v157
  %v191 = vpack.c.b16 %v160, %v159
  %v192 = vpack.c.b16 %v162, %v161
  %v193 = vpack.c.b16 %v164, %v163
  %v194 = vpack.c.b16 %v166, %v165
  %v195 = vpack.c.b16 %v168, %v167
  %v196 = vpack.c.b16 %v170, %v169
  %v197 = vpack.c.b16 %v172, %v171
  %v198 = vpack.c.b16 %v173, %v173
  %v204 = vunpack.c.l.b16 %v64
  %v205 = vunpack.c.l.b16 %v65
  %v206 = vunpack.c.l.b16 %v66
  %v207 = vunpack.c.l.b16 %v67
  %v208 = vunpack.c.l.b16 %v68
  %v209 = vpack.c.b16 %v205, %v204
  %v210 = vpack.c.b16 %v207, %v206
  %v211 = vpack.c.b16 %v208, %v208
  %vm214 = vcmask 293888
  %v216 = vsel %vm214, %v174, 0
  %v219 = vsel %vm214, %v175, 0
  %v222 = vsel %vm214, %v176, 0
  %v225 = vsel %vm214, %v177, 0
  %v228 = vsel %vm214, %v178, 0
  %v231 = vsel %vm214, %v179, 0
  %v234 = vsel %vm214, %v180, 0
  %v237 = vsel %vm214, %v181, 0
  %v240 = vsel %vm214, %v182, 0
  %v243 = vsel %vm214, %v183, 0
  %v246 = vsel %vm214, %v184, 0
  %v249 = vsel %vm214, %v185, 0
  %v252 = vsel %vm214, %v186, 0
  %v255 = vsel %vm214, %v187, 0
  %v258 = vsel %vm214, %v188, 0
  %v261 = vsel %vm214, %v189, 0
  %v264 = vsel %vm214, %v190, 0
  %v267 = vsel %vm214, %v191, 0
  %v270 = vsel %vm214, %v192, 0
  %v273 = vsel %vm214, %v193, 0
  %v276 = vsel %vm214, %v194, 0
  %v279 = vsel %vm214, %v195, 0
  %v282 = vsel %vm214, %v196, 0
  %v285 = vsel %vm214, %v197, 0
  %v288 = vsel %vm214, %v198, 0
  %vm290 = vcmask 1041408
  %v292 = vsel %vm290, %v211, 0
  %294 = vmatprep.subr.bf16.mxu0 0
  %295 = vmatpush1.bf16.msra.mxu0 %v209
  %296 = vmatprep.subr.bf16.mxu0 0
  %297 = vmatpush1.bf16.msra.mxu0 %v210
  %298 = vmatprep.subr.bf16.mxu0 0
  %299 = vmatpush1.bf16.msra.mxu0 %v292
  %300 = vmatprep.subr.bf16.mxu0 0
  %301 = vmatpush1.bf16.msra.mxu0 0
  %302 = vmatprep.subr.bf16.mxu0 0
  %303 = vmatpush1.bf16.msra.mxu0 0
  %304 = vmatprep.subr.bf16.mxu0 0
  %305 = vmatpush1.bf16.msra.mxu0 0
  %306 = vmatprep.subr.bf16.mxu0 0
  %307 = vmatpush1.bf16.msra.mxu0 0
  %308 = vmatprep.subr.bf16.mxu0 0
  %309 = vmatpush1.bf16.msra.mxu0 0
  %310 = vmatprep.subr.bf16.mxu0 0
  %311 = vmatpush1.bf16.msra.mxu0 0
  %312 = vmatprep.subr.bf16.mxu0 0
  %313 = vmatpush1.bf16.msra.mxu0 0
  %314 = vmatprep.subr.bf16.mxu0 0
  %315 = vmatpush1.bf16.msra.mxu0 0
  %316 = vmatprep.subr.bf16.mxu0 0
  %317 = vmatpush1.bf16.msra.mxu0 0
  %318 = vmatprep.subr.bf16.mxu0 0
  %319 = vmatpush1.bf16.msra.mxu0 0
  %320 = vmatprep.subr.bf16.mxu0 0
  %321 = vmatpush1.bf16.msra.mxu0 0
  %322 = vmatprep.subr.bf16.mxu0 0
  %323 = vmatpush1.bf16.msra.mxu0 0
  %324 = vmatprep.subr.bf16.mxu0 0
  %325 = vmatpush1.bf16.msra.mxu0 0
  %326 = vmatprep.mubr.bf16.mxu0 0
  %327 = vmatmul.mubr.bf16.gmra.mrb[0].mxu0 %v216
  %v328 = vpop.f32.mrb[0].mxu0
  %v329 = vadd.f32 %v74, %v328
  %v330 = vpop.f32.mrb[0].mxu0
  %v331 = vpop.f32.mrb[0].mxu0
  %v332 = vadd.f32 %v74, %v331
  %v333 = vpop.f32.mrb[0].mxu0
  %334 = vmatprep.mubr.bf16.mxu0 0
  %335 = vmatmul.mubr.bf16.gmra.mrb[0].mxu0 %v219
  %v336 = vpop.f32.mrb[0].mxu0
  %v337 = vadd.f32 %v74, %v336
  %v338 = vpop.f32.mrb[0].mxu0
  %v339 = vpop.f32.mrb[0].mxu0
  %v340 = vadd.f32 %v74, %v339
  %v341 = vpop.f32.mrb[0].mxu0
  %342 = vmatprep.mubr.bf16.mxu0 0
  %343 = vmatmul.mubr.bf16.gmra.mrb[0].mxu0 %v222
  %v344 = vpop.f32.mrb[0].mxu0
  %v345 = vadd.f32 %v74, %v344
  %v346 = vpop.f32.mrb[0].mxu0
  %v347 = vpop.f32.mrb[0].mxu0
  %v348 = vadd.f32 %v74, %v347
  %v349 = vpop.f32.mrb[0].mxu0
  %350 = vmatprep.mubr.bf16.mxu0 0
  %351 = vmatmul.mubr.bf16.gmra.mrb[0].mxu0 %v225
  %v352 = vpop.f32.mrb[0].mxu0
  %v353 = vadd.f32 %v74, %v352
  %v354 = vpop.f32.mrb[0].mxu0
  %v355 = vpop.f32.mrb[0].mxu0
  %v356 = vadd.f32 %v74, %v355
  %v357 = vpop.f32.mrb[0].mxu0
  %358 = vmatprep.mubr.bf16.mxu0 0
  %359 = vmatmul.mubr.bf16.gmra.mrb[0].mxu0 %v228
  %v360 = vpop.f32.mrb[0].mxu0
  %v361 = vadd.f32 %v74, %v360
  %v362 = vpop.f32.mrb[0].mxu0
  %v363 = vpop.f32.mrb[0].mxu0
  %v364 = vadd.f32 %v74, %v363
  %v365 = vpop.f32.mrb[0].mxu0
  %366 = vmatprep.mubr.bf16.mxu0 0
  %367 = vmatmul.mubr.bf16.gmra.mrb[0].mxu0 %v231
  %v368 = vpop.f32.mrb[0].mxu0
  %v369 = vadd.f32 %v74, %v368
  %v370 = vpop.f32.mrb[0].mxu0
  %v371 = vpop.f32.mrb[0].mxu0
  %v372 = vadd.f32 %v74, %v371
  %v373 = vpop.f32.mrb[0].mxu0
  %374 = vmatprep.mubr.bf16.mxu0 0
  %375 = vmatmul.mubr.bf16.gmra.mrb[0].mxu0 %v234
  %v376 = vpop.f32.mrb[0].mxu0
  %v377 = vadd.f32 %v74, %v376
  %v378 = vpop.f32.mrb[0].mxu0
  %v379 = vpop.f32.mrb[0].mxu0
  %v380 = vadd.f32 %v74, %v379
  %v381 = vpop.f32.mrb[0].mxu0
  %382 = vmatprep.mubr.bf16.mxu0 0
  %383 = vmatmul.mubr.bf16.gmra.mrb[0].mxu0 %v237
  %v384 = vpop.f32.mrb[0].mxu0
  %v385 = vadd.f32 %v74, %v384
  %v386 = vpop.f32.mrb[0].mxu0
  %v387 = vpop.f32.mrb[0].mxu0
  %v388 = vadd.f32 %v74, %v387
  %v389 = vpop.f32.mrb[0].mxu0
  %390 = vmatprep.mubr.bf16.mxu0 0
  %391 = vmatmul.mubr.bf16.gmra.mrb[0].mxu0 %v240
  %v392 = vpop.f32.mrb[0].mxu0
  %v393 = vadd.f32 %v74, %v392
  %v394 = vpop.f32.mrb[0].mxu0
  %v395 = vpop.f32.mrb[0].mxu0
  %v396 = vadd.f32 %v74, %v395
  %v397 = vpop.f32.mrb[0].mxu0
  %398 = vmatprep.mubr.bf16.mxu0 0
  %399 = vmatmul.mubr.bf16.gmra.mrb[0].mxu0 %v243
  %v400 = vpop.f32.mrb[0].mxu0
  %v401 = vadd.f32 %v74, %v400
  %v402 = vpop.f32.mrb[0].mxu0
  %v403 = vpop.f32.mrb[0].mxu0
  %v404 = vadd.f32 %v74, %v403
  %v405 = vpop.f32.mrb[0].mxu0
  %406 = vmatprep.mubr.bf16.mxu0 0
  %407 = vmatmul.mubr.bf16.gmra.mrb[0].mxu0 %v246
  %v408 = vpop.f32.mrb[0].mxu0
  %v409 = vadd.f32 %v74, %v408
  %v410 = vpop.f32.mrb[0].mxu0
  %v411 = vpop.f32.mrb[0].mxu0
  %v412 = vadd.f32 %v74, %v411
  %v413 = vpop.f32.mrb[0].mxu0
  %414 = vmatprep.mubr.bf16.mxu0 0
  %415 = vmatmul.mubr.bf16.gmra.mrb[0].mxu0 %v249
  %v416 = vpop.f32.mrb[0].mxu0
  %v417 = vadd.f32 %v74, %v416
  %v418 = vpop.f32.mrb[0].mxu0
  %v419 = vpop.f32.mrb[0].mxu0
  %v420 = vadd.f32 %v74, %v419
  %v421 = vpop.f32.mrb[0].mxu0
  %422 = vmatprep.mubr.bf16.mxu0 0
  %423 = vmatmul.mubr.bf16.gmra.mrb[0].mxu0 %v252
  %v424 = vpop.f32.mrb[0].mxu0
  %v425 = vadd.f32 %v74, %v424
  %v426 = vpop.f32.mrb[0].mxu0
  %v427 = vpop.f32.mrb[0].mxu0
  %v428 = vadd.f32 %v74, %v427
  %v429 = vpop.f32.mrb[0].mxu0
  %430 = vmatprep.mubr.bf16.mxu0 0
  %431 = vmatmul.mubr.bf16.gmra.mrb[0].mxu0 %v255
  %v432 = vpop.f32.mrb[0].mxu0
  %v433 = vadd.f32 %v74, %v432
  %v434 = vpop.f32.mrb[0].mxu0
  %v435 = vpop.f32.mrb[0].mxu0
  %v436 = vadd.f32 %v74, %v435
  %v437 = vpop.f32.mrb[0].mxu0
  %438 = vmatprep.mubr.bf16.mxu0 0
  %439 = vmatmul.mubr.bf16.gmra.mrb[0].mxu0 %v258
  %v440 = vpop.f32.mrb[0].mxu0
  %v441 = vadd.f32 %v74, %v440
  %v442 = vpop.f32.mrb[0].mxu0
  %v443 = vpop.f32.mrb[0].mxu0
  %v444 = vadd.f32 %v74, %v443
  %v445 = vpop.f32.mrb[0].mxu0
  %446 = vmatprep.mubr.bf16.mxu0 0
  %447 = vmatmul.mubr.bf16.gmra.mrb[0].mxu0 %v261
  %v448 = vpop.f32.mrb[0].mxu0
  %v449 = vadd.f32 %v74, %v448
  %v450 = vpop.f32.mrb[0].mxu0
  %v451 = vpop.f32.mrb[0].mxu0
  %v452 = vadd.f32 %v74, %v451
  %v453 = vpop.f32.mrb[0].mxu0
  %454 = vmatprep.mubr.bf16.mxu0 0
  %455 = vmatmul.mubr.bf16.gmra.mrb[0].mxu0 %v264
  %v456 = vpop.f32.mrb[0].mxu0
  %v457 = vadd.f32 %v74, %v456
  %v458 = vpop.f32.mrb[0].mxu0
  %v459 = vpop.f32.mrb[0].mxu0
  %v460 = vadd.f32 %v74, %v459
  %v461 = vpop.f32.mrb[0].mxu0
  %462 = vmatprep.mubr.bf16.mxu0 0
  %463 = vmatmul.mubr.bf16.gmra.mrb[0].mxu0 %v267
  %v464 = vpop.f32.mrb[0].mxu0
  %v465 = vadd.f32 %v74, %v464
  %v466 = vpop.f32.mrb[0].mxu0
  %v467 = vpop.f32.mrb[0].mxu0
  %v468 = vadd.f32 %v74, %v467
  %v469 = vpop.f32.mrb[0].mxu0
  %470 = vmatprep.mubr.bf16.mxu0 0
  %471 = vmatmul.mubr.bf16.gmra.mrb[0].mxu0 %v270
  %v472 = vpop.f32.mrb[0].mxu0
  %v473 = vadd.f32 %v74, %v472
  %v474 = vpop.f32.mrb[0].mxu0
  %v475 = vpop.f32.mrb[0].mxu0
  %v476 = vadd.f32 %v74, %v475
  %v477 = vpop.f32.mrb[0].mxu0
  %478 = vmatprep.mubr.bf16.mxu0 0
  %479 = vmatmul.mubr.bf16.gmra.mrb[0].mxu0 %v273
  %v480 = vpop.f32.mrb[0].mxu0
  %v481 = vadd.f32 %v74, %v480
  %v482 = vpop.f32.mrb[0].mxu0
  %v483 = vpop.f32.mrb[0].mxu0
  %v484 = vadd.f32 %v74, %v483
  %v485 = vpop.f32.mrb[0].mxu0
  %486 = vmatprep.mubr.bf16.mxu0 0
  %487 = vmatmul.mubr.bf16.gmra.mrb[0].mxu0 %v276
  %v488 = vpop.f32.mrb[0].mxu0
  %v489 = vadd.f32 %v74, %v488
  %v490 = vpop.f32.mrb[0].mxu0
  %v491 = vpop.f32.mrb[0].mxu0
  %v492 = vadd.f32 %v74, %v491
  %v493 = vpop.f32.mrb[0].mxu0
  %494 = vmatprep.mubr.bf16.mxu0 0
  %495 = vmatmul.mubr.bf16.gmra.mrb[0].mxu0 %v279
  %v496 = vpop.f32.mrb[0].mxu0
  %v497 = vadd.f32 %v74, %v496
  %v498 = vpop.f32.mrb[0].mxu0
  %v499 = vpop.f32.mrb[0].mxu0
  %v500 = vadd.f32 %v74, %v499
  %v501 = vpop.f32.mrb[0].mxu0
  %502 = vmatprep.mubr.bf16.mxu0 0
  %503 = vmatmul.mubr.bf16.gmra.mrb[0].mxu0 %v282
  %v504 = vpop.f32.mrb[0].mxu0
  %v505 = vadd.f32 %v74, %v504
  %v506 = vpop.f32.mrb[0].mxu0
  %v507 = vpop.f32.mrb[0].mxu0
  %v508 = vadd.f32 %v74, %v507
  %v509 = vpop.f32.mrb[0].mxu0
  %510 = vmatprep.mubr.bf16.mxu0 0
  %511 = vmatmul.mubr.bf16.gmra.mrb[0].mxu0 %v285
  %v512 = vpop.f32.mrb[0].mxu0
  %v513 = vadd.f32 %v74, %v512
  %v514 = vpop.f32.mrb[0].mxu0
  %v515 = vpop.f32.mrb[0].mxu0
  %v516 = vadd.f32 %v74, %v515
  %v517 = vpop.f32.mrb[0].mxu0
  %518 = vmatprep.mubr.bf16.mxu0 0
  %519 = vmatmul.mubr.bf16.gmra.mrb[0].mxu0 %v288
  %v520 = vpop.f32.mrb[0].mxu0
  %v521 = vadd.f32 %v74, %v520
  %v522 = vpop.f32.mrb[0].mxu0
  %v523 = vpop.f32.mrb[0].mxu0
  %v524 = vpop.f32.mrb[0].mxu0
  %525 = vdwg.mxu0
  %v526 = vmax.f32 %v329, 0.0
  %v527 = vmax.f32 %v332, 0.0
  %v528 = vmax.f32 %v337, 0.0
  %v529 = vmax.f32 %v340, 0.0
  %v530 = vmax.f32 %v345, 0.0
  %v531 = vmax.f32 %v348, 0.0
  %v532 = vmax.f32 %v353, 0.0
  %v533 = vmax.f32 %v356, 0.0
  %v534 = vmax.f32 %v361, 0.0
  %v535 = vmax.f32 %v364, 0.0
  %v536 = vmax.f32 %v369, 0.0
  %v537 = vmax.f32 %v372, 0.0
  %v538 = vmax.f32 %v377, 0.0
  %v539 = vmax.f32 %v380, 0.0
  %v540 = vmax.f32 %v385, 0.0
  %v541 = vmax.f32 %v388, 0.0
  %v542 = vmax.f32 %v393, 0.0
  %v543 = vmax.f32 %v396, 0.0
  %v544 = vmax.f32 %v401, 0.0
  %v545 = vmax.f32 %v404, 0.0
  %v546 = vmax.f32 %v409, 0.0
  %v547 = vmax.f32 %v412, 0.0
  %v548 = vmax.f32 %v417, 0.0
  %v549 = vmax.f32 %v420, 0.0
  %v550 = vmax.f32 %v425, 0.0
  %v551 = vmax.f32 %v428, 0.0
  %v552 = vmax.f32 %v433, 0.0
  %v553 = vmax.f32 %v436, 0.0
  %v554 = vmax.f32 %v441, 0.0
  %v555 = vmax.f32 %v444, 0.0
  %v556 = vmax.f32 %v449, 0.0
  %v557 = vmax.f32 %v452, 0.0
  %v558 = vmax.f32 %v457, 0.0
  %v559 = vmax.f32 %v460, 0.0
  %v560 = vmax.f32 %v465, 0.0
  %v561 = vmax.f32 %v468, 0.0
  %v562 = vmax.f32 %v473, 0.0
  %v563 = vmax.f32 %v476, 0.0
  %v564 = vmax.f32 %v481, 0.0
  %v565 = vmax.f32 %v484, 0.0
  %v566 = vmax.f32 %v489, 0.0
  %v567 = vmax.f32 %v492, 0.0
  %v568 = vmax.f32 %v497, 0.0
  %v569 = vmax.f32 %v500, 0.0
  %v570 = vmax.f32 %v505, 0.0
  %v571 = vmax.f32 %v508, 0.0
  %v572 = vmax.f32 %v513, 0.0
  %v573 = vmax.f32 %v516, 0.0
  %v574 = vmax.f32 %v521, 0.0
  %575 = vrot.lane.b32.xlu0 %v526, 64
  %v576 = vpop.permute.xlu0 %575
  %577 = vrot.lane.b32.xlu0 %v527, 64
  %v578 = vpop.permute.xlu0 %577
  %579 = vrot.lane.b32.xlu0 %v528, 64
  %v580 = vpop.permute.xlu0 %579
  %581 = vrot.lane.b32.xlu0 %v529, 64
  %v582 = vpop.permute.xlu0 %581
  %583 = vrot.lane.b32.xlu0 %v530, 64
  %v584 = vpop.permute.xlu0 %583
  %585 = vrot.lane.b32.xlu0 %v531, 64
  %v586 = vpop.permute.xlu0 %585
  %587 = vrot.lane.b32.xlu0 %v532, 64
  %v588 = vpop.permute.xlu0 %587
  %589 = vrot.lane.b32.xlu0 %v533, 64
  %v590 = vpop.permute.xlu0 %589
  %591 = vrot.lane.b32.xlu0 %v534, 64
  %v592 = vpop.permute.xlu0 %591
  %593 = vrot.lane.b32.xlu0 %v535, 64
  %v594 = vpop.permute.xlu0 %593
  %595 = vrot.lane.b32.xlu0 %v536, 64
  %v596 = vpop.permute.xlu0 %595
  %597 = vrot.lane.b32.xlu0 %v537, 64
  %v598 = vpop.permute.xlu0 %597
  %599 = vrot.lane.b32.xlu0 %v538, 64
  %v600 = vpop.permute.xlu0 %599
  %601 = vrot.lane.b32.xlu0 %v539, 64
  %v602 = vpop.permute.xlu0 %601
  %603 = vrot.lane.b32.xlu0 %v540, 64
  %v604 = vpop.permute.xlu0 %603
  %605 = vrot.lane.b32.xlu0 %v541, 64
  %v606 = vpop.permute.xlu0 %605
  %607 = vrot.lane.b32.xlu0 %v542, 64
  %v608 = vpop.permute.xlu0 %607
  %609 = vrot.lane.b32.xlu0 %v543, 64
  %v610 = vpop.permute.xlu0 %609
  %611 = vrot.lane.b32.xlu0 %v544, 64
  %v612 = vpop.permute.xlu0 %611
  %613 = vrot.lane.b32.xlu0 %v545, 64
  %v614 = vpop.permute.xlu0 %613
  %615 = vrot.lane.b32.xlu0 %v546, 64
  %v616 = vpop.permute.xlu0 %615
  %617 = vrot.lane.b32.xlu0 %v547, 64
  %v618 = vpop.permute.xlu0 %617
  %619 = vrot.lane.b32.xlu0 %v548, 64
  %v620 = vpop.permute.xlu0 %619
  %621 = vrot.lane.b32.xlu0 %v549, 64
  %v622 = vpop.permute.xlu0 %621
  %623 = vrot.lane.b32.xlu0 %v550, 64
  %v624 = vpop.permute.xlu0 %623
  %625 = vrot.lane.b32.xlu0 %v551, 64
  %v626 = vpop.permute.xlu0 %625
  %627 = vrot.lane.b32.xlu0 %v552, 64
  %v628 = vpop.permute.xlu0 %627
  %629 = vrot.lane.b32.xlu0 %v553, 64
  %v630 = vpop.permute.xlu0 %629
  %631 = vrot.lane.b32.xlu0 %v554, 64
  %v632 = vpop.permute.xlu0 %631
  %633 = vrot.lane.b32.xlu0 %v555, 64
  %v634 = vpop.permute.xlu0 %633
  %635 = vrot.lane.b32.xlu0 %v556, 64
  %v636 = vpop.permute.xlu0 %635
  %637 = vrot.lane.b32.xlu0 %v557, 64
  %v638 = vpop.permute.xlu0 %637
  %639 = vrot.lane.b32.xlu0 %v558, 64
  %v640 = vpop.permute.xlu0 %639
  %641 = vrot.lane.b32.xlu0 %v559, 64
  %v642 = vpop.permute.xlu0 %641
  %643 = vrot.lane.b32.xlu0 %v560, 64
  %v644 = vpop.permute.xlu0 %643
  %645 = vrot.lane.b32.xlu0 %v561, 64
  %v646 = vpop.permute.xlu0 %645
  %647 = vrot.lane.b32.xlu0 %v562, 64
  %v648 = vpop.permute.xlu0 %647
  %649 = vrot.lane.b32.xlu0 %v563, 64
  %v650 = vpop.permute.xlu0 %649
  %651 = vrot.lane.b32.xlu0 %v564, 64
  %v652 = vpop.permute.xlu0 %651
  %653 = vrot.lane.b32.xlu0 %v565, 64
  %v654 = vpop.permute.xlu0 %653
  %655 = vrot.lane.b32.xlu0 %v566, 64
  %v656 = vpop.permute.xlu0 %655
  %657 = vrot.lane.b32.xlu0 %v567, 64
  %v658 = vpop.permute.xlu0 %657
  %659 = vrot.lane.b32.xlu0 %v568, 64
  %v660 = vpop.permute.xlu0 %659
  %661 = vrot.lane.b32.xlu0 %v569, 64
  %v662 = vpop.permute.xlu0 %661
  %663 = vrot.lane.b32.xlu0 %v570, 64
  %v664 = vpop.permute.xlu0 %663
  %665 = vrot.lane.b32.xlu0 %v571, 64
  %v666 = vpop.permute.xlu0 %665
  %667 = vrot.lane.b32.xlu0 %v572, 64
  %v668 = vpop.permute.xlu0 %667
  %669 = vrot.lane.b32.xlu0 %v573, 64
  %v670 = vpop.permute.xlu0 %669
  %671 = vrot.lane.b32.xlu0 %v574, 64
  %v672 = vpop.permute.xlu0 %671
  %v673 = vmax.f32 %v526, %v576
  %v674 = vmax.f32 %v527, %v578
  %v675 = vmax.f32 %v528, %v580
  %v676 = vmax.f32 %v529, %v582
  %v677 = vmax.f32 %v530, %v584
  %v678 = vmax.f32 %v531, %v586
  %v679 = vmax.f32 %v532, %v588
  %v680 = vmax.f32 %v533, %v590
  %v681 = vmax.f32 %v534, %v592
  %v682 = vmax.f32 %v535, %v594
  %v683 = vmax.f32 %v536, %v596
  %v684 = vmax.f32 %v537, %v598
  %v685 = vmax.f32 %v538, %v600
  %v686 = vmax.f32 %v539, %v602
  %v687 = vmax.f32 %v540, %v604
  %v688 = vmax.f32 %v541, %v606
  %v689 = vmax.f32 %v542, %v608
  %v690 = vmax.f32 %v543, %v610
  %v691 = vmax.f32 %v544, %v612
  %v692 = vmax.f32 %v545, %v614
  %v693 = vmax.f32 %v546, %v616
  %v694 = vmax.f32 %v547, %v618
  %v695 = vmax.f32 %v548, %v620
  %v696 = vmax.f32 %v549, %v622
  %v697 = vmax.f32 %v550, %v624
  %v698 = vmax.f32 %v551, %v626
  %v699 = vmax.f32 %v552, %v628
  %v700 = vmax.f32 %v553, %v630
  %v701 = vmax.f32 %v554, %v632
  %v702 = vmax.f32 %v555, %v634
  %v703 = vmax.f32 %v556, %v636
  %v704 = vmax.f32 %v557, %v638
  %v705 = vmax.f32 %v558, %v640
  %v706 = vmax.f32 %v559, %v642
  %v707 = vmax.f32 %v560, %v644
  %v708 = vmax.f32 %v561, %v646
  %v709 = vmax.f32 %v562, %v648
  %v710 = vmax.f32 %v563, %v650
  %v711 = vmax.f32 %v564, %v652
  %v712 = vmax.f32 %v565, %v654
  %v713 = vmax.f32 %v566, %v656
  %v714 = vmax.f32 %v567, %v658
  %v715 = vmax.f32 %v568, %v660
  %v716 = vmax.f32 %v569, %v662
  %v717 = vmax.f32 %v570, %v664
  %v718 = vmax.f32 %v571, %v666
  %v719 = vmax.f32 %v572, %v668
  %v720 = vmax.f32 %v573, %v670
  %v721 = vmax.f32 %v574, %v672
  %722 = vrot.lane.b32.xlu0 %v673, 32
  %v723 = vpop.permute.xlu0 %722
  %724 = vrot.lane.b32.xlu0 %v674, 32
  %v725 = vpop.permute.xlu0 %724
  %726 = vrot.lane.b32.xlu0 %v675, 32
  %v727 = vpop.permute.xlu0 %726
  %728 = vrot.lane.b32.xlu0 %v676, 32
  %v729 = vpop.permute.xlu0 %728
  %730 = vrot.lane.b32.xlu0 %v677, 32
  %v731 = vpop.permute.xlu0 %730
  %732 = vrot.lane.b32.xlu0 %v678, 32
  %v733 = vpop.permute.xlu0 %732
  %734 = vrot.lane.b32.xlu0 %v679, 32
  %v735 = vpop.permute.xlu0 %734
  %736 = vrot.lane.b32.xlu0 %v680, 32
  %v737 = vpop.permute.xlu0 %736
  %738 = vrot.lane.b32.xlu0 %v681, 32
  %v739 = vpop.permute.xlu0 %738
  %740 = vrot.lane.b32.xlu0 %v682, 32
  %v741 = vpop.permute.xlu0 %740
  %742 = vrot.lane.b32.xlu0 %v683, 32
  %v743 = vpop.permute.xlu0 %742
  %744 = vrot.lane.b32.xlu0 %v684, 32
  %v745 = vpop.permute.xlu0 %744
  %746 = vrot.lane.b32.xlu0 %v685, 32
  %v747 = vpop.permute.xlu0 %746
  %748 = vrot.lane.b32.xlu0 %v686, 32
  %v749 = vpop.permute.xlu0 %748
  %750 = vrot.lane.b32.xlu0 %v687, 32
  %v751 = vpop.permute.xlu0 %750
  %752 = vrot.lane.b32.xlu0 %v688, 32
  %v753 = vpop.permute.xlu0 %752
  %754 = vrot.lane.b32.xlu0 %v689, 32
  %v755 = vpop.permute.xlu0 %754
  %756 = vrot.lane.b32.xlu0 %v690, 32
  %v757 = vpop.permute.xlu0 %756
  %758 = vrot.lane.b32.xlu0 %v691, 32
  %v759 = vpop.permute.xlu0 %758
  %760 = vrot.lane.b32.xlu0 %v692, 32
  %v761 = vpop.permute.xlu0 %760
  %762 = vrot.lane.b32.xlu0 %v693, 32
  %v763 = vpop.permute.xlu0 %762
  %764 = vrot.lane.b32.xlu0 %v694, 32
  %v765 = vpop.permute.xlu0 %764
  %766 = vrot.lane.b32.xlu0 %v695, 32
  %v767 = vpop.permute.xlu0 %766
  %768 = vrot.lane.b32.xlu0 %v696, 32
  %v769 = vpop.permute.xlu0 %768
  %770 = vrot.lane.b32.xlu0 %v697, 32
  %v771 = vpop.permute.xlu0 %770
  %772 = vrot.lane.b32.xlu0 %v698, 32
  %v773 = vpop.permute.xlu0 %772
  %774 = vrot.lane.b32.xlu0 %v699, 32
  %v775 = vpop.permute.xlu0 %774
  %776 = vrot.lane.b32.xlu0 %v700, 32
  %v777 = vpop.permute.xlu0 %776
  %778 = vrot.lane.b32.xlu0 %v701, 32
  %v779 = vpop.permute.xlu0 %778
  %780 = vrot.lane.b32.xlu0 %v702, 32
  %v781 = vpop.permute.xlu0 %780
  %782 = vrot.lane.b32.xlu0 %v703, 32
  %v783 = vpop.permute.xlu0 %782
  %784 = vrot.lane.b32.xlu0 %v704, 32
  %v785 = vpop.permute.xlu0 %784
  %786 = vrot.lane.b32.xlu0 %v705, 32
  %v787 = vpop.permute.xlu0 %786
  %788 = vrot.lane.b32.xlu0 %v706, 32
  %v789 = vpop.permute.xlu0 %788
  %790 = vrot.lane.b32.xlu0 %v707, 32
  %v791 = vpop.permute.xlu0 %790
  %792 = vrot.lane.b32.xlu0 %v708, 32
  %v793 = vpop.permute.xlu0 %792
  %794 = vrot.lane.b32.xlu0 %v709, 32
  %v795 = vpop.permute.xlu0 %794
  %796 = vrot.lane.b32.xlu0 %v710, 32
  %v797 = vpop.permute.xlu0 %796
  %798 = vrot.lane.b32.xlu0 %v711, 32
  %v799 = vpop.permute.xlu0 %798
  %800 = vrot.lane.b32.xlu0 %v712, 32
  %v801 = vpop.permute.xlu0 %800
  %802 = vrot.lane.b32.xlu0 %v713, 32
  %v803 = vpop.permute.xlu0 %802
  %804 = vrot.lane.b32.xlu0 %v714, 32
  %v805 = vpop.permute.xlu0 %804
  %806 = vrot.lane.b32.xlu0 %v715, 32
  %v807 = vpop.permute.xlu0 %806
  %808 = vrot.lane.b32.xlu0 %v716, 32
  %v809 = vpop.permute.xlu0 %808
  %810 = vrot.lane.b32.xlu0 %v717, 32
  %v811 = vpop.permute.xlu0 %810
  %812 = vrot.lane.b32.xlu0 %v718, 32
  %v813 = vpop.permute.xlu0 %812
  %814 = vrot.lane.b32.xlu0 %v719, 32
  %v815 = vpop.permute.xlu0 %814
  %816 = vrot.lane.b32.xlu0 %v720, 32
  %v817 = vpop.permute.xlu0 %816
  %818 = vrot.lane.b32.xlu0 %v721, 32
  %v819 = vpop.permute.xlu0 %818
  %v820 = vmax.f32 %v673, %v723
  %v821 = vmax.f32 %v674, %v725
  %v822 = vmax.f32 %v675, %v727
  %v823 = vmax.f32 %v676, %v729
  %v824 = vmax.f32 %v677, %v731
  %v825 = vmax.f32 %v678, %v733
  %v826 = vmax.f32 %v679, %v735
  %v827 = vmax.f32 %v680, %v737
  %v828 = vmax.f32 %v681, %v739
  %v829 = vmax.f32 %v682, %v741
  %v830 = vmax.f32 %v683, %v743
  %v831 = vmax.f32 %v684, %v745
  %v832 = vmax.f32 %v685, %v747
  %v833 = vmax.f32 %v686, %v749
  %v834 = vmax.f32 %v687, %v751
  %v835 = vmax.f32 %v688, %v753
  %v836 = vmax.f32 %v689, %v755
  %v837 = vmax.f32 %v690, %v757
  %v838 = vmax.f32 %v691, %v759
  %v839 = vmax.f32 %v692, %v761
  %v840 = vmax.f32 %v693, %v763
  %v841 = vmax.f32 %v694, %v765
  %v842 = vmax.f32 %v695, %v767
  %v843 = vmax.f32 %v696, %v769
  %v844 = vmax.f32 %v697, %v771
  %v845 = vmax.f32 %v698, %v773
  %v846 = vmax.f32 %v699, %v775
  %v847 = vmax.f32 %v700, %v777
  %v848 = vmax.f32 %v701, %v779
  %v849 = vmax.f32 %v702, %v781
  %v850 = vmax.f32 %v703, %v783
  %v851 = vmax.f32 %v704, %v785
  %v852 = vmax.f32 %v705, %v787
  %v853 = vmax.f32 %v706, %v789
  %v854 = vmax.f32 %v707, %v791
  %v855 = vmax.f32 %v708, %v793
  %v856 = vmax.f32 %v709, %v795
  %v857 = vmax.f32 %v710, %v797
  %v858 = vmax.f32 %v711, %v799
  %v859 = vmax.f32 %v712, %v801
  %v860 = vmax.f32 %v713, %v803
  %v861 = vmax.f32 %v714, %v805
  %v862 = vmax.f32 %v715, %v807
  %v863 = vmax.f32 %v716, %v809
  %v864 = vmax.f32 %v717, %v811
  %v865 = vmax.f32 %v718, %v813
  %v866 = vmax.f32 %v719, %v815
  %v867 = vmax.f32 %v720, %v817
  %v868 = vmax.f32 %v721, %v819
  %v869 = vpack.c.bf16 %v821, %v820
  %v870 = vpack.c.bf16 %v823, %v822
  %v871 = vpack.c.bf16 %v825, %v824
  %v872 = vpack.c.bf16 %v827, %v826
  %v873 = vpack.c.bf16 %v829, %v828
  %v874 = vpack.c.bf16 %v831, %v830
  %v875 = vpack.c.bf16 %v833, %v832
  %v876 = vpack.c.bf16 %v835, %v834
  %v877 = vpack.c.bf16 %v837, %v836
  %v878 = vpack.c.bf16 %v839, %v838
  %v879 = vpack.c.bf16 %v841, %v840
  %v880 = vpack.c.bf16 %v843, %v842
  %v881 = vpack.c.bf16 %v845, %v844
  %v882 = vpack.c.bf16 %v847, %v846
  %v883 = vpack.c.bf16 %v849, %v848
  %v884 = vpack.c.bf16 %v851, %v850
  %v885 = vpack.c.bf16 %v853, %v852
  %v886 = vpack.c.bf16 %v855, %v854
  %v887 = vpack.c.bf16 %v857, %v856
  %v888 = vpack.c.bf16 %v859, %v858
  %v889 = vpack.c.bf16 %v861, %v860
  %v890 = vpack.c.bf16 %v863, %v862
  %v891 = vpack.c.bf16 %v865, %v864
  %v892 = vpack.c.bf16 %v867, %v866
  %v893 = vpack.c.bf16 %v868, %v868
  %v919 = vunpack.c.l.b16 %v869
  %v920 = vunpack.c.h.b16 %v869
  %v921 = vunpack.c.l.b16 %v870
  %v922 = vunpack.c.h.b16 %v870
  %v923 = vunpack.c.l.b16 %v871
  %v924 = vunpack.c.h.b16 %v871
  %v925 = vunpack.c.l.b16 %v872
  %v926 = vunpack.c.h.b16 %v872
  %v927 = vunpack.c.l.b16 %v873
  %v928 = vunpack.c.h.b16 %v873
  %v929 = vunpack.c.l.b16 %v874
  %v930 = vunpack.c.h.b16 %v874
  %v931 = vunpack.c.l.b16 %v875
  %v932 = vunpack.c.h.b16 %v875
  %v933 = vunpack.c.l.b16 %v876
  %v934 = vunpack.c.h.b16 %v876
  %v935 = vunpack.c.l.b16 %v877
  %v936 = vunpack.c.h.b16 %v877
  %v937 = vunpack.c.l.b16 %v878
  %v938 = vunpack.c.h.b16 %v878
  %v939 = vunpack.c.l.b16 %v879
  %v940 = vunpack.c.h.b16 %v879
  %v941 = vunpack.c.l.b16 %v880
  %v942 = vunpack.c.h.b16 %v880
  %v943 = vunpack.c.l.b16 %v881
  %v944 = vunpack.c.h.b16 %v881
  %v945 = vunpack.c.l.b16 %v882
  %v946 = vunpack.c.h.b16 %v882
  %v947 = vunpack.c.l.b16 %v883
  %v948 = vunpack.c.h.b16 %v883
  %v949 = vunpack.c.l.b16 %v884
  %v950 = vunpack.c.h.b16 %v884
  %v951 = vunpack.c.l.b16 %v885
  %v952 = vunpack.c.h.b16 %v885
  %v953 = vunpack.c.l.b16 %v886
  %v954 = vunpack.c.h.b16 %v886
  %v955 = vunpack.c.l.b16 %v887
  %v956 = vunpack.c.h.b16 %v887
  %v957 = vunpack.c.l.b16 %v888
  %v958 = vunpack.c.h.b16 %v888
  %v959 = vunpack.c.l.b16 %v889
  %v960 = vunpack.c.h.b16 %v889
  %v961 = vunpack.c.l.b16 %v890
  %v962 = vunpack.c.h.b16 %v890
  %v963 = vunpack.c.l.b16 %v891
  %v964 = vunpack.c.h.b16 %v891
  %v965 = vunpack.c.l.b16 %v892
  %v966 = vunpack.c.h.b16 %v892
  %v967 = vunpack.c.l.b16 %v893
  %v968 = vpack.c.b16 %v919, %v919
  %v969 = vpack.c.b16 %v920, %v920
  %v970 = vpack.c.b16 %v921, %v921
  %v971 = vpack.c.b16 %v922, %v922
  %v972 = vpack.c.b16 %v923, %v923
  %v973 = vpack.c.b16 %v924, %v924
  %v974 = vpack.c.b16 %v925, %v925
  %v975 = vpack.c.b16 %v926, %v926
  %v976 = vpack.c.b16 %v927, %v927
  %v977 = vpack.c.b16 %v928, %v928
  %v978 = vpack.c.b16 %v929, %v929
  %v979 = vpack.c.b16 %v930, %v930
  %v980 = vpack.c.b16 %v931, %v931
  %v981 = vpack.c.b16 %v932, %v932
  %v982 = vpack.c.b16 %v933, %v933
  %v983 = vpack.c.b16 %v934, %v934
  %v984 = vpack.c.b16 %v935, %v935
  %v985 = vpack.c.b16 %v936, %v936
  %v986 = vpack.c.b16 %v937, %v937
  %v987 = vpack.c.b16 %v938, %v938
  %v988 = vpack.c.b16 %v939, %v939
  %v989 = vpack.c.b16 %v940, %v940
  %v990 = vpack.c.b16 %v941, %v941
  %v991 = vpack.c.b16 %v942, %v942
  %v992 = vpack.c.b16 %v943, %v943
  %v993 = vpack.c.b16 %v944, %v944
  %v994 = vpack.c.b16 %v945, %v945
  %v995 = vpack.c.b16 %v946, %v946
  %v996 = vpack.c.b16 %v947, %v947
  %v997 = vpack.c.b16 %v948, %v948
  %v998 = vpack.c.b16 %v949, %v949
  %v999 = vpack.c.b16 %v950, %v950
  %v1000 = vpack.c.b16 %v951, %v951
  %v1001 = vpack.c.b16 %v952, %v952
  %v1002 = vpack.c.b16 %v953, %v953
  %v1003 = vpack.c.b16 %v954, %v954
  %v1004 = vpack.c.b16 %v955, %v955
  %v1005 = vpack.c.b16 %v956, %v956
  %v1006 = vpack.c.b16 %v957, %v957
  %v1007 = vpack.c.b16 %v958, %v958
  %v1008 = vpack.c.b16 %v959, %v959
  %v1009 = vpack.c.b16 %v960, %v960
  %v1010 = vpack.c.b16 %v961, %v961
  %v1011 = vpack.c.b16 %v962, %v962
  %v1012 = vpack.c.b16 %v963, %v963
  %v1013 = vpack.c.b16 %v964, %v964
  %v1014 = vpack.c.b16 %v965, %v965
  %v1015 = vpack.c.b16 %v966, %v966
  %v1016 = vpack.c.b16 %v967, %v967
  %vm1066 = vcmask 257024
  %1067 = vst.msk [vmem:[%s3] sm:$0xf] %vm1066, %v968
  %1068 = vst.msk [vmem:[%s3 + $0x4] sm:$0xf] %vm1066, %v969
  %1069 = vst.msk [vmem:[%s3 + $0x8] sm:$0xf] %vm1066, %v970
  %1070 = vst.msk [vmem:[%s3 + $0xc] sm:$0xf] %vm1066, %v971
  %1071 = vst.msk [vmem:[%s3 + $0x10] sm:$0xf] %vm1066, %v972
  %1072 = vst.msk [vmem:[%s3 + $0x14] sm:$0xf] %vm1066, %v973
  %1073 = vst.msk [vmem:[%s3 + $0x18] sm:$0xf] %vm1066, %v974
  %1074 = vst.msk [vmem:[%s3 + $0x1c] sm:$0xf] %vm1066, %v975
  %1075 = vst.msk [vmem:[%s3 + $0x20] sm:$0xf] %vm1066, %v976
  %1076 = vst.msk [vmem:[%s3 + $0x24] sm:$0xf] %vm1066, %v977
  %1077 = vst.msk [vmem:[%s3 + $0x28] sm:$0xf] %vm1066, %v978
  %1078 = vst.msk [vmem:[%s3 + $0x2c] sm:$0xf] %vm1066, %v979
  %1079 = vst.msk [vmem:[%s3 + $0x30] sm:$0xf] %vm1066, %v980
  %1080 = vst.msk [vmem:[%s3 + $0x34] sm:$0xf] %vm1066, %v981
  %1081 = vst.msk [vmem:[%s3 + $0x38] sm:$0xf] %vm1066, %v982
  %1082 = vst.msk [vmem:[%s3 + $0x3c] sm:$0xf] %vm1066, %v983
  %1083 = vst.msk [vmem:[%s3 + $0x40] sm:$0xf] %vm1066, %v984
  %1084 = vst.msk [vmem:[%s3 + $0x44] sm:$0xf] %vm1066, %v985
  %1085 = vst.msk [vmem:[%s3 + $0x48] sm:$0xf] %vm1066, %v986
  %1086 = vst.msk [vmem:[%s3 + $0x4c] sm:$0xf] %vm1066, %v987
  %1087 = vst.msk [vmem:[%s3 + $0x50] sm:$0xf] %vm1066, %v988
  %1088 = vst.msk [vmem:[%s3 + $0x54] sm:$0xf] %vm1066, %v989
  %1089 = vst.msk [vmem:[%s3 + $0x58] sm:$0xf] %vm1066, %v990
  %1090 = vst.msk [vmem:[%s3 + $0x5c] sm:$0xf] %vm1066, %v991
  %1091 = vst.msk [vmem:[%s3 + $0x60] sm:$0xf] %vm1066, %v992
  %1092 = vst.msk [vmem:[%s3 + $0x64] sm:$0xf] %vm1066, %v993
  %1093 = vst.msk [vmem:[%s3 + $0x68] sm:$0xf] %vm1066, %v994
  %1094 = vst.msk [vmem:[%s3 + $0x6c] sm:$0xf] %vm1066, %v995
  %1095 = vst.msk [vmem:[%s3 + $0x70] sm:$0xf] %vm1066, %v996
  %1096 = vst.msk [vmem:[%s3 + $0x74] sm:$0xf] %vm1066, %v997
  %1097 = vst.msk [vmem:[%s3 + $0x78] sm:$0xf] %vm1066, %v998
  %1098 = vst.msk [vmem:[%s3 + $0x7c] sm:$0xf] %vm1066, %v999
  %1099 = vst.msk [vmem:[%s3 + $0x80] sm:$0xf] %vm1066, %v1000
  %1100 = vst.msk [vmem:[%s3 + $0x84] sm:$0xf] %vm1066, %v1001
  %1101 = vst.msk [vmem:[%s3 + $0x88] sm:$0xf] %vm1066, %v1002
  %1102 = vst.msk [vmem:[%s3 + $0x8c] sm:$0xf] %vm1066, %v1003
  %1103 = vst.msk [vmem:[%s3 + $0x90] sm:$0xf] %vm1066, %v1004
  %1104 = vst.msk [vmem:[%s3 + $0x94] sm:$0xf] %vm1066, %v1005
  %1105 = vst.msk [vmem:[%s3 + $0x98] sm:$0xf] %vm1066, %v1006
  %1106 = vst.msk [vmem:[%s3 + $0x9c] sm:$0xf] %vm1066, %v1007
  %1107 = vst.msk [vmem:[%s3 + $0xa0] sm:$0xf] %vm1066, %v1008
  %1108 = vst.msk [vmem:[%s3 + $0xa4] sm:$0xf] %vm1066, %v1009
  %1109 = vst.msk [vmem:[%s3 + $0xa8] sm:$0xf] %vm1066, %v1010
  %1110 = vst.msk [vmem:[%s3 + $0xac] sm:$0xf] %vm1066, %v1011
  %1111 = vst.msk [vmem:[%s3 + $0xb0] sm:$0xf] %vm1066, %v1012
  %1112 = vst.msk [vmem:[%s3 + $0xb4] sm:$0xf] %vm1066, %v1013
  %1113 = vst.msk [vmem:[%s3 + $0xb8] sm:$0xf] %vm1066, %v1014
  %1114 = vst.msk [vmem:[%s3 + $0xbc] sm:$0xf] %vm1066, %v1015
  %1115 = vst.msk [vmem:[%s3 + $0xc0] sm:$0xf] %vm1066, %v1016
  // Predicated region
  $region14: #{hdr_forward.2} parent=0 // pred_check
    _
  $region15: #{hdr_forward.2} parent=0 // pred_check_branch
    %1117 = sbr.rel (0) target = $region17
  $region16: #{hdr_forward.2} parent=0 // pred_region
    _
  $region17: #{hdr_forward.2} parent=0 // pred_fallthru
    _
  // Predicated region
  $region18: #{hdr_forward.2} parent=0 // pred_check
    _
  $region19: #{hdr_forward.2} parent=0 // pred_check_branch
    %1119 = sbr.rel (0) target = $region21
  $region20: #{hdr_forward.2} parent=0 // pred_region
    _
  $region21: #{hdr_forward.2} parent=0 // pred_fallthru
    _

// kernel: hdr_forward.3
$region0: #{hdr_forward.3}
  #allocation0 [shape = 'u32[]', space=smem, size = 0x4, offset = 0x4, fixed_abs, tag = 'smem constant byte address 0x4 - core index']
  #allocation1 [shape = 'u32[144,128]{1,0:T(1,128)}', space=vmem, size = 0x12000, scoped, tag = 'internal scratch']
  %s0 = inlined_call_operand.vmem [shape: bf16[2,6272], index: 0, kind: input, shape index: {}]
  %s1 = inlined_call_operand.vmem [shape: bf16[6272,100], index: 1, kind: input, shape index: {}]
  %s2 = inlined_call_operand.vmem [shape: f32[1,100], index: 2, kind: input, shape index: {}]
  %s3 = inlined_call_operand.vmem [shape: bf16[100,50], index: 3, kind: input, shape index: {}]
  %s4 = inlined_call_operand.vmem [shape: f32[1,50], index: 4, kind: input, shape index: {}]
  %s5 = inlined_call_operand.vmem [shape: bf16[50,10], index: 5, kind: input, shape index: {}]
  %s6 = inlined_call_operand.vmem [shape: f32[1,10], index: 6, kind: input, shape index: {}]
  %s7 = inlined_call_operand.hbm [shape: f32[2,10], index: 7, kind: output, shape index: {}]
  %s8 = sld [smem:[#allocation0]]
  $region38: #{hdr_forward.3} parent=0
    _
  %s10 = ssub.s32 1, %s8
  %s11 = scalar_select 0, %s10, %s8
  $region1: #{hdr_forward.3} parent=0
    #allocation2 [shape = 'u8[1024]{0}', space=vmem, size = 0x400, scoped, tag = 'output window, operand 0, single buffered']
    #allocation3 [shape = 's32[1]{0}', space=sflag, size = 0x4, scoped, tag = 'scoped memory for hdr_forward.3']
    %12 = vsyncpa [#allocation3], 0
    // Predicated region
    $region2: #{hdr_forward.3} parent=1 // pred_check
      _
    $region3: #{hdr_forward.3} parent=1 // pred_check_branch
      %14 = sbr.rel (0) target = $region5
    $region4: #{hdr_forward.3} parent=1 // pred_region
      _
    $region5: #{hdr_forward.3} parent=1 // pred_fallthru
      _
    // Predicated region
    $region6: #{hdr_forward.3} parent=1 // pred_check
      _
    $region7: #{hdr_forward.3} parent=1 // pred_check_branch
      %16 = sbr.rel (0) target = $region9
    $region8: #{hdr_forward.3} parent=1 // pred_region
      _
    $region9: #{hdr_forward.3} parent=1 // pred_fallthru
      _
    // Predicated region
    $region10: #{hdr_forward.3} parent=1 // pred_check
      _
    $region11: #{hdr_forward.3} parent=1 // pred_check_branch
      %18 = sbr.rel (0) target = $region13
    $region12: #{hdr_forward.3} parent=1 // pred_region
      _
    $region13: #{hdr_forward.3} parent=1 // pred_fallthru
      _
    // Predicated region
    $region14: #{hdr_forward.3} parent=1 // pred_check
      _
    $region15: #{hdr_forward.3} parent=1 // pred_check_branch
      %20 = sbr.rel (0) target = $region17
    $region16: #{hdr_forward.3} parent=1 // pred_region
      _
    $region17: #{hdr_forward.3} parent=1 // pred_fallthru
      _
    // Predicated region
    $region18: #{hdr_forward.3} parent=1 // pred_check
      _
    $region19: #{hdr_forward.3} parent=1 // pred_check_branch
      %22 = sbr.rel (0) target = $region21
    $region20: #{hdr_forward.3} parent=1 // pred_region
      _
    $region21: #{hdr_forward.3} parent=1 // pred_fallthru
      _
    // Predicated region
    $region22: #{hdr_forward.3} parent=1 // pred_check
      _
    $region23: #{hdr_forward.3} parent=1 // pred_check_branch
      %24 = sbr.rel (0) target = $region25
    $region24: #{hdr_forward.3} parent=1 // pred_region
      _
    $region25: #{hdr_forward.3} parent=1 // pred_fallthru
      _
    // Predicated region
    $region26: #{hdr_forward.3} parent=1 // pred_check
      _
    $region27: #{hdr_forward.3} parent=1 // pred_check_branch
      %26 = sbr.rel (0) target = $region29
    $region28: #{hdr_forward.3} parent=1 // pred_region
      _
    $region29: #{hdr_forward.3} parent=1 // pred_fallthru
      _
    %v28 = vld [vmem:[%s0] sm:$0xff]
    %v29 = vld [vmem:[%s0 + $0x8] sm:$0xff]
    %v30 = vld [vmem:[%s0 + $0x10] sm:$0xff]
    %v31 = vld [vmem:[%s0 + $0x18] sm:$0xff]
    %v32 = vld [vmem:[%s0 + $0x20] sm:$0xff]
    %v33 = vld [vmem:[%s0 + $0x28] sm:$0xff]
    %v34 = vld [vmem:[%s0 + $0x30] sm:$0x1]
    %v35 = vld [vmem:[%s1] sm:$0xf]
    %v36 = vld [vmem:[%s1 + $0x4] sm:$0xf]
    %v37 = vld [vmem:[%s1 + $0x8] sm:$0xf]
    %v38 = vld [vmem:[%s1 + $0xc] sm:$0xf]
    %v39 = vld [vmem:[%s1 + $0x10] sm:$0xf]
    %v40 = vld [vmem:[%s1 + $0x14] sm:$0xf]
    %v41 = vld [vmem:[%s1 + $0x18] sm:$0xf]
    %v42 = vld [vmem:[%s1 + $0x1c] sm:$0xf]
    %v43 = vld [vmem:[%s1 + $0x20] sm:$0xf]
    %v44 = vld [vmem:[%s1 + $0x24] sm:$0xf]
    %v45 = vld [vmem:[%s1 + $0x28] sm:$0xf]
    %v46 = vld [vmem:[%s1 + $0x2c] sm:$0xf]
    %v47 = vld [vmem:[%s1 + $0x30] sm:$0xf]
    %v48 = vld [vmem:[%s1 + $0x34] sm:$0xf]
    %v49 = vld [vmem:[%s1 + $0x38] sm:$0xf]
    %v50 = vld [vmem:[%s1 + $0x3c] sm:$0xf]
    %v51 = vld [vmem:[%s1 + $0x40] sm:$0xf]
    %v52 = vld [vmem:[%s1 + $0x44] sm:$0xf]
    %v53 = vld [vmem:[%s1 + $0x48] sm:$0xf]
    %v54 = vld [vmem:[%s1 + $0x4c] sm:$0xf]
    %v55 = vld [vmem:[%s1 + $0x50] sm:$0xf]
    %v56 = vld [vmem:[%s1 + $0x54] sm:$0xf]
    %v57 = vld [vmem:[%s1 + $0x58] sm:$0xf]
    %v58 = vld [vmem:[%s1 + $0x5c] sm:$0xf]
    %v59 = vld [vmem:[%s1 + $0x60] sm:$0xf]
    %v60 = vld [vmem:[%s1 + $0x64] sm:$0xf]
    %v61 = vld [vmem:[%s1 + $0x68] sm:$0xf]
    %v62 = vld [vmem:[%s1 + $0x6c] sm:$0xf]
    %v63 = vld [vmem:[%s1 + $0x70] sm:$0xf]
    %v64 = vld [vmem:[%s1 + $0x74] sm:$0xf]
    %v65 = vld [vmem:[%s1 + $0x78] sm:$0xf]
    %v66 = vld [vmem:[%s1 + $0x7c] sm:$0xf]
    %v67 = vld [vmem:[%s1 + $0x80] sm:$0xf]
    %v68 = vld [vmem:[%s1 + $0x84] sm:$0xf]
    %v69 = vld [vmem:[%s1 + $0x88] sm:$0xf]
    %v70 = vld [vmem:[%s1 + $0x8c] sm:$0xf]
    %v71 = vld [vmem:[%s1 + $0x90] sm:$0xf]
    %v72 = vld [vmem:[%s1 + $0x94] sm:$0xf]
    %v73 = vld [vmem:[%s1 + $0x98] sm:$0xf]
    %v74 = vld [vmem:[%s1 + $0x9c] sm:$0xf]
    %v75 = vld [vmem:[%s1 + $0xa0] sm:$0xf]
    %v76 = vld [vmem:[%s1 + $0xa4] sm:$0xf]
    %v77 = vld [vmem:[%s1 + $0xa8] sm:$0xf]
    %v78 = vld [vmem:[%s1 + $0xac] sm:$0xf]
    %v79 = vld [vmem:[%s1 + $0xb0] sm:$0xf]
    %v80 = vld [vmem:[%s1 + $0xb4] sm:$0xf]
    %v81 = vld [vmem:[%s1 + $0xb8] sm:$0xf]
    %v82 = vld [vmem:[%s1 + $0xbc] sm:$0xf]
    %v83 = vld [vmem:[%s1 + $0xc0] sm:$0xf]
    %v84 = vld [vmem:[%s1 + $0xc4] sm:$0xf]
    %v85 = vld [vmem:[%s1 + $0xc8] sm:$0xf]
    %v86 = vld [vmem:[%s1 + $0xcc] sm:$0xf]
    %v87 = vld [vmem:[%s1 + $0xd0] sm:$0xf]
    %v88 = vld [vmem:[%s1 + $0xd4] sm:$0xf]
    %v89 = vld [vmem:[%s1 + $0xd8] sm:$0xf]
    %v90 = vld [vmem:[%s1 + $0xdc] sm:$0xf]
    %v91 = vld [vmem:[%s1 + $0xe0] sm:$0xf]
    %v92 = vld [vmem:[%s1 + $0xe4] sm:$0xf]
    %v93 = vld [vmem:[%s1 + $0xe8] sm:$0xf]
    %v94 = vld [vmem:[%s1 + $0xec] sm:$0xf]
    %v95 = vld [vmem:[%s1 + $0xf0] sm:$0xf]
    %v96 = vld [vmem:[%s1 + $0xf4] sm:$0xf]
    %v97 = vld [vmem:[%s1 + $0xf8] sm:$0xf]
    %v98 = vld [vmem:[%s1 + $0xfc] sm:$0xf]
    %v99 = vld [vmem:[%s1 + $0x100] sm:$0xf]
    %v100 = vld [vmem:[%s1 + $0x104] sm:$0xf]
    %v101 = vld [vmem:[%s1 + $0x108] sm:$0xf]
    %v102 = vld [vmem:[%s1 + $0x10c] sm:$0xf]
    %v103 = vld [vmem:[%s1 + $0x110] sm:$0xf]
    %v104 = vld [vmem:[%s1 + $0x114] sm:$0xf]
    %v105 = vld [vmem:[%s1 + $0x118] sm:$0xf]
    %v106 = vld [vmem:[%s1 + $0x11c] sm:$0xf]
    %v107 = vld [vmem:[%s1 + $0x120] sm:$0xf]
    %v108 = vld [vmem:[%s1 + $0x124] sm:$0xf]
    %v109 = vld [vmem:[%s1 + $0x128] sm:$0xf]
    %v110 = vld [vmem:[%s1 + $0x12c] sm:$0xf]
    %v111 = vld [vmem:[%s1 + $0x130] sm:$0xf]
    %v112 = vld [vmem:[%s1 + $0x134] sm:$0xf]
    %v113 = vld [vmem:[%s1 + $0x138] sm:$0xf]
    %v114 = vld [vmem:[%s1 + $0x13c] sm:$0xf]
    %v115 = vld [vmem:[%s1 + $0x140] sm:$0xf]
    %v116 = vld [vmem:[%s1 + $0x144] sm:$0xf]
    %v117 = vld [vmem:[%s1 + $0x148] sm:$0xf]
    %v118 = vld [vmem:[%s1 + $0x14c] sm:$0xf]
    %v119 = vld [vmem:[%s1 + $0x150] sm:$0xf]
    %v120 = vld [vmem:[%s1 + $0x154] sm:$0xf]
    %v121 = vld [vmem:[%s1 + $0x158] sm:$0xf]
    %v122 = vld [vmem:[%s1 + $0x15c] sm:$0xf]
    %v123 = vld [vmem:[%s1 + $0x160] sm:$0xf]
    %v124 = vld [vmem:[%s1 + $0x164] sm:$0xf]
    %v125 = vld [vmem:[%s1 + $0x168] sm:$0xf]
    %v126 = vld [vmem:[%s1 + $0x16c] sm:$0xf]
    %v127 = vld [vmem:[%s1 + $0x170] sm:$0xf]
    %v128 = vld [vmem:[%s1 + $0x174] sm:$0xf]
    %v129 = vld [vmem:[%s1 + $0x178] sm:$0xf]
    %v130 = vld [vmem:[%s1 + $0x17c] sm:$0xf]
    %v131 = vld [vmem:[%s1 + $0x180] sm:$0xf]
    %v132 = vld [vmem:[%s1 + $0x184] sm:$0xf]
    %v133 = vld [vmem:[%s1 + $0x188] sm:$0xf]
    %v134 = vld [vmem:[%s1 + $0x18c] sm:$0xf]
    %v135 = vld [vmem:[%s1 + $0x190] sm:$0xf]
    %v136 = vld [vmem:[%s1 + $0x194] sm:$0xf]
    %v137 = vld [vmem:[%s1 + $0x198] sm:$0xf]
    %v138 = vld [vmem:[%s1 + $0x19c] sm:$0xf]
    %v139 = vld [vmem:[%s1 + $0x1a0] sm:$0xf]
    %v140 = vld [vmem:[%s1 + $0x1a4] sm:$0xf]
    %v141 = vld [vmem:[%s1 + $0x1a8] sm:$0xf]
    %v142 = vld [vmem:[%s1 + $0x1ac] sm:$0xf]
    %v143 = vld [vmem:[%s1 + $0x1b0] sm:$0xf]
    %v144 = vld [vmem:[%s1 + $0x1b4] sm:$0xf]
    %v145 = vld [vmem:[%s1 + $0x1b8] sm:$0xf]
    %v146 = vld [vmem:[%s1 + $0x1bc] sm:$0xf]
    %v147 = vld [vmem:[%s1 + $0x1c0] sm:$0xf]
    %v148 = vld [vmem:[%s1 + $0x1c4] sm:$0xf]
    %v149 = vld [vmem:[%s1 + $0x1c8] sm:$0xf]
    %v150 = vld [vmem:[%s1 + $0x1cc] sm:$0xf]
    %v151 = vld [vmem:[%s1 + $0x1d0] sm:$0xf]
    %v152 = vld [vmem:[%s1 + $0x1d4] sm:$0xf]
    %v153 = vld [vmem:[%s1 + $0x1d8] sm:$0xf]
    %v154 = vld [vmem:[%s1 + $0x1dc] sm:$0xf]
    %v155 = vld [vmem:[%s1 + $0x1e0] sm:$0xf]
    %v156 = vld [vmem:[%s1 + $0x1e4] sm:$0xf]
    %v157 = vld [vmem:[%s1 + $0x1e8] sm:$0xf]
    %v158 = vld [vmem:[%s1 + $0x1ec] sm:$0xf]
    %v159 = vld [vmem:[%s1 + $0x1f0] sm:$0xf]
    %v160 = vld [vmem:[%s1 + $0x1f4] sm:$0xf]
    %v161 = vld [vmem:[%s1 + $0x1f8] sm:$0xf]
    %v162 = vld [vmem:[%s1 + $0x1fc] sm:$0xf]
    %v163 = vld [vmem:[%s1 + $0x200] sm:$0xf]
    %v164 = vld [vmem:[%s1 + $0x204] sm:$0xf]
    %v165 = vld [vmem:[%s1 + $0x208] sm:$0xf]
    %v166 = vld [vmem:[%s1 + $0x20c] sm:$0xf]
    %v167 = vld [vmem:[%s1 + $0x210] sm:$0xf]
    %v168 = vld [vmem:[%s1 + $0x214] sm:$0xf]
    %v169 = vld [vmem:[%s1 + $0x218] sm:$0xf]
    %v170 = vld [vmem:[%s1 + $0x21c] sm:$0xf]
    %v171 = vld [vmem:[%s1 + $0x220] sm:$0xf]
    %v172 = vld [vmem:[%s1 + $0x224] sm:$0xf]
    %v173 = vld [vmem:[%s1 + $0x228] sm:$0xf]
    %v174 = vld [vmem:[%s1 + $0x22c] sm:$0xf]
    %v175 = vld [vmem:[%s1 + $0x230] sm:$0xf]
    %v176 = vld [vmem:[%s1 + $0x234] sm:$0xf]
    %v177 = vld [vmem:[%s1 + $0x238] sm:$0xf]
    %v178 = vld [vmem:[%s1 + $0x23c] sm:$0xf]
    %v179 = vld [vmem:[%s1 + $0x240] sm:$0xf]
    %v180 = vld [vmem:[%s1 + $0x244] sm:$0xf]
    %v181 = vld [vmem:[%s1 + $0x248] sm:$0xf]
    %v182 = vld [vmem:[%s1 + $0x24c] sm:$0xf]
    %v183 = vld [vmem:[%s1 + $0x250] sm:$0xf]
    %v184 = vld [vmem:[%s1 + $0x254] sm:$0xf]
    %v185 = vld [vmem:[%s1 + $0x258] sm:$0xf]
    %v186 = vld [vmem:[%s1 + $0x25c] sm:$0xf]
    %v187 = vld [vmem:[%s1 + $0x260] sm:$0xf]
    %v188 = vld [vmem:[%s1 + $0x264] sm:$0xf]
    %v189 = vld [vmem:[%s1 + $0x268] sm:$0xf]
    %v190 = vld [vmem:[%s1 + $0x26c] sm:$0xf]
    %v191 = vld [vmem:[%s1 + $0x270] sm:$0xf]
    %v192 = vld [vmem:[%s1 + $0x274] sm:$0xf]
    %v193 = vld [vmem:[%s1 + $0x278] sm:$0xf]
    %v194 = vld [vmem:[%s1 + $0x27c] sm:$0xf]
    %v195 = vld [vmem:[%s1 + $0x280] sm:$0xf]
    %v196 = vld [vmem:[%s1 + $0x284] sm:$0xf]
    %v197 = vld [vmem:[%s1 + $0x288] sm:$0xf]
    %v198 = vld [vmem:[%s1 + $0x28c] sm:$0xf]
    %v199 = vld [vmem:[%s1 + $0x290] sm:$0xf]
    %v200 = vld [vmem:[%s1 + $0x294] sm:$0xf]
    %v201 = vld [vmem:[%s1 + $0x298] sm:$0xf]
    %v202 = vld [vmem:[%s1 + $0x29c] sm:$0xf]
    %v203 = vld [vmem:[%s1 + $0x2a0] sm:$0xf]
    %v204 = vld [vmem:[%s1 + $0x2a4] sm:$0xf]
    %v205 = vld [vmem:[%s1 + $0x2a8] sm:$0xf]
    %v206 = vld [vmem:[%s1 + $0x2ac] sm:$0xf]
    %v207 = vld [vmem:[%s1 + $0x2b0] sm:$0xf]
    %v208 = vld [vmem:[%s1 + $0x2b4] sm:$0xf]
    %v209 = vld [vmem:[%s1 + $0x2b8] sm:$0xf]
    %v210 = vld [vmem:[%s1 + $0x2bc] sm:$0xf]
    %v211 = vld [vmem:[%s1 + $0x2c0] sm:$0xf]
    %v212 = vld [vmem:[%s1 + $0x2c4] sm:$0xf]
    %v213 = vld [vmem:[%s1 + $0x2c8] sm:$0xf]
    %v214 = vld [vmem:[%s1 + $0x2cc] sm:$0xf]
    %v215 = vld [vmem:[%s1 + $0x2d0] sm:$0xf]
    %v216 = vld [vmem:[%s1 + $0x2d4] sm:$0xf]
    %v217 = vld [vmem:[%s1 + $0x2d8] sm:$0xf]
    %v218 = vld [vmem:[%s1 + $0x2dc] sm:$0xf]
    %v219 = vld [vmem:[%s1 + $0x2e0] sm:$0xf]
    %v220 = vld [vmem:[%s1 + $0x2e4] sm:$0xf]
    %v221 = vld [vmem:[%s1 + $0x2e8] sm:$0xf]
    %v222 = vld [vmem:[%s1 + $0x2ec] sm:$0xf]
    %v223 = vld [vmem:[%s1 + $0x2f0] sm:$0xf]
    %v224 = vld [vmem:[%s1 + $0x2f4] sm:$0xf]
    %v225 = vld [vmem:[%s1 + $0x2f8] sm:$0xf]
    %v226 = vld [vmem:[%s1 + $0x2fc] sm:$0xf]
    %v227 = vld [vmem:[%s1 + $0x300] sm:$0xf]
    %v228 = vld [vmem:[%s1 + $0x304] sm:$0xf]
    %v229 = vld [vmem:[%s1 + $0x308] sm:$0xf]
    %v230 = vld [vmem:[%s1 + $0x30c] sm:$0xf]
    %v231 = vld [vmem:[%s1 + $0x310] sm:$0xf]
    %v232 = vld [vmem:[%s1 + $0x314] sm:$0xf]
    %v233 = vld [vmem:[%s1 + $0x318] sm:$0xf]
    %v234 = vld [vmem:[%s1 + $0x31c] sm:$0xf]
    %v235 = vld [vmem:[%s1 + $0x320] sm:$0xf]
    %v236 = vld [vmem:[%s1 + $0x324] sm:$0xf]
    %v237 = vld [vmem:[%s1 + $0x328] sm:$0xf]
    %v238 = vld [vmem:[%s1 + $0x32c] sm:$0xf]
    %v239 = vld [vmem:[%s1 + $0x330] sm:$0xf]
    %v240 = vld [vmem:[%s1 + $0x334] sm:$0xf]
    %v241 = vld [vmem:[%s1 + $0x338] sm:$0xf]
    %v242 = vld [vmem:[%s1 + $0x33c] sm:$0xf]
    %v243 = vld [vmem:[%s1 + $0x340] sm:$0xf]
    %v244 = vld [vmem:[%s1 + $0x344] sm:$0xf]
    %v245 = vld [vmem:[%s1 + $0x348] sm:$0xf]
    %v246 = vld [vmem:[%s1 + $0x34c] sm:$0xf]
    %v247 = vld [vmem:[%s1 + $0x350] sm:$0xf]
    %v248 = vld [vmem:[%s1 + $0x354] sm:$0xf]
    %v249 = vld [vmem:[%s1 + $0x358] sm:$0xf]
    %v250 = vld [vmem:[%s1 + $0x35c] sm:$0xf]
    %v251 = vld [vmem:[%s1 + $0x360] sm:$0xf]
    %v252 = vld [vmem:[%s1 + $0x364] sm:$0xf]
    %v253 = vld [vmem:[%s1 + $0x368] sm:$0xf]
    %v254 = vld [vmem:[%s1 + $0x36c] sm:$0xf]
    %v255 = vld [vmem:[%s1 + $0x370] sm:$0xf]
    %v256 = vld [vmem:[%s1 + $0x374] sm:$0xf]
    %v257 = vld [vmem:[%s1 + $0x378] sm:$0xf]
    %v258 = vld [vmem:[%s1 + $0x37c] sm:$0xf]
    %v259 = vld [vmem:[%s1 + $0x380] sm:$0xf]
    %v260 = vld [vmem:[%s1 + $0x384] sm:$0xf]
    %v261 = vld [vmem:[%s1 + $0x388] sm:$0xf]
    %v262 = vld [vmem:[%s1 + $0x38c] sm:$0xf]
    %v263 = vld [vmem:[%s1 + $0x390] sm:$0xf]
    %v264 = vld [vmem:[%s1 + $0x394] sm:$0xf]
    %v265 = vld [vmem:[%s1 + $0x398] sm:$0xf]
    %v266 = vld [vmem:[%s1 + $0x39c] sm:$0xf]
    %v267 = vld [vmem:[%s1 + $0x3a0] sm:$0xf]
    %v268 = vld [vmem:[%s1 + $0x3a4] sm:$0xf]
    %v269 = vld [vmem:[%s1 + $0x3a8] sm:$0xf]
    %v270 = vld [vmem:[%s1 + $0x3ac] sm:$0xf]
    %v271 = vld [vmem:[%s1 + $0x3b0] sm:$0xf]
    %v272 = vld [vmem:[%s1 + $0x3b4] sm:$0xf]
    %v273 = vld [vmem:[%s1 + $0x3b8] sm:$0xf]
    %v274 = vld [vmem:[%s1 + $0x3bc] sm:$0xf]
    %v275 = vld [vmem:[%s1 + $0x3c0] sm:$0xf]
    %v276 = vld [vmem:[%s1 + $0x3c4] sm:$0xf]
    %v277 = vld [vmem:[%s1 + $0x3c8] sm:$0xf]
    %v278 = vld [vmem:[%s1 + $0x3cc] sm:$0xf]
    %v279 = vld [vmem:[%s1 + $0x3d0] sm:$0xf]
    %v280 = vld [vmem:[%s1 + $0x3d4] sm:$0xf]
    %v281 = vld [vmem:[%s1 + $0x3d8] sm:$0xf]
    %v282 = vld [vmem:[%s1 + $0x3dc] sm:$0xf]
    %v283 = vld [vmem:[%s1 + $0x3e0] sm:$0xf]
    %v284 = vld [vmem:[%s1 + $0x3e4] sm:$0xf]
    %v285 = vld [vmem:[%s1 + $0x3e8] sm:$0xf]
    %v286 = vld [vmem:[%s1 + $0x3ec] sm:$0xf]
    %v287 = vld [vmem:[%s1 + $0x3f0] sm:$0xf]
    %v288 = vld [vmem:[%s1 + $0x3f4] sm:$0xf]
    %v289 = vld [vmem:[%s1 + $0x3f8] sm:$0xf]
    %v290 = vld [vmem:[%s1 + $0x3fc] sm:$0xf]
    %v291 = vld [vmem:[%s1 + $0x400] sm:$0xf]
    %v292 = vld [vmem:[%s1 + $0x404] sm:$0xf]
    %v293 = vld [vmem:[%s1 + $0x408] sm:$0xf]
    %v294 = vld [vmem:[%s1 + $0x40c] sm:$0xf]
    %v295 = vld [vmem:[%s1 + $0x410] sm:$0xf]
    %v296 = vld [vmem:[%s1 + $0x414] sm:$0xf]
    %v297 = vld [vmem:[%s1 + $0x418] sm:$0xf]
    %v298 = vld [vmem:[%s1 + $0x41c] sm:$0xf]
    %v299 = vld [vmem:[%s1 + $0x420] sm:$0xf]
    %v300 = vld [vmem:[%s1 + $0x424] sm:$0xf]
    %v301 = vld [vmem:[%s1 + $0x428] sm:$0xf]
    %v302 = vld [vmem:[%s1 + $0x42c] sm:$0xf]
    %v303 = vld [vmem:[%s1 + $0x430] sm:$0xf]
    %v304 = vld [vmem:[%s1 + $0x434] sm:$0xf]
    %v305 = vld [vmem:[%s1 + $0x438] sm:$0xf]
    %v306 = vld [vmem:[%s1 + $0x43c] sm:$0xf]
    %v307 = vld [vmem:[%s1 + $0x440] sm:$0xf]
    %v308 = vld [vmem:[%s1 + $0x444] sm:$0xf]
    %v309 = vld [vmem:[%s1 + $0x448] sm:$0xf]
    %v310 = vld [vmem:[%s1 + $0x44c] sm:$0xf]
    %v311 = vld [vmem:[%s1 + $0x450] sm:$0xf]
    %v312 = vld [vmem:[%s1 + $0x454] sm:$0xf]
    %v313 = vld [vmem:[%s1 + $0x458] sm:$0xf]
    %v314 = vld [vmem:[%s1 + $0x45c] sm:$0xf]
    %v315 = vld [vmem:[%s1 + $0x460] sm:$0xf]
    %v316 = vld [vmem:[%s1 + $0x464] sm:$0xf]
    %v317 = vld [vmem:[%s1 + $0x468] sm:$0xf]
    %v318 = vld [vmem:[%s1 + $0x46c] sm:$0xf]
    %v319 = vld [vmem:[%s1 + $0x470] sm:$0xf]
    %v320 = vld [vmem:[%s1 + $0x474] sm:$0xf]
    %v321 = vld [vmem:[%s1 + $0x478] sm:$0xf]
    %v322 = vld [vmem:[%s1 + $0x47c] sm:$0xf]
    %v323 = vld [vmem:[%s1 + $0x480] sm:$0xf]
    %v324 = vld [vmem:[%s1 + $0x484] sm:$0xf]
    %v325 = vld [vmem:[%s1 + $0x488] sm:$0xf]
    %v326 = vld [vmem:[%s1 + $0x48c] sm:$0xf]
    %v327 = vld [vmem:[%s1 + $0x490] sm:$0xf]
    %v328 = vld [vmem:[%s1 + $0x494] sm:$0xf]
    %v329 = vld [vmem:[%s1 + $0x498] sm:$0xf]
    %v330 = vld [vmem:[%s1 + $0x49c] sm:$0xf]
    %v331 = vld [vmem:[%s1 + $0x4a0] sm:$0xf]
    %v332 = vld [vmem:[%s1 + $0x4a4] sm:$0xf]
    %v333 = vld [vmem:[%s1 + $0x4a8] sm:$0xf]
    %v334 = vld [vmem:[%s1 + $0x4ac] sm:$0xf]
    %v335 = vld [vmem:[%s1 + $0x4b0] sm:$0xf]
    %v336 = vld [vmem:[%s1 + $0x4b4] sm:$0xf]
    %v337 = vld [vmem:[%s1 + $0x4b8] sm:$0xf]
    %v338 = vld [vmem:[%s1 + $0x4bc] sm:$0xf]
    %v339 = vld [vmem:[%s1 + $0x4c0] sm:$0xf]
    %v340 = vld [vmem:[%s1 + $0x4c4] sm:$0xf]
    %v341 = vld [vmem:[%s1 + $0x4c8] sm:$0xf]
    %v342 = vld [vmem:[%s1 + $0x4cc] sm:$0xf]
    %v343 = vld [vmem:[%s1 + $0x4d0] sm:$0xf]
    %v344 = vld [vmem:[%s1 + $0x4d4] sm:$0xf]
    %v345 = vld [vmem:[%s1 + $0x4d8] sm:$0xf]
    %v346 = vld [vmem:[%s1 + $0x4dc] sm:$0xf]
    %v347 = vld [vmem:[%s1 + $0x4e0] sm:$0xf]
    %v348 = vld [vmem:[%s1 + $0x4e4] sm:$0xf]
    %v349 = vld [vmem:[%s1 + $0x4e8] sm:$0xf]
    %v350 = vld [vmem:[%s1 + $0x4ec] sm:$0xf]
    %v351 = vld [vmem:[%s1 + $0x4f0] sm:$0xf]
    %v352 = vld [vmem:[%s1 + $0x4f4] sm:$0xf]
    %v353 = vld [vmem:[%s1 + $0x4f8] sm:$0xf]
    %v354 = vld [vmem:[%s1 + $0x4fc] sm:$0xf]
    %v355 = vld [vmem:[%s1 + $0x500] sm:$0xf]
    %v356 = vld [vmem:[%s1 + $0x504] sm:$0xf]
    %v357 = vld [vmem:[%s1 + $0x508] sm:$0xf]
    %v358 = vld [vmem:[%s1 + $0x50c] sm:$0xf]
    %v359 = vld [vmem:[%s1 + $0x510] sm:$0xf]
    %v360 = vld [vmem:[%s1 + $0x514] sm:$0xf]
    %v361 = vld [vmem:[%s1 + $0x518] sm:$0xf]
    %v362 = vld [vmem:[%s1 + $0x51c] sm:$0xf]
    %v363 = vld [vmem:[%s1 + $0x520] sm:$0xf]
    %v364 = vld [vmem:[%s1 + $0x524] sm:$0xf]
    %v365 = vld [vmem:[%s1 + $0x528] sm:$0xf]
    %v366 = vld [vmem:[%s1 + $0x52c] sm:$0xf]
    %v367 = vld [vmem:[%s1 + $0x530] sm:$0xf]
    %v368 = vld [vmem:[%s1 + $0x534] sm:$0xf]
    %v369 = vld [vmem:[%s1 + $0x538] sm:$0xf]
    %v370 = vld [vmem:[%s1 + $0x53c] sm:$0xf]
    %v371 = vld [vmem:[%s1 + $0x540] sm:$0xf]
    %v372 = vld [vmem:[%s1 + $0x544] sm:$0xf]
    %v373 = vld [vmem:[%s1 + $0x548] sm:$0xf]
    %v374 = vld [vmem:[%s1 + $0x54c] sm:$0xf]
    %v375 = vld [vmem:[%s1 + $0x550] sm:$0xf]
    %v376 = vld [vmem:[%s1 + $0x554] sm:$0xf]
    %v377 = vld [vmem:[%s1 + $0x558] sm:$0xf]
    %v378 = vld [vmem:[%s1 + $0x55c] sm:$0xf]
    %v379 = vld [vmem:[%s1 + $0x560] sm:$0xf]
    %v380 = vld [vmem:[%s1 + $0x564] sm:$0xf]
    %v381 = vld [vmem:[%s1 + $0x568] sm:$0xf]
    %v382 = vld [vmem:[%s1 + $0x56c] sm:$0xf]
    %v383 = vld [vmem:[%s1 + $0x570] sm:$0xf]
    %v384 = vld [vmem:[%s1 + $0x574] sm:$0xf]
    %v385 = vld [vmem:[%s1 + $0x578] sm:$0xf]
    %v386 = vld [vmem:[%s1 + $0x57c] sm:$0xf]
    %v387 = vld [vmem:[%s1 + $0x580] sm:$0xf]
    %v388 = vld [vmem:[%s1 + $0x584] sm:$0xf]
    %v389 = vld [vmem:[%s1 + $0x588] sm:$0xf]
    %v390 = vld [vmem:[%s1 + $0x58c] sm:$0xf]
    %v391 = vld [vmem:[%s1 + $0x590] sm:$0xf]
    %v392 = vld [vmem:[%s1 + $0x594] sm:$0xf]
    %v393 = vld [vmem:[%s1 + $0x598] sm:$0xf]
    %v394 = vld [vmem:[%s1 + $0x59c] sm:$0xf]
    %v395 = vld [vmem:[%s1 + $0x5a0] sm:$0xf]
    %v396 = vld [vmem:[%s1 + $0x5a4] sm:$0xf]
    %v397 = vld [vmem:[%s1 + $0x5a8] sm:$0xf]
    %v398 = vld [vmem:[%s1 + $0x5ac] sm:$0xf]
    %v399 = vld [vmem:[%s1 + $0x5b0] sm:$0xf]
    %v400 = vld [vmem:[%s1 + $0x5b4] sm:$0xf]
    %v401 = vld [vmem:[%s1 + $0x5b8] sm:$0xf]
    %v402 = vld [vmem:[%s1 + $0x5bc] sm:$0xf]
    %v403 = vld [vmem:[%s1 + $0x5c0] sm:$0xf]
    %v404 = vld [vmem:[%s1 + $0x5c4] sm:$0xf]
    %v405 = vld [vmem:[%s1 + $0x5c8] sm:$0xf]
    %v406 = vld [vmem:[%s1 + $0x5cc] sm:$0xf]
    %v407 = vld [vmem:[%s1 + $0x5d0] sm:$0xf]
    %v408 = vld [vmem:[%s1 + $0x5d4] sm:$0xf]
    %v409 = vld [vmem:[%s1 + $0x5d8] sm:$0xf]
    %v410 = vld [vmem:[%s1 + $0x5dc] sm:$0xf]
    %v411 = vld [vmem:[%s1 + $0x5e0] sm:$0xf]
    %v412 = vld [vmem:[%s1 + $0x5e4] sm:$0xf]
    %v413 = vld [vmem:[%s1 + $0x5e8] sm:$0xf]
    %v414 = vld [vmem:[%s1 + $0x5ec] sm:$0xf]
    %v415 = vld [vmem:[%s1 + $0x5f0] sm:$0xf]
    %v416 = vld [vmem:[%s1 + $0x5f4] sm:$0xf]
    %v417 = vld [vmem:[%s1 + $0x5f8] sm:$0xf]
    %v418 = vld [vmem:[%s1 + $0x5fc] sm:$0xf]
    %v419 = vld [vmem:[%s1 + $0x600] sm:$0xf]
    %v420 = vld [vmem:[%s1 + $0x604] sm:$0xf]
    %v421 = vld [vmem:[%s1 + $0x608] sm:$0xf]
    %v422 = vld [vmem:[%s1 + $0x60c] sm:$0xf]
    %v423 = vld [vmem:[%s1 + $0x610] sm:$0xf]
    %v424 = vld [vmem:[%s1 + $0x614] sm:$0xf]
    %v425 = vld [vmem:[%s1 + $0x618] sm:$0xf]
    %v426 = vld [vmem:[%s1 + $0x61c] sm:$0xf]
    %v427 = vld [vmem:[%s1 + $0x620] sm:$0xf]
    %v428 = vld [vmem:[%s1 + $0x624] sm:$0xf]
    %v429 = vld [vmem:[%s1 + $0x628] sm:$0xf]
    %v430 = vld [vmem:[%s1 + $0x62c] sm:$0xf]
    %v431 = vld [vmem:[%s1 + $0x630] sm:$0xf]
    %v432 = vld [vmem:[%s1 + $0x634] sm:$0xf]
    %v433 = vld [vmem:[%s1 + $0x638] sm:$0xf]
    %v434 = vld [vmem:[%s1 + $0x63c] sm:$0xf]
    %v435 = vld [vmem:[%s1 + $0x640] sm:$0xf]
    %v436 = vld [vmem:[%s1 + $0x644] sm:$0xf]
    %v437 = vld [vmem:[%s1 + $0x648] sm:$0xf]
    %v438 = vld [vmem:[%s1 + $0x64c] sm:$0xf]
    %v439 = vld [vmem:[%s1 + $0x650] sm:$0xf]
    %v440 = vld [vmem:[%s1 + $0x654] sm:$0xf]
    %v441 = vld [vmem:[%s1 + $0x658] sm:$0xf]
    %v442 = vld [vmem:[%s1 + $0x65c] sm:$0xf]
    %v443 = vld [vmem:[%s1 + $0x660] sm:$0xf]
    %v444 = vld [vmem:[%s1 + $0x664] sm:$0xf]
    %v445 = vld [vmem:[%s1 + $0x668] sm:$0xf]
    %v446 = vld [vmem:[%s1 + $0x66c] sm:$0xf]
    %v447 = vld [vmem:[%s1 + $0x670] sm:$0xf]
    %v448 = vld [vmem:[%s1 + $0x674] sm:$0xf]
    %v449 = vld [vmem:[%s1 + $0x678] sm:$0xf]
    %v450 = vld [vmem:[%s1 + $0x67c] sm:$0xf]
    %v451 = vld [vmem:[%s1 + $0x680] sm:$0xf]
    %v452 = vld [vmem:[%s1 + $0x684] sm:$0xf]
    %v453 = vld [vmem:[%s1 + $0x688] sm:$0xf]
    %v454 = vld [vmem:[%s1 + $0x68c] sm:$0xf]
    %v455 = vld [vmem:[%s1 + $0x690] sm:$0xf]
    %v456 = vld [vmem:[%s1 + $0x694] sm:$0xf]
    %v457 = vld [vmem:[%s1 + $0x698] sm:$0xf]
    %v458 = vld [vmem:[%s1 + $0x69c] sm:$0xf]
    %v459 = vld [vmem:[%s1 + $0x6a0] sm:$0xf]
    %v460 = vld [vmem:[%s1 + $0x6a4] sm:$0xf]
    %v461 = vld [vmem:[%s1 + $0x6a8] sm:$0xf]
    %v462 = vld [vmem:[%s1 + $0x6ac] sm:$0xf]
    %v463 = vld [vmem:[%s1 + $0x6b0] sm:$0xf]
    %v464 = vld [vmem:[%s1 + $0x6b4] sm:$0xf]
    %v465 = vld [vmem:[%s1 + $0x6b8] sm:$0xf]
    %v466 = vld [vmem:[%s1 + $0x6bc] sm:$0xf]
    %v467 = vld [vmem:[%s1 + $0x6c0] sm:$0xf]
    %v468 = vld [vmem:[%s1 + $0x6c4] sm:$0xf]
    %v469 = vld [vmem:[%s1 + $0x6c8] sm:$0xf]
    %v470 = vld [vmem:[%s1 + $0x6cc] sm:$0xf]
    %v471 = vld [vmem:[%s1 + $0x6d0] sm:$0xf]
    %v472 = vld [vmem:[%s1 + $0x6d4] sm:$0xf]
    %v473 = vld [vmem:[%s1 + $0x6d8] sm:$0xf]
    %v474 = vld [vmem:[%s1 + $0x6dc] sm:$0xf]
    %v475 = vld [vmem:[%s1 + $0x6e0] sm:$0xf]
    %v476 = vld [vmem:[%s1 + $0x6e4] sm:$0xf]
    %v477 = vld [vmem:[%s1 + $0x6e8] sm:$0xf]
    %v478 = vld [vmem:[%s1 + $0x6ec] sm:$0xf]
    %v479 = vld [vmem:[%s1 + $0x6f0] sm:$0xf]
    %v480 = vld [vmem:[%s1 + $0x6f4] sm:$0xf]
    %v481 = vld [vmem:[%s1 + $0x6f8] sm:$0xf]
    %v482 = vld [vmem:[%s1 + $0x6fc] sm:$0xf]
    %v483 = vld [vmem:[%s1 + $0x700] sm:$0xf]
    %v484 = vld [vmem:[%s1 + $0x704] sm:$0xf]
    %v485 = vld [vmem:[%s1 + $0x708] sm:$0xf]
    %v486 = vld [vmem:[%s1 + $0x70c] sm:$0xf]
    %v487 = vld [vmem:[%s1 + $0x710] sm:$0xf]
    %v488 = vld [vmem:[%s1 + $0x714] sm:$0xf]
    %v489 = vld [vmem:[%s1 + $0x718] sm:$0xf]
    %v490 = vld [vmem:[%s1 + $0x71c] sm:$0xf]
    %v491 = vld [vmem:[%s1 + $0x720] sm:$0xf]
    %v492 = vld [vmem:[%s1 + $0x724] sm:$0xf]
    %v493 = vld [vmem:[%s1 + $0x728] sm:$0xf]
    %v494 = vld [vmem:[%s1 + $0x72c] sm:$0xf]
    %v495 = vld [vmem:[%s1 + $0x730] sm:$0xf]
    %v496 = vld [vmem:[%s1 + $0x734] sm:$0xf]
    %v497 = vld [vmem:[%s1 + $0x738] sm:$0xf]
    %v498 = vld [vmem:[%s1 + $0x73c] sm:$0xf]
    %v499 = vld [vmem:[%s1 + $0x740] sm:$0xf]
    %v500 = vld [vmem:[%s1 + $0x744] sm:$0xf]
    %v501 = vld [vmem:[%s1 + $0x748] sm:$0xf]
    %v502 = vld [vmem:[%s1 + $0x74c] sm:$0xf]
    %v503 = vld [vmem:[%s1 + $0x750] sm:$0xf]
    %v504 = vld [vmem:[%s1 + $0x754] sm:$0xf]
    %v505 = vld [vmem:[%s1 + $0x758] sm:$0xf]
    %v506 = vld [vmem:[%s1 + $0x75c] sm:$0xf]
    %v507 = vld [vmem:[%s1 + $0x760] sm:$0xf]
    %v508 = vld [vmem:[%s1 + $0x764] sm:$0xf]
    %v509 = vld [vmem:[%s1 + $0x768] sm:$0xf]
    %v510 = vld [vmem:[%s1 + $0x76c] sm:$0xf]
    %v511 = vld [vmem:[%s1 + $0x770] sm:$0xf]
    %v512 = vld [vmem:[%s1 + $0x774] sm:$0xf]
    %v513 = vld [vmem:[%s1 + $0x778] sm:$0xf]
    %v514 = vld [vmem:[%s1 + $0x77c] sm:$0xf]
    %v515 = vld [vmem:[%s1 + $0x780] sm:$0xf]
    %v516 = vld [vmem:[%s1 + $0x784] sm:$0xf]
    %v517 = vld [vmem:[%s1 + $0x788] sm:$0xf]
    %v518 = vld [vmem:[%s1 + $0x78c] sm:$0xf]
    %v519 = vld [vmem:[%s1 + $0x790] sm:$0xf]
    %v520 = vld [vmem:[%s1 + $0x794] sm:$0xf]
    %v521 = vld [vmem:[%s1 + $0x798] sm:$0xf]
    %v522 = vld [vmem:[%s1 + $0x79c] sm:$0xf]
    %v523 = vld [vmem:[%s1 + $0x7a0] sm:$0xf]
    %v524 = vld [vmem:[%s1 + $0x7a4] sm:$0xf]
    %v525 = vld [vmem:[%s1 + $0x7a8] sm:$0xf]
    %v526 = vld [vmem:[%s1 + $0x7ac] sm:$0xf]
    %v527 = vld [vmem:[%s1 + $0x7b0] sm:$0xf]
    %v528 = vld [vmem:[%s1 + $0x7b4] sm:$0xf]
    %v529 = vld [vmem:[%s1 + $0x7b8] sm:$0xf]
    %v530 = vld [vmem:[%s1 + $0x7bc] sm:$0xf]
    %v531 = vld [vmem:[%s1 + $0x7c0] sm:$0xf]
    %v532 = vld [vmem:[%s1 + $0x7c4] sm:$0xf]
    %v533 = vld [vmem:[%s1 + $0x7c8] sm:$0xf]
    %v534 = vld [vmem:[%s1 + $0x7cc] sm:$0xf]
    %v535 = vld [vmem:[%s1 + $0x7d0] sm:$0xf]
    %v536 = vld [vmem:[%s1 + $0x7d4] sm:$0xf]
    %v537 = vld [vmem:[%s1 + $0x7d8] sm:$0xf]
    %v538 = vld [vmem:[%s1 + $0x7dc] sm:$0xf]
    %v539 = vld [vmem:[%s1 + $0x7e0] sm:$0xf]
    %v540 = vld [vmem:[%s1 + $0x7e4] sm:$0xf]
    %v541 = vld [vmem:[%s1 + $0x7e8] sm:$0xf]
    %v542 = vld [vmem:[%s1 + $0x7ec] sm:$0xf]
    %v543 = vld [vmem:[%s1 + $0x7f0] sm:$0xf]
    %v544 = vld [vmem:[%s1 + $0x7f4] sm:$0xf]
    %v545 = vld [vmem:[%s1 + $0x7f8] sm:$0xf]
    %v546 = vld [vmem:[%s1 + $0x7fc] sm:$0xf]
    %v547 = vld [vmem:[%s1 + $0x800] sm:$0xf]
    %v548 = vld [vmem:[%s1 + $0x804] sm:$0xf]
    %v549 = vld [vmem:[%s1 + $0x808] sm:$0xf]
    %v550 = vld [vmem:[%s1 + $0x80c] sm:$0xf]
    %v551 = vld [vmem:[%s1 + $0x810] sm:$0xf]
    %v552 = vld [vmem:[%s1 + $0x814] sm:$0xf]
    %v553 = vld [vmem:[%s1 + $0x818] sm:$0xf]
    %v554 = vld [vmem:[%s1 + $0x81c] sm:$0xf]
    %v555 = vld [vmem:[%s1 + $0x820] sm:$0xf]
    %v556 = vld [vmem:[%s1 + $0x824] sm:$0xf]
    %v557 = vld [vmem:[%s1 + $0x828] sm:$0xf]
    %v558 = vld [vmem:[%s1 + $0x82c] sm:$0xf]
    %v559 = vld [vmem:[%s1 + $0x830] sm:$0xf]
    %v560 = vld [vmem:[%s1 + $0x834] sm:$0xf]
    %v561 = vld [vmem:[%s1 + $0x838] sm:$0xf]
    %v562 = vld [vmem:[%s1 + $0x83c] sm:$0xf]
    %v563 = vld [vmem:[%s1 + $0x840] sm:$0xf]
    %v564 = vld [vmem:[%s1 + $0x844] sm:$0xf]
    %v565 = vld [vmem:[%s1 + $0x848] sm:$0xf]
    %v566 = vld [vmem:[%s1 + $0x84c] sm:$0xf]
    %v567 = vld [vmem:[%s1 + $0x850] sm:$0xf]
    %v568 = vld [vmem:[%s1 + $0x854] sm:$0xf]
    %v569 = vld [vmem:[%s1 + $0x858] sm:$0xf]
    %v570 = vld [vmem:[%s1 + $0x85c] sm:$0xf]
    %v571 = vld [vmem:[%s1 + $0x860] sm:$0xf]
    %v572 = vld [vmem:[%s1 + $0x864] sm:$0xf]
    %v573 = vld [vmem:[%s1 + $0x868] sm:$0xf]
    %v574 = vld [vmem:[%s1 + $0x86c] sm:$0xf]
    %v575 = vld [vmem:[%s1 + $0x870] sm:$0xf]
    %v576 = vld [vmem:[%s1 + $0x874] sm:$0xf]
    %v577 = vld [vmem:[%s1 + $0x878] sm:$0xf]
    %v578 = vld [vmem:[%s1 + $0x87c] sm:$0xf]
    %v579 = vld [vmem:[%s1 + $0x880] sm:$0xf]
    %v580 = vld [vmem:[%s1 + $0x884] sm:$0xf]
    %v581 = vld [vmem:[%s1 + $0x888] sm:$0xf]
    %v582 = vld [vmem:[%s1 + $0x88c] sm:$0xf]
    %v583 = vld [vmem:[%s1 + $0x890] sm:$0xf]
    %v584 = vld [vmem:[%s1 + $0x894] sm:$0xf]
    %v585 = vld [vmem:[%s1 + $0x898] sm:$0xf]
    %v586 = vld [vmem:[%s1 + $0x89c] sm:$0xf]
    %v587 = vld [vmem:[%s1 + $0x8a0] sm:$0xf]
    %v588 = vld [vmem:[%s1 + $0x8a4] sm:$0xf]
    %v589 = vld [vmem:[%s1 + $0x8a8] sm:$0xf]
    %v590 = vld [vmem:[%s1 + $0x8ac] sm:$0xf]
    %v591 = vld [vmem:[%s1 + $0x8b0] sm:$0xf]
    %v592 = vld [vmem:[%s1 + $0x8b4] sm:$0xf]
    %v593 = vld [vmem:[%s1 + $0x8b8] sm:$0xf]
    %v594 = vld [vmem:[%s1 + $0x8bc] sm:$0xf]
    %v595 = vld [vmem:[%s1 + $0x8c0] sm:$0xf]
    %v596 = vld [vmem:[%s1 + $0x8c4] sm:$0xf]
    %v597 = vld [vmem:[%s1 + $0x8c8] sm:$0xf]
    %v598 = vld [vmem:[%s1 + $0x8cc] sm:$0xf]
    %v599 = vld [vmem:[%s1 + $0x8d0] sm:$0xf]
    %v600 = vld [vmem:[%s1 + $0x8d4] sm:$0xf]
    %v601 = vld [vmem:[%s1 + $0x8d8] sm:$0xf]
    %v602 = vld [vmem:[%s1 + $0x8dc] sm:$0xf]
    %v603 = vld [vmem:[%s1 + $0x8e0] sm:$0xf]
    %v604 = vld [vmem:[%s1 + $0x8e4] sm:$0xf]
    %v605 = vld [vmem:[%s1 + $0x8e8] sm:$0xf]
    %v606 = vld [vmem:[%s1 + $0x8ec] sm:$0xf]
    %v607 = vld [vmem:[%s1 + $0x8f0] sm:$0xf]
    %v608 = vld [vmem:[%s1 + $0x8f4] sm:$0xf]
    %v609 = vld [vmem:[%s1 + $0x8f8] sm:$0xf]
    %v610 = vld [vmem:[%s1 + $0x8fc] sm:$0xf]
    %v611 = vld [vmem:[%s1 + $0x900] sm:$0xf]
    %v612 = vld [vmem:[%s1 + $0x904] sm:$0xf]
    %v613 = vld [vmem:[%s1 + $0x908] sm:$0xf]
    %v614 = vld [vmem:[%s1 + $0x90c] sm:$0xf]
    %v615 = vld [vmem:[%s1 + $0x910] sm:$0xf]
    %v616 = vld [vmem:[%s1 + $0x914] sm:$0xf]
    %v617 = vld [vmem:[%s1 + $0x918] sm:$0xf]
    %v618 = vld [vmem:[%s1 + $0x91c] sm:$0xf]
    %v619 = vld [vmem:[%s1 + $0x920] sm:$0xf]
    %v620 = vld [vmem:[%s1 + $0x924] sm:$0xf]
    %v621 = vld [vmem:[%s1 + $0x928] sm:$0xf]
    %v622 = vld [vmem:[%s1 + $0x92c] sm:$0xf]
    %v623 = vld [vmem:[%s1 + $0x930] sm:$0xf]
    %v624 = vld [vmem:[%s1 + $0x934] sm:$0xf]
    %v625 = vld [vmem:[%s1 + $0x938] sm:$0xf]
    %v626 = vld [vmem:[%s1 + $0x93c] sm:$0xf]
    %v627 = vld [vmem:[%s1 + $0x940] sm:$0xf]
    %v628 = vld [vmem:[%s1 + $0x944] sm:$0xf]
    %v629 = vld [vmem:[%s1 + $0x948] sm:$0xf]
    %v630 = vld [vmem:[%s1 + $0x94c] sm:$0xf]
    %v631 = vld [vmem:[%s1 + $0x950] sm:$0xf]
    %v632 = vld [vmem:[%s1 + $0x954] sm:$0xf]
    %v633 = vld [vmem:[%s1 + $0x958] sm:$0xf]
    %v634 = vld [vmem:[%s1 + $0x95c] sm:$0xf]
    %v635 = vld [vmem:[%s1 + $0x960] sm:$0xf]
    %v636 = vld [vmem:[%s1 + $0x964] sm:$0xf]
    %v637 = vld [vmem:[%s1 + $0x968] sm:$0xf]
    %v638 = vld [vmem:[%s1 + $0x96c] sm:$0xf]
    %v639 = vld [vmem:[%s1 + $0x970] sm:$0xf]
    %v640 = vld [vmem:[%s1 + $0x974] sm:$0xf]
    %v641 = vld [vmem:[%s1 + $0x978] sm:$0xf]
    %v642 = vld [vmem:[%s1 + $0x97c] sm:$0xf]
    %v643 = vld [vmem:[%s1 + $0x980] sm:$0xf]
    %v644 = vld [vmem:[%s1 + $0x984] sm:$0xf]
    %v645 = vld [vmem:[%s1 + $0x988] sm:$0xf]
    %v646 = vld [vmem:[%s1 + $0x98c] sm:$0xf]
    %v647 = vld [vmem:[%s1 + $0x990] sm:$0xf]
    %v648 = vld [vmem:[%s1 + $0x994] sm:$0xf]
    %v649 = vld [vmem:[%s1 + $0x998] sm:$0xf]
    %v650 = vld [vmem:[%s1 + $0x99c] sm:$0xf]
    %v651 = vld [vmem:[%s1 + $0x9a0] sm:$0xf]
    %v652 = vld [vmem:[%s1 + $0x9a4] sm:$0xf]
    %v653 = vld [vmem:[%s1 + $0x9a8] sm:$0xf]
    %v654 = vld [vmem:[%s1 + $0x9ac] sm:$0xf]
    %v655 = vld [vmem:[%s1 + $0x9b0] sm:$0xf]
    %v656 = vld [vmem:[%s1 + $0x9b4] sm:$0xf]
    %v657 = vld [vmem:[%s1 + $0x9b8] sm:$0xf]
    %v658 = vld [vmem:[%s1 + $0x9bc] sm:$0xf]
    %v659 = vld [vmem:[%s1 + $0x9c0] sm:$0xf]
    %v660 = vld [vmem:[%s1 + $0x9c4] sm:$0xf]
    %v661 = vld [vmem:[%s1 + $0x9c8] sm:$0xf]
    %v662 = vld [vmem:[%s1 + $0x9cc] sm:$0xf]
    %v663 = vld [vmem:[%s1 + $0x9d0] sm:$0xf]
    %v664 = vld [vmem:[%s1 + $0x9d4] sm:$0xf]
    %v665 = vld [vmem:[%s1 + $0x9d8] sm:$0xf]
    %v666 = vld [vmem:[%s1 + $0x9dc] sm:$0xf]
    %v667 = vld [vmem:[%s1 + $0x9e0] sm:$0xf]
    %v668 = vld [vmem:[%s1 + $0x9e4] sm:$0xf]
    %v669 = vld [vmem:[%s1 + $0x9e8] sm:$0xf]
    %v670 = vld [vmem:[%s1 + $0x9ec] sm:$0xf]
    %v671 = vld [vmem:[%s1 + $0x9f0] sm:$0xf]
    %v672 = vld [vmem:[%s1 + $0x9f4] sm:$0xf]
    %v673 = vld [vmem:[%s1 + $0x9f8] sm:$0xf]
    %v674 = vld [vmem:[%s1 + $0x9fc] sm:$0xf]
    %v675 = vld [vmem:[%s1 + $0xa00] sm:$0xf]
    %v676 = vld [vmem:[%s1 + $0xa04] sm:$0xf]
    %v677 = vld [vmem:[%s1 + $0xa08] sm:$0xf]
    %v678 = vld [vmem:[%s1 + $0xa0c] sm:$0xf]
    %v679 = vld [vmem:[%s1 + $0xa10] sm:$0xf]
    %v680 = vld [vmem:[%s1 + $0xa14] sm:$0xf]
    %v681 = vld [vmem:[%s1 + $0xa18] sm:$0xf]
    %v682 = vld [vmem:[%s1 + $0xa1c] sm:$0xf]
    %v683 = vld [vmem:[%s1 + $0xa20] sm:$0xf]
    %v684 = vld [vmem:[%s1 + $0xa24] sm:$0xf]
    %v685 = vld [vmem:[%s1 + $0xa28] sm:$0xf]
    %v686 = vld [vmem:[%s1 + $0xa2c] sm:$0xf]
    %v687 = vld [vmem:[%s1 + $0xa30] sm:$0xf]
    %v688 = vld [vmem:[%s1 + $0xa34] sm:$0xf]
    %v689 = vld [vmem:[%s1 + $0xa38] sm:$0xf]
    %v690 = vld [vmem:[%s1 + $0xa3c] sm:$0xf]
    %v691 = vld [vmem:[%s1 + $0xa40] sm:$0xf]
    %v692 = vld [vmem:[%s1 + $0xa44] sm:$0xf]
    %v693 = vld [vmem:[%s1 + $0xa48] sm:$0xf]
    %v694 = vld [vmem:[%s1 + $0xa4c] sm:$0xf]
    %v695 = vld [vmem:[%s1 + $0xa50] sm:$0xf]
    %v696 = vld [vmem:[%s1 + $0xa54] sm:$0xf]
    %v697 = vld [vmem:[%s1 + $0xa58] sm:$0xf]
    %v698 = vld [vmem:[%s1 + $0xa5c] sm:$0xf]
    %v699 = vld [vmem:[%s1 + $0xa60] sm:$0xf]
    %v700 = vld [vmem:[%s1 + $0xa64] sm:$0xf]
    %v701 = vld [vmem:[%s1 + $0xa68] sm:$0xf]
    %v702 = vld [vmem:[%s1 + $0xa6c] sm:$0xf]
    %v703 = vld [vmem:[%s1 + $0xa70] sm:$0xf]
    %v704 = vld [vmem:[%s1 + $0xa74] sm:$0xf]
    %v705 = vld [vmem:[%s1 + $0xa78] sm:$0xf]
    %v706 = vld [vmem:[%s1 + $0xa7c] sm:$0xf]
    %v707 = vld [vmem:[%s1 + $0xa80] sm:$0xf]
    %v708 = vld [vmem:[%s1 + $0xa84] sm:$0xf]
    %v709 = vld [vmem:[%s1 + $0xa88] sm:$0xf]
    %v710 = vld [vmem:[%s1 + $0xa8c] sm:$0xf]
    %v711 = vld [vmem:[%s1 + $0xa90] sm:$0xf]
    %v712 = vld [vmem:[%s1 + $0xa94] sm:$0xf]
    %v713 = vld [vmem:[%s1 + $0xa98] sm:$0xf]
    %v714 = vld [vmem:[%s1 + $0xa9c] sm:$0xf]
    %v715 = vld [vmem:[%s1 + $0xaa0] sm:$0xf]
    %v716 = vld [vmem:[%s1 + $0xaa4] sm:$0xf]
    %v717 = vld [vmem:[%s1 + $0xaa8] sm:$0xf]
    %v718 = vld [vmem:[%s1 + $0xaac] sm:$0xf]
    %v719 = vld [vmem:[%s1 + $0xab0] sm:$0xf]
    %v720 = vld [vmem:[%s1 + $0xab4] sm:$0xf]
    %v721 = vld [vmem:[%s1 + $0xab8] sm:$0xf]
    %v722 = vld [vmem:[%s1 + $0xabc] sm:$0xf]
    %v723 = vld [vmem:[%s1 + $0xac0] sm:$0xf]
    %v724 = vld [vmem:[%s1 + $0xac4] sm:$0xf]
    %v725 = vld [vmem:[%s1 + $0xac8] sm:$0xf]
    %v726 = vld [vmem:[%s1 + $0xacc] sm:$0xf]
    %v727 = vld [vmem:[%s1 + $0xad0] sm:$0xf]
    %v728 = vld [vmem:[%s1 + $0xad4] sm:$0xf]
    %v729 = vld [vmem:[%s1 + $0xad8] sm:$0xf]
    %v730 = vld [vmem:[%s1 + $0xadc] sm:$0xf]
    %v731 = vld [vmem:[%s1 + $0xae0] sm:$0xf]
    %v732 = vld [vmem:[%s1 + $0xae4] sm:$0xf]
    %v733 = vld [vmem:[%s1 + $0xae8] sm:$0xf]
    %v734 = vld [vmem:[%s1 + $0xaec] sm:$0xf]
    %v735 = vld [vmem:[%s1 + $0xaf0] sm:$0xf]
    %v736 = vld [vmem:[%s1 + $0xaf4] sm:$0xf]
    %v737 = vld [vmem:[%s1 + $0xaf8] sm:$0xf]
    %v738 = vld [vmem:[%s1 + $0xafc] sm:$0xf]
    %v739 = vld [vmem:[%s1 + $0xb00] sm:$0xf]
    %v740 = vld [vmem:[%s1 + $0xb04] sm:$0xf]
    %v741 = vld [vmem:[%s1 + $0xb08] sm:$0xf]
    %v742 = vld [vmem:[%s1 + $0xb0c] sm:$0xf]
    %v743 = vld [vmem:[%s1 + $0xb10] sm:$0xf]
    %v744 = vld [vmem:[%s1 + $0xb14] sm:$0xf]
    %v745 = vld [vmem:[%s1 + $0xb18] sm:$0xf]
    %v746 = vld [vmem:[%s1 + $0xb1c] sm:$0xf]
    %v747 = vld [vmem:[%s1 + $0xb20] sm:$0xf]
    %v748 = vld [vmem:[%s1 + $0xb24] sm:$0xf]
    %v749 = vld [vmem:[%s1 + $0xb28] sm:$0xf]
    %v750 = vld [vmem:[%s1 + $0xb2c] sm:$0xf]
    %v751 = vld [vmem:[%s1 + $0xb30] sm:$0xf]
    %v752 = vld [vmem:[%s1 + $0xb34] sm:$0xf]
    %v753 = vld [vmem:[%s1 + $0xb38] sm:$0xf]
    %v754 = vld [vmem:[%s1 + $0xb3c] sm:$0xf]
    %v755 = vld [vmem:[%s1 + $0xb40] sm:$0xf]
    %v756 = vld [vmem:[%s1 + $0xb44] sm:$0xf]
    %v757 = vld [vmem:[%s1 + $0xb48] sm:$0xf]
    %v758 = vld [vmem:[%s1 + $0xb4c] sm:$0xf]
    %v759 = vld [vmem:[%s1 + $0xb50] sm:$0xf]
    %v760 = vld [vmem:[%s1 + $0xb54] sm:$0xf]
    %v761 = vld [vmem:[%s1 + $0xb58] sm:$0xf]
    %v762 = vld [vmem:[%s1 + $0xb5c] sm:$0xf]
    %v763 = vld [vmem:[%s1 + $0xb60] sm:$0xf]
    %v764 = vld [vmem:[%s1 + $0xb64] sm:$0xf]
    %v765 = vld [vmem:[%s1 + $0xb68] sm:$0xf]
    %v766 = vld [vmem:[%s1 + $0xb6c] sm:$0xf]
    %v767 = vld [vmem:[%s1 + $0xb70] sm:$0xf]
    %v768 = vld [vmem:[%s1 + $0xb74] sm:$0xf]
    %v769 = vld [vmem:[%s1 + $0xb78] sm:$0xf]
    %v770 = vld [vmem:[%s1 + $0xb7c] sm:$0xf]
    %v771 = vld [vmem:[%s1 + $0xb80] sm:$0xf]
    %v772 = vld [vmem:[%s1 + $0xb84] sm:$0xf]
    %v773 = vld [vmem:[%s1 + $0xb88] sm:$0xf]
    %v774 = vld [vmem:[%s1 + $0xb8c] sm:$0xf]
    %v775 = vld [vmem:[%s1 + $0xb90] sm:$0xf]
    %v776 = vld [vmem:[%s1 + $0xb94] sm:$0xf]
    %v777 = vld [vmem:[%s1 + $0xb98] sm:$0xf]
    %v778 = vld [vmem:[%s1 + $0xb9c] sm:$0xf]
    %v779 = vld [vmem:[%s1 + $0xba0] sm:$0xf]
    %v780 = vld [vmem:[%s1 + $0xba4] sm:$0xf]
    %v781 = vld [vmem:[%s1 + $0xba8] sm:$0xf]
    %v782 = vld [vmem:[%s1 + $0xbac] sm:$0xf]
    %v783 = vld [vmem:[%s1 + $0xbb0] sm:$0xf]
    %v784 = vld [vmem:[%s1 + $0xbb4] sm:$0xf]
    %v785 = vld [vmem:[%s1 + $0xbb8] sm:$0xf]
    %v786 = vld [vmem:[%s1 + $0xbbc] sm:$0xf]
    %v787 = vld [vmem:[%s1 + $0xbc0] sm:$0xf]
    %v788 = vld [vmem:[%s1 + $0xbc4] sm:$0xf]
    %v789 = vld [vmem:[%s1 + $0xbc8] sm:$0xf]
    %v790 = vld [vmem:[%s1 + $0xbcc] sm:$0xf]
    %v791 = vld [vmem:[%s1 + $0xbd0] sm:$0xf]
    %v792 = vld [vmem:[%s1 + $0xbd4] sm:$0xf]
    %v793 = vld [vmem:[%s1 + $0xbd8] sm:$0xf]
    %v794 = vld [vmem:[%s1 + $0xbdc] sm:$0xf]
    %v795 = vld [vmem:[%s1 + $0xbe0] sm:$0xf]
    %v796 = vld [vmem:[%s1 + $0xbe4] sm:$0xf]
    %v797 = vld [vmem:[%s1 + $0xbe8] sm:$0xf]
    %v798 = vld [vmem:[%s1 + $0xbec] sm:$0xf]
    %v799 = vld [vmem:[%s1 + $0xbf0] sm:$0xf]
    %v800 = vld [vmem:[%s1 + $0xbf4] sm:$0xf]
    %v801 = vld [vmem:[%s1 + $0xbf8] sm:$0xf]
    %v802 = vld [vmem:[%s1 + $0xbfc] sm:$0xf]
    %v803 = vld [vmem:[%s1 + $0xc00] sm:$0xf]
    %v804 = vld [vmem:[%s1 + $0xc04] sm:$0xf]
    %v805 = vld [vmem:[%s1 + $0xc08] sm:$0xf]
    %v806 = vld [vmem:[%s1 + $0xc0c] sm:$0xf]
    %v807 = vld [vmem:[%s1 + $0xc10] sm:$0xf]
    %v808 = vld [vmem:[%s1 + $0xc14] sm:$0xf]
    %v809 = vld [vmem:[%s1 + $0xc18] sm:$0xf]
    %v810 = vld [vmem:[%s1 + $0xc1c] sm:$0xf]
    %v811 = vld [vmem:[%s1 + $0xc20] sm:$0xf]
    %v812 = vld [vmem:[%s1 + $0xc24] sm:$0xf]
    %v813 = vld [vmem:[%s1 + $0xc28] sm:$0xf]
    %v814 = vld [vmem:[%s1 + $0xc2c] sm:$0xf]
    %v815 = vld [vmem:[%s1 + $0xc30] sm:$0xf]
    %v816 = vld [vmem:[%s1 + $0xc34] sm:$0xf]
    %v817 = vld [vmem:[%s1 + $0xc38] sm:$0xf]
    %v818 = vld [vmem:[%s1 + $0xc3c] sm:$0xf]
    %v819 = vld [vmem:[%s2] sm:$0x1]
    %v821 = vlaneseq
    %v822 = vshrl.u32 %v821, 7
    %v823 = vsub.s32 0, %v822
    %v824 = vrot.slane %v819, %v823
    %v833 = vcombine.high %v28, %v28
    %v835 = vunpack.c.l.s4 1966171168
    %v836 = vunpack.c.0.s8 %v835
    %v837 = vlaneseq
    %v838 = vshrl.u32 %v837, 7
    %v839 = vsub.s32 %v836, %v838
    %v840 = vrot.slane %v28, %v839
    %v842 = vunpack.c.l.s4 1966171168
    %v843 = vunpack.c.0.s8 %v842
    %v844 = vlaneseq
    %v845 = vshrl.u32 %v844, 7
    %v846 = vsub.s32 %v843, %v845
    %v847 = vrot.slane %v833, %v846
    %v848 = vcombine.high %v840, %v840
    %v849 = vcombine.high %v847, %v847
    %v851 = vunpack.c.l.s4 1966171168
    %v852 = vunpack.c.0.s8 %v851
    %v853 = vlaneseq
    %v854 = vshrl.u32 %v853, 7
    %v855 = vsub.s32 %v852, %v854
    %v856 = vrot.slane %v840, %v855
    %v858 = vunpack.c.l.s4 1966171168
    %v859 = vunpack.c.0.s8 %v858
    %v860 = vlaneseq
    %v861 = vshrl.u32 %v860, 7
    %v862 = vsub.s32 %v859, %v861
    %v863 = vrot.slane %v847, %v862
    %v865 = vunpack.c.l.s4 1966171168
    %v866 = vunpack.c.0.s8 %v865
    %v867 = vlaneseq
    %v868 = vshrl.u32 %v867, 7
    %v869 = vsub.s32 %v866, %v868
    %v870 = vrot.slane %v848, %v869
    %v872 = vunpack.c.l.s4 1966171168
    %v873 = vunpack.c.0.s8 %v872
    %v874 = vlaneseq
    %v875 = vshrl.u32 %v874, 7
    %v876 = vsub.s32 %v873, %v875
    %v877 = vrot.slane %v849, %v876
    %v878 = vcombine.high %v856, %v856
    %v879 = vcombine.high %v863, %v863
    %v880 = vcombine.high %v870, %v870
    %v881 = vcombine.high %v877, %v877
    %v882 = vcombine.high %v29, %v29
    %v884 = vunpack.c.l.s4 1966171168
    %v885 = vunpack.c.0.s8 %v884
    %v886 = vlaneseq
    %v887 = vshrl.u32 %v886, 7
    %v888 = vsub.s32 %v885, %v887
    %v889 = vrot.slane %v29, %v888
    %v891 = vunpack.c.l.s4 1966171168
    %v892 = vunpack.c.0.s8 %v891
    %v893 = vlaneseq
    %v894 = vshrl.u32 %v893, 7
    %v895 = vsub.s32 %v892, %v894
    %v896 = vrot.slane %v882, %v895
    %v897 = vcombine.high %v889, %v889
    %v898 = vcombine.high %v896, %v896
    %v900 = vunpack.c.l.s4 1966171168
    %v901 = vunpack.c.0.s8 %v900
    %v902 = vlaneseq
    %v903 = vshrl.u32 %v902, 7
    %v904 = vsub.s32 %v901, %v903
    %v905 = vrot.slane %v889, %v904
    %v907 = vunpack.c.l.s4 1966171168
    %v908 = vunpack.c.0.s8 %v907
    %v909 = vlaneseq
    %v910 = vshrl.u32 %v909, 7
    %v911 = vsub.s32 %v908, %v910
    %v912 = vrot.slane %v896, %v911
    %v914 = vunpack.c.l.s4 1966171168
    %v915 = vunpack.c.0.s8 %v914
    %v916 = vlaneseq
    %v917 = vshrl.u32 %v916, 7
    %v918 = vsub.s32 %v915, %v917
    %v919 = vrot.slane %v897, %v918
    %v921 = vunpack.c.l.s4 1966171168
    %v922 = vunpack.c.0.s8 %v921
    %v923 = vlaneseq
    %v924 = vshrl.u32 %v923, 7
    %v925 = vsub.s32 %v922, %v924
    %v926 = vrot.slane %v898, %v925
    %v927 = vcombine.high %v905, %v905
    %v928 = vcombine.high %v912, %v912
    %v929 = vcombine.high %v919, %v919
    %v930 = vcombine.high %v926, %v926
    %v931 = vcombine.high %v30, %v30
    %v933 = vunpack.c.l.s4 1966171168
    %v934 = vunpack.c.0.s8 %v933
    %v935 = vlaneseq
    %v936 = vshrl.u32 %v935, 7
    %v937 = vsub.s32 %v934, %v936
    %v938 = vrot.slane %v30, %v937
    %v940 = vunpack.c.l.s4 1966171168
    %v941 = vunpack.c.0.s8 %v940
    %v942 = vlaneseq
    %v943 = vshrl.u32 %v942, 7
    %v944 = vsub.s32 %v941, %v943
    %v945 = vrot.slane %v931, %v944
    %v946 = vcombine.high %v938, %v938
    %v947 = vcombine.high %v945, %v945
    %v949 = vunpack.c.l.s4 1966171168
    %v950 = vunpack.c.0.s8 %v949
    %v951 = vlaneseq
    %v952 = vshrl.u32 %v951, 7
    %v953 = vsub.s32 %v950, %v952
    %v954 = vrot.slane %v938, %v953
    %v956 = vunpack.c.l.s4 1966171168
    %v957 = vunpack.c.0.s8 %v956
    %v958 = vlaneseq
    %v959 = vshrl.u32 %v958, 7
    %v960 = vsub.s32 %v957, %v959
    %v961 = vrot.slane %v945, %v960
    %v963 = vunpack.c.l.s4 1966171168
    %v964 = vunpack.c.0.s8 %v963
    %v965 = vlaneseq
    %v966 = vshrl.u32 %v965, 7
    %v967 = vsub.s32 %v964, %v966
    %v968 = vrot.slane %v946, %v967
    %v970 = vunpack.c.l.s4 1966171168
    %v971 = vunpack.c.0.s8 %v970
    %v972 = vlaneseq
    %v973 = vshrl.u32 %v972, 7
    %v974 = vsub.s32 %v971, %v973
    %v975 = vrot.slane %v947, %v974
    %v976 = vcombine.high %v954, %v954
    %v977 = vcombine.high %v961, %v961
    %v978 = vcombine.high %v968, %v968
    %v979 = vcombine.high %v975, %v975
    %v980 = vcombine.high %v31, %v31
    %v982 = vunpack.c.l.s4 1966171168
    %v983 = vunpack.c.0.s8 %v982
    %v984 = vlaneseq
    %v985 = vshrl.u32 %v984, 7
    %v986 = vsub.s32 %v983, %v985
    %v987 = vrot.slane %v31, %v986
    %v989 = vunpack.c.l.s4 1966171168
    %v990 = vunpack.c.0.s8 %v989
    %v991 = vlaneseq
    %v992 = vshrl.u32 %v991, 7
    %v993 = vsub.s32 %v990, %v992
    %v994 = vrot.slane %v980, %v993
    %v995 = vcombine.high %v987, %v987
    %v996 = vcombine.high %v994, %v994
    %v998 = vunpack.c.l.s4 1966171168
    %v999 = vunpack.c.0.s8 %v998
    %v1000 = vlaneseq
    %v1001 = vshrl.u32 %v1000, 7
    %v1002 = vsub.s32 %v999, %v1001
    %v1003 = vrot.slane %v987, %v1002
    %v1005 = vunpack.c.l.s4 1966171168
    %v1006 = vunpack.c.0.s8 %v1005
    %v1007 = vlaneseq
    %v1008 = vshrl.u32 %v1007, 7
    %v1009 = vsub.s32 %v1006, %v1008
    %v1010 = vrot.slane %v994, %v1009
    %v1012 = vunpack.c.l.s4 1966171168
    %v1013 = vunpack.c.0.s8 %v1012
    %v1014 = vlaneseq
    %v1015 = vshrl.u32 %v1014, 7
    %v1016 = vsub.s32 %v1013, %v1015
    %v1017 = vrot.slane %v995, %v1016
    %v1019 = vunpack.c.l.s4 1966171168
    %v1020 = vunpack.c.0.s8 %v1019
    %v1021 = vlaneseq
    %v1022 = vshrl.u32 %v1021, 7
    %v1023 = vsub.s32 %v1020, %v1022
    %v1024 = vrot.slane %v996, %v1023
    %v1025 = vcombine.high %v1003, %v1003
    %v1026 = vcombine.high %v1010, %v1010
    %v1027 = vcombine.high %v1017, %v1017
    %v1028 = vcombine.high %v1024, %v1024
    %v1029 = vcombine.high %v32, %v32
    %v1031 = vunpack.c.l.s4 1966171168
    %v1032 = vunpack.c.0.s8 %v1031
    %v1033 = vlaneseq
    %v1034 = vshrl.u32 %v1033, 7
    %v1035 = vsub.s32 %v1032, %v1034
    %v1036 = vrot.slane %v32, %v1035
    %v1038 = vunpack.c.l.s4 1966171168
    %v1039 = vunpack.c.0.s8 %v1038
    %v1040 = vlaneseq
    %v1041 = vshrl.u32 %v1040, 7
    %v1042 = vsub.s32 %v1039, %v1041
    %v1043 = vrot.slane %v1029, %v1042
    %v1044 = vcombine.high %v1036, %v1036
    %v1045 = vcombine.high %v1043, %v1043
    %v1047 = vunpack.c.l.s4 1966171168
    %v1048 = vunpack.c.0.s8 %v1047
    %v1049 = vlaneseq
    %v1050 = vshrl.u32 %v1049, 7
    %v1051 = vsub.s32 %v1048, %v1050
    %v1052 = vrot.slane %v1036, %v1051
    %v1054 = vunpack.c.l.s4 1966171168
    %v1055 = vunpack.c.0.s8 %v1054
    %v1056 = vlaneseq
    %v1057 = vshrl.u32 %v1056, 7
    %v1058 = vsub.s32 %v1055, %v1057
    %v1059 = vrot.slane %v1043, %v1058
    %v1061 = vunpack.c.l.s4 1966171168
    %v1062 = vunpack.c.0.s8 %v1061
    %v1063 = vlaneseq
    %v1064 = vshrl.u32 %v1063, 7
    %v1065 = vsub.s32 %v1062, %v1064
    %v1066 = vrot.slane %v1044, %v1065
    %v1068 = vunpack.c.l.s4 1966171168
    %v1069 = vunpack.c.0.s8 %v1068
    %v1070 = vlaneseq
    %v1071 = vshrl.u32 %v1070, 7
    %v1072 = vsub.s32 %v1069, %v1071
    %v1073 = vrot.slane %v1045, %v1072
    %v1074 = vcombine.high %v1052, %v1052
    %v1075 = vcombine.high %v1059, %v1059
    %v1076 = vcombine.high %v1066, %v1066
    %v1077 = vcombine.high %v1073, %v1073
    %v1078 = vcombine.high %v33, %v33
    %v1080 = vunpack.c.l.s4 1966171168
    %v1081 = vunpack.c.0.s8 %v1080
    %v1082 = vlaneseq
    %v1083 = vshrl.u32 %v1082, 7
    %v1084 = vsub.s32 %v1081, %v1083
    %v1085 = vrot.slane %v33, %v1084
    %v1087 = vunpack.c.l.s4 1966171168
    %v1088 = vunpack.c.0.s8 %v1087
    %v1089 = vlaneseq
    %v1090 = vshrl.u32 %v1089, 7
    %v1091 = vsub.s32 %v1088, %v1090
    %v1092 = vrot.slane %v1078, %v1091
    %v1093 = vcombine.high %v1085, %v1085
    %v1094 = vcombine.high %v1092, %v1092
    %v1096 = vunpack.c.l.s4 1966171168
    %v1097 = vunpack.c.0.s8 %v1096
    %v1098 = vlaneseq
    %v1099 = vshrl.u32 %v1098, 7
    %v1100 = vsub.s32 %v1097, %v1099
    %v1101 = vrot.slane %v1085, %v1100
    %v1103 = vunpack.c.l.s4 1966171168
    %v1104 = vunpack.c.0.s8 %v1103
    %v1105 = vlaneseq
    %v1106 = vshrl.u32 %v1105, 7
    %v1107 = vsub.s32 %v1104, %v1106
    %v1108 = vrot.slane %v1092, %v1107
    %v1110 = vunpack.c.l.s4 1966171168
    %v1111 = vunpack.c.0.s8 %v1110
    %v1112 = vlaneseq
    %v1113 = vshrl.u32 %v1112, 7
    %v1114 = vsub.s32 %v1111, %v1113
    %v1115 = vrot.slane %v1093, %v1114
    %v1117 = vunpack.c.l.s4 1966171168
    %v1118 = vunpack.c.0.s8 %v1117
    %v1119 = vlaneseq
    %v1120 = vshrl.u32 %v1119, 7
    %v1121 = vsub.s32 %v1118, %v1120
    %v1122 = vrot.slane %v1094, %v1121
    %v1123 = vcombine.high %v1101, %v1101
    %v1124 = vcombine.high %v1108, %v1108
    %v1125 = vcombine.high %v1115, %v1115
    %v1126 = vcombine.high %v1122, %v1122
    %v1128 = vunpack.c.l.s4 1966171168
    %v1129 = vunpack.c.0.s8 %v1128
    %v1130 = vlaneseq
    %v1131 = vshrl.u32 %v1130, 7
    %v1132 = vsub.s32 %v1129, %v1131
    %v1133 = vrot.slane %v34, %v1132
    %v1135 = vunpack.c.l.s4 1966171168
    %v1136 = vunpack.c.0.s8 %v1135
    %v1137 = vlaneseq
    %v1138 = vshrl.u32 %v1137, 7
    %v1139 = vsub.s32 %v1136, %v1138
    %v1140 = vrot.slane %v1133, %v1139
    %v1974 = vunpack.c.l.b16 %v35
    %v1975 = vunpack.c.l.b16 %v36
    %v1976 = vunpack.c.l.b16 %v37
    %v1977 = vunpack.c.l.b16 %v38
    %v1978 = vunpack.c.l.b16 %v39
    %v1979 = vunpack.c.l.b16 %v40
    %v1980 = vunpack.c.l.b16 %v41
    %v1981 = vunpack.c.l.b16 %v42
    %v1982 = vunpack.c.l.b16 %v43
    %v1983 = vunpack.c.l.b16 %v44
    %v1984 = vunpack.c.l.b16 %v45
    %v1985 = vunpack.c.l.b16 %v46
    %v1986 = vunpack.c.l.b16 %v47
    %v1987 = vunpack.c.l.b16 %v48
    %v1988 = vunpack.c.l.b16 %v49
    %v1989 = vunpack.c.l.b16 %v50
    %v1990 = vunpack.c.l.b16 %v51
    %v1991 = vunpack.c.l.b16 %v52
    %v1992 = vunpack.c.l.b16 %v53
    %v1993 = vunpack.c.l.b16 %v54
    %v1994 = vunpack.c.l.b16 %v55
    %v1995 = vunpack.c.l.b16 %v56
    %v1996 = vunpack.c.l.b16 %v57
    %v1997 = vunpack.c.l.b16 %v58
    %v1998 = vunpack.c.l.b16 %v59
    %v1999 = vunpack.c.l.b16 %v60
    %v2000 = vunpack.c.l.b16 %v61
    %v2001 = vunpack.c.l.b16 %v62
    %v2002 = vunpack.c.l.b16 %v63
    %v2003 = vunpack.c.l.b16 %v64
    %v2004 = vunpack.c.l.b16 %v65
    %v2005 = vunpack.c.l.b16 %v66
    %v2006 = vunpack.c.l.b16 %v67
    %v2007 = vunpack.c.l.b16 %v68
    %v2008 = vunpack.c.l.b16 %v69
    %v2009 = vunpack.c.l.b16 %v70
    %v2010 = vunpack.c.l.b16 %v71
    %v2011 = vunpack.c.l.b16 %v72
    %v2012 = vunpack.c.l.b16 %v73
    %v2013 = vunpack.c.l.b16 %v74
    %v2014 = vunpack.c.l.b16 %v75
    %v2015 = vunpack.c.l.b16 %v76
    %v2016 = vunpack.c.l.b16 %v77
    %v2017 = vunpack.c.l.b16 %v78
    %v2018 = vunpack.c.l.b16 %v79
    %v2019 = vunpack.c.l.b16 %v80
    %v2020 = vunpack.c.l.b16 %v81
    %v2021 = vunpack.c.l.b16 %v82
    %v2022 = vunpack.c.l.b16 %v83
    %v2023 = vunpack.c.l.b16 %v84
    %v2024 = vunpack.c.l.b16 %v85
    %v2025 = vunpack.c.l.b16 %v86
    %v2026 = vunpack.c.l.b16 %v87
    %v2027 = vunpack.c.l.b16 %v88
    %v2028 = vunpack.c.l.b16 %v89
    %v2029 = vunpack.c.l.b16 %v90
    %v2030 = vunpack.c.l.b16 %v91
    %v2031 = vunpack.c.l.b16 %v92
    %v2032 = vunpack.c.l.b16 %v93
    %v2033 = vunpack.c.l.b16 %v94
    %v2034 = vunpack.c.l.b16 %v95
    %v2035 = vunpack.c.l.b16 %v96
    %v2036 = vunpack.c.l.b16 %v97
    %v2037 = vunpack.c.l.b16 %v98
    %v2038 = vunpack.c.l.b16 %v99
    %v2039 = vunpack.c.l.b16 %v100
    %v2040 = vunpack.c.l.b16 %v101
    %v2041 = vunpack.c.l.b16 %v102
    %v2042 = vunpack.c.l.b16 %v103
    %v2043 = vunpack.c.l.b16 %v104
    %v2044 = vunpack.c.l.b16 %v105
    %v2045 = vunpack.c.l.b16 %v106
    %v2046 = vunpack.c.l.b16 %v107
    %v2047 = vunpack.c.l.b16 %v108
    %v2048 = vunpack.c.l.b16 %v109
    %v2049 = vunpack.c.l.b16 %v110
    %v2050 = vunpack.c.l.b16 %v111
    %v2051 = vunpack.c.l.b16 %v112
    %v2052 = vunpack.c.l.b16 %v113
    %v2053 = vunpack.c.l.b16 %v114
    %v2054 = vunpack.c.l.b16 %v115
    %v2055 = vunpack.c.l.b16 %v116
    %v2056 = vunpack.c.l.b16 %v117
    %v2057 = vunpack.c.l.b16 %v118
    %v2058 = vunpack.c.l.b16 %v119
    %v2059 = vunpack.c.l.b16 %v120
    %v2060 = vunpack.c.l.b16 %v121
    %v2061 = vunpack.c.l.b16 %v122
    %v2062 = vunpack.c.l.b16 %v123
    %v2063 = vunpack.c.l.b16 %v124
    %v2064 = vunpack.c.l.b16 %v125
    %v2065 = vunpack.c.l.b16 %v126
    %v2066 = vunpack.c.l.b16 %v127
    %v2067 = vunpack.c.l.b16 %v128
    %v2068 = vunpack.c.l.b16 %v129
    %v2069 = vunpack.c.l.b16 %v130
    %v2070 = vunpack.c.l.b16 %v131
    %v2071 = vunpack.c.l.b16 %v132
    %v2072 = vunpack.c.l.b16 %v133
    %v2073 = vunpack.c.l.b16 %v134
    %v2074 = vunpack.c.l.b16 %v135
    %v2075 = vunpack.c.l.b16 %v136
    %v2076 = vunpack.c.l.b16 %v137
    %v2077 = vunpack.c.l.b16 %v138
    %v2078 = vunpack.c.l.b16 %v139
    %v2079 = vunpack.c.l.b16 %v140
    %v2080 = vunpack.c.l.b16 %v141
    %v2081 = vunpack.c.l.b16 %v142
    %v2082 = vunpack.c.l.b16 %v143
    %v2083 = vunpack.c.l.b16 %v144
    %v2084 = vunpack.c.l.b16 %v145
    %v2085 = vunpack.c.l.b16 %v146
    %v2086 = vunpack.c.l.b16 %v147
    %v2087 = vunpack.c.l.b16 %v148
    %v2088 = vunpack.c.l.b16 %v149
    %v2089 = vunpack.c.l.b16 %v150
    %v2090 = vunpack.c.l.b16 %v151
    %v2091 = vunpack.c.l.b16 %v152
    %v2092 = vunpack.c.l.b16 %v153
    %v2093 = vunpack.c.l.b16 %v154
    %v2094 = vunpack.c.l.b16 %v155
    %v2095 = vunpack.c.l.b16 %v156
    %v2096 = vunpack.c.l.b16 %v157
    %v2097 = vunpack.c.l.b16 %v158
    %v2098 = vunpack.c.l.b16 %v159
    %v2099 = vunpack.c.l.b16 %v160
    %v2100 = vunpack.c.l.b16 %v161
    %v2101 = vunpack.c.l.b16 %v162
    %v2102 = vunpack.c.l.b16 %v163
    %v2103 = vunpack.c.l.b16 %v164
    %v2104 = vunpack.c.l.b16 %v165
    %v2105 = vunpack.c.l.b16 %v166
    %v2106 = vunpack.c.l.b16 %v167
    %v2107 = vunpack.c.l.b16 %v168
    %v2108 = vunpack.c.l.b16 %v169
    %v2109 = vunpack.c.l.b16 %v170
    %v2110 = vunpack.c.l.b16 %v171
    %v2111 = vunpack.c.l.b16 %v172
    %v2112 = vunpack.c.l.b16 %v173
    %v2113 = vunpack.c.l.b16 %v174
    %v2114 = vunpack.c.l.b16 %v175
    %v2115 = vunpack.c.l.b16 %v176
    %v2116 = vunpack.c.l.b16 %v177
    %v2117 = vunpack.c.l.b16 %v178
    %v2118 = vunpack.c.l.b16 %v179
    %v2119 = vunpack.c.l.b16 %v180
    %v2120 = vunpack.c.l.b16 %v181
    %v2121 = vunpack.c.l.b16 %v182
    %v2122 = vunpack.c.l.b16 %v183
    %v2123 = vunpack.c.l.b16 %v184
    %v2124 = vunpack.c.l.b16 %v185
    %v2125 = vunpack.c.l.b16 %v186
    %v2126 = vunpack.c.l.b16 %v187
    %v2127 = vunpack.c.l.b16 %v188
    %v2128 = vunpack.c.l.b16 %v189
    %v2129 = vunpack.c.l.b16 %v190
    %v2130 = vunpack.c.l.b16 %v191
    %v2131 = vunpack.c.l.b16 %v192
    %v2132 = vunpack.c.l.b16 %v193
    %v2133 = vunpack.c.l.b16 %v194
    %v2134 = vunpack.c.l.b16 %v195
    %v2135 = vunpack.c.l.b16 %v196
    %v2136 = vunpack.c.l.b16 %v197
    %v2137 = vunpack.c.l.b16 %v198
    %v2138 = vunpack.c.l.b16 %v199
    %v2139 = vunpack.c.l.b16 %v200
    %v2140 = vunpack.c.l.b16 %v201
    %v2141 = vunpack.c.l.b16 %v202
    %v2142 = vunpack.c.l.b16 %v203
    %v2143 = vunpack.c.l.b16 %v204
    %v2144 = vunpack.c.l.b16 %v205
    %v2145 = vunpack.c.l.b16 %v206
    %v2146 = vunpack.c.l.b16 %v207
    %v2147 = vunpack.c.l.b16 %v208
    %v2148 = vunpack.c.l.b16 %v209
    %v2149 = vunpack.c.l.b16 %v210
    %v2150 = vunpack.c.l.b16 %v211
    %v2151 = vunpack.c.l.b16 %v212
    %v2152 = vunpack.c.l.b16 %v213
    %v2153 = vunpack.c.l.b16 %v214
    %v2154 = vunpack.c.l.b16 %v215
    %v2155 = vunpack.c.l.b16 %v216
    %v2156 = vunpack.c.l.b16 %v217
    %v2157 = vunpack.c.l.b16 %v218
    %v2158 = vunpack.c.l.b16 %v219
    %v2159 = vunpack.c.l.b16 %v220
    %v2160 = vunpack.c.l.b16 %v221
    %v2161 = vunpack.c.l.b16 %v222
    %v2162 = vunpack.c.l.b16 %v223
    %v2163 = vunpack.c.l.b16 %v224
    %v2164 = vunpack.c.l.b16 %v225
    %v2165 = vunpack.c.l.b16 %v226
    %v2166 = vunpack.c.l.b16 %v227
    %v2167 = vunpack.c.l.b16 %v228
    %v2168 = vunpack.c.l.b16 %v229
    %v2169 = vunpack.c.l.b16 %v230
    %v2170 = vunpack.c.l.b16 %v231
    %v2171 = vunpack.c.l.b16 %v232
    %v2172 = vunpack.c.l.b16 %v233
    %v2173 = vunpack.c.l.b16 %v234
    %v2174 = vunpack.c.l.b16 %v235
    %v2175 = vunpack.c.l.b16 %v236
    %v2176 = vunpack.c.l.b16 %v237
    %v2177 = vunpack.c.l.b16 %v238
    %v2178 = vunpack.c.l.b16 %v239
    %v2179 = vunpack.c.l.b16 %v240
    %v2180 = vunpack.c.l.b16 %v241
    %v2181 = vunpack.c.l.b16 %v242
    %v2182 = vunpack.c.l.b16 %v243
    %v2183 = vunpack.c.l.b16 %v244
    %v2184 = vunpack.c.l.b16 %v245
    %v2185 = vunpack.c.l.b16 %v246
    %v2186 = vunpack.c.l.b16 %v247
    %v2187 = vunpack.c.l.b16 %v248
    %v2188 = vunpack.c.l.b16 %v249
    %v2189 = vunpack.c.l.b16 %v250
    %v2190 = vunpack.c.l.b16 %v251
    %v2191 = vunpack.c.l.b16 %v252
    %v2192 = vunpack.c.l.b16 %v253
    %v2193 = vunpack.c.l.b16 %v254
    %v2194 = vunpack.c.l.b16 %v255
    %v2195 = vunpack.c.l.b16 %v256
    %v2196 = vunpack.c.l.b16 %v257
    %v2197 = vunpack.c.l.b16 %v258
    %v2198 = vunpack.c.l.b16 %v259
    %v2199 = vunpack.c.l.b16 %v260
    %v2200 = vunpack.c.l.b16 %v261
    %v2201 = vunpack.c.l.b16 %v262
    %v2202 = vunpack.c.l.b16 %v263
    %v2203 = vunpack.c.l.b16 %v264
    %v2204 = vunpack.c.l.b16 %v265
    %v2205 = vunpack.c.l.b16 %v266
    %v2206 = vunpack.c.l.b16 %v267
    %v2207 = vunpack.c.l.b16 %v268
    %v2208 = vunpack.c.l.b16 %v269
    %v2209 = vunpack.c.l.b16 %v270
    %v2210 = vunpack.c.l.b16 %v271
    %v2211 = vunpack.c.l.b16 %v272
    %v2212 = vunpack.c.l.b16 %v273
    %v2213 = vunpack.c.l.b16 %v274
    %v2214 = vunpack.c.l.b16 %v275
    %v2215 = vunpack.c.l.b16 %v276
    %v2216 = vunpack.c.l.b16 %v277
    %v2217 = vunpack.c.l.b16 %v278
    %v2218 = vunpack.c.l.b16 %v279
    %v2219 = vunpack.c.l.b16 %v280
    %v2220 = vunpack.c.l.b16 %v281
    %v2221 = vunpack.c.l.b16 %v282
    %v2222 = vunpack.c.l.b16 %v283
    %v2223 = vunpack.c.l.b16 %v284
    %v2224 = vunpack.c.l.b16 %v285
    %v2225 = vunpack.c.l.b16 %v286
    %v2226 = vunpack.c.l.b16 %v287
    %v2227 = vunpack.c.l.b16 %v288
    %v2228 = vunpack.c.l.b16 %v289
    %v2229 = vunpack.c.l.b16 %v290
    %v2230 = vunpack.c.l.b16 %v291
    %v2231 = vunpack.c.l.b16 %v292
    %v2232 = vunpack.c.l.b16 %v293
    %v2233 = vunpack.c.l.b16 %v294
    %v2234 = vunpack.c.l.b16 %v295
    %v2235 = vunpack.c.l.b16 %v296
    %v2236 = vunpack.c.l.b16 %v297
    %v2237 = vunpack.c.l.b16 %v298
    %v2238 = vunpack.c.l.b16 %v299
    %v2239 = vunpack.c.l.b16 %v300
    %v2240 = vunpack.c.l.b16 %v301
    %v2241 = vunpack.c.l.b16 %v302
    %v2242 = vunpack.c.l.b16 %v303
    %v2243 = vunpack.c.l.b16 %v304
    %v2244 = vunpack.c.l.b16 %v305
    %v2245 = vunpack.c.l.b16 %v306
    %v2246 = vunpack.c.l.b16 %v307
    %v2247 = vunpack.c.l.b16 %v308
    %v2248 = vunpack.c.l.b16 %v309
    %v2249 = vunpack.c.l.b16 %v310
    %v2250 = vunpack.c.l.b16 %v311
    %v2251 = vunpack.c.l.b16 %v312
    %v2252 = vunpack.c.l.b16 %v313
    %v2253 = vunpack.c.l.b16 %v314
    %v2254 = vunpack.c.l.b16 %v315
    %v2255 = vunpack.c.l.b16 %v316
    %v2256 = vunpack.c.l.b16 %v317
    %v2257 = vunpack.c.l.b16 %v318
    %v2258 = vunpack.c.l.b16 %v319
    %v2259 = vunpack.c.l.b16 %v320
    %v2260 = vunpack.c.l.b16 %v321
    %v2261 = vunpack.c.l.b16 %v322
    %v2262 = vunpack.c.l.b16 %v323
    %v2263 = vunpack.c.l.b16 %v324
    %v2264 = vunpack.c.l.b16 %v325
    %v2265 = vunpack.c.l.b16 %v326
    %v2266 = vunpack.c.l.b16 %v327
    %v2267 = vunpack.c.l.b16 %v328
    %v2268 = vunpack.c.l.b16 %v329
    %v2269 = vunpack.c.l.b16 %v330
    %v2270 = vunpack.c.l.b16 %v331
    %v2271 = vunpack.c.l.b16 %v332
    %v2272 = vunpack.c.l.b16 %v333
    %v2273 = vunpack.c.l.b16 %v334
    %v2274 = vunpack.c.l.b16 %v335
    %v2275 = vunpack.c.l.b16 %v336
    %v2276 = vunpack.c.l.b16 %v337
    %v2277 = vunpack.c.l.b16 %v338
    %v2278 = vunpack.c.l.b16 %v339
    %v2279 = vunpack.c.l.b16 %v340
    %v2280 = vunpack.c.l.b16 %v341
    %v2281 = vunpack.c.l.b16 %v342
    %v2282 = vunpack.c.l.b16 %v343
    %v2283 = vunpack.c.l.b16 %v344
    %v2284 = vunpack.c.l.b16 %v345
    %v2285 = vunpack.c.l.b16 %v346
    %v2286 = vunpack.c.l.b16 %v347
    %v2287 = vunpack.c.l.b16 %v348
    %v2288 = vunpack.c.l.b16 %v349
    %v2289 = vunpack.c.l.b16 %v350
    %v2290 = vunpack.c.l.b16 %v351
    %v2291 = vunpack.c.l.b16 %v352
    %v2292 = vunpack.c.l.b16 %v353
    %v2293 = vunpack.c.l.b16 %v354
    %v2294 = vunpack.c.l.b16 %v355
    %v2295 = vunpack.c.l.b16 %v356
    %v2296 = vunpack.c.l.b16 %v357
    %v2297 = vunpack.c.l.b16 %v358
    %v2298 = vunpack.c.l.b16 %v359
    %v2299 = vunpack.c.l.b16 %v360
    %v2300 = vunpack.c.l.b16 %v361
    %v2301 = vunpack.c.l.b16 %v362
    %v2302 = vunpack.c.l.b16 %v363
    %v2303 = vunpack.c.l.b16 %v364
    %v2304 = vunpack.c.l.b16 %v365
    %v2305 = vunpack.c.l.b16 %v366
    %v2306 = vunpack.c.l.b16 %v367
    %v2307 = vunpack.c.l.b16 %v368
    %v2308 = vunpack.c.l.b16 %v369
    %v2309 = vunpack.c.l.b16 %v370
    %v2310 = vunpack.c.l.b16 %v371
    %v2311 = vunpack.c.l.b16 %v372
    %v2312 = vunpack.c.l.b16 %v373
    %v2313 = vunpack.c.l.b16 %v374
    %v2314 = vunpack.c.l.b16 %v375
    %v2315 = vunpack.c.l.b16 %v376
    %v2316 = vunpack.c.l.b16 %v377
    %v2317 = vunpack.c.l.b16 %v378
    %v2318 = vunpack.c.l.b16 %v379
    %v2319 = vunpack.c.l.b16 %v380
    %v2320 = vunpack.c.l.b16 %v381
    %v2321 = vunpack.c.l.b16 %v382
    %v2322 = vunpack.c.l.b16 %v383
    %v2323 = vunpack.c.l.b16 %v384
    %v2324 = vunpack.c.l.b16 %v385
    %v2325 = vunpack.c.l.b16 %v386
    %v2326 = vunpack.c.l.b16 %v387
    %v2327 = vunpack.c.l.b16 %v388
    %v2328 = vunpack.c.l.b16 %v389
    %v2329 = vunpack.c.l.b16 %v390
    %v2330 = vunpack.c.l.b16 %v391
    %v2331 = vunpack.c.l.b16 %v392
    %v2332 = vunpack.c.l.b16 %v393
    %v2333 = vunpack.c.l.b16 %v394
    %v2334 = vunpack.c.l.b16 %v395
    %v2335 = vunpack.c.l.b16 %v396
    %v2336 = vunpack.c.l.b16 %v397
    %v2337 = vunpack.c.l.b16 %v398
    %v2338 = vunpack.c.l.b16 %v399
    %v2339 = vunpack.c.l.b16 %v400
    %v2340 = vunpack.c.l.b16 %v401
    %v2341 = vunpack.c.l.b16 %v402
    %v2342 = vunpack.c.l.b16 %v403
    %v2343 = vunpack.c.l.b16 %v404
    %v2344 = vunpack.c.l.b16 %v405
    %v2345 = vunpack.c.l.b16 %v406
    %v2346 = vunpack.c.l.b16 %v407
    %v2347 = vunpack.c.l.b16 %v408
    %v2348 = vunpack.c.l.b16 %v409
    %v2349 = vunpack.c.l.b16 %v410
    %v2350 = vunpack.c.l.b16 %v411
    %v2351 = vunpack.c.l.b16 %v412
    %v2352 = vunpack.c.l.b16 %v413
    %v2353 = vunpack.c.l.b16 %v414
    %v2354 = vunpack.c.l.b16 %v415
    %v2355 = vunpack.c.l.b16 %v416
    %v2356 = vunpack.c.l.b16 %v417
    %v2357 = vunpack.c.l.b16 %v418
    %v2358 = vunpack.c.l.b16 %v419
    %v2359 = vunpack.c.l.b16 %v420
    %v2360 = vunpack.c.l.b16 %v421
    %v2361 = vunpack.c.l.b16 %v422
    %v2362 = vunpack.c.l.b16 %v423
    %v2363 = vunpack.c.l.b16 %v424
    %v2364 = vunpack.c.l.b16 %v425
    %v2365 = vunpack.c.l.b16 %v426
    %v2366 = vunpack.c.l.b16 %v427
    %v2367 = vunpack.c.l.b16 %v428
    %v2368 = vunpack.c.l.b16 %v429
    %v2369 = vunpack.c.l.b16 %v430
    %v2370 = vunpack.c.l.b16 %v431
    %v2371 = vunpack.c.l.b16 %v432
    %v2372 = vunpack.c.l.b16 %v433
    %v2373 = vunpack.c.l.b16 %v434
    %v2374 = vunpack.c.l.b16 %v435
    %v2375 = vunpack.c.l.b16 %v436
    %v2376 = vunpack.c.l.b16 %v437
    %v2377 = vunpack.c.l.b16 %v438
    %v2378 = vunpack.c.l.b16 %v439
    %v2379 = vunpack.c.l.b16 %v440
    %v2380 = vunpack.c.l.b16 %v441
    %v2381 = vunpack.c.l.b16 %v442
    %v2382 = vunpack.c.l.b16 %v443
    %v2383 = vunpack.c.l.b16 %v444
    %v2384 = vunpack.c.l.b16 %v445
    %v2385 = vunpack.c.l.b16 %v446
    %v2386 = vunpack.c.l.b16 %v447
    %v2387 = vunpack.c.l.b16 %v448
    %v2388 = vunpack.c.l.b16 %v449
    %v2389 = vunpack.c.l.b16 %v450
    %v2390 = vunpack.c.l.b16 %v451
    %v2391 = vunpack.c.l.b16 %v452
    %v2392 = vunpack.c.l.b16 %v453
    %v2393 = vunpack.c.l.b16 %v454
    %v2394 = vunpack.c.l.b16 %v455
    %v2395 = vunpack.c.l.b16 %v456
    %v2396 = vunpack.c.l.b16 %v457
    %v2397 = vunpack.c.l.b16 %v458
    %v2398 = vunpack.c.l.b16 %v459
    %v2399 = vunpack.c.l.b16 %v460
    %v2400 = vunpack.c.l.b16 %v461
    %v2401 = vunpack.c.l.b16 %v462
    %v2402 = vunpack.c.l.b16 %v463
    %v2403 = vunpack.c.l.b16 %v464
    %v2404 = vunpack.c.l.b16 %v465
    %v2405 = vunpack.c.l.b16 %v466
    %v2406 = vunpack.c.l.b16 %v467
    %v2407 = vunpack.c.l.b16 %v468
    %v2408 = vunpack.c.l.b16 %v469
    %v2409 = vunpack.c.l.b16 %v470
    %v2410 = vunpack.c.l.b16 %v471
    %v2411 = vunpack.c.l.b16 %v472
    %v2412 = vunpack.c.l.b16 %v473
    %v2413 = vunpack.c.l.b16 %v474
    %v2414 = vunpack.c.l.b16 %v475
    %v2415 = vunpack.c.l.b16 %v476
    %v2416 = vunpack.c.l.b16 %v477
    %v2417 = vunpack.c.l.b16 %v478
    %v2418 = vunpack.c.l.b16 %v479
    %v2419 = vunpack.c.l.b16 %v480
    %v2420 = vunpack.c.l.b16 %v481
    %v2421 = vunpack.c.l.b16 %v482
    %v2422 = vunpack.c.l.b16 %v483
    %v2423 = vunpack.c.l.b16 %v484
    %v2424 = vunpack.c.l.b16 %v485
    %v2425 = vunpack.c.l.b16 %v486
    %v2426 = vunpack.c.l.b16 %v487
    %v2427 = vunpack.c.l.b16 %v488
    %v2428 = vunpack.c.l.b16 %v489
    %v2429 = vunpack.c.l.b16 %v490
    %v2430 = vunpack.c.l.b16 %v491
    %v2431 = vunpack.c.l.b16 %v492
    %v2432 = vunpack.c.l.b16 %v493
    %v2433 = vunpack.c.l.b16 %v494
    %v2434 = vunpack.c.l.b16 %v495
    %v2435 = vunpack.c.l.b16 %v496
    %v2436 = vunpack.c.l.b16 %v497
    %v2437 = vunpack.c.l.b16 %v498
    %v2438 = vunpack.c.l.b16 %v499
    %v2439 = vunpack.c.l.b16 %v500
    %v2440 = vunpack.c.l.b16 %v501
    %v2441 = vunpack.c.l.b16 %v502
    %v2442 = vunpack.c.l.b16 %v503
    %v2443 = vunpack.c.l.b16 %v504
    %v2444 = vunpack.c.l.b16 %v505
    %v2445 = vunpack.c.l.b16 %v506
    %v2446 = vunpack.c.l.b16 %v507
    %v2447 = vunpack.c.l.b16 %v508
    %v2448 = vunpack.c.l.b16 %v509
    %v2449 = vunpack.c.l.b16 %v510
    %v2450 = vunpack.c.l.b16 %v511
    %v2451 = vunpack.c.l.b16 %v512
    %v2452 = vunpack.c.l.b16 %v513
    %v2453 = vunpack.c.l.b16 %v514
    %v2454 = vunpack.c.l.b16 %v515
    %v2455 = vunpack.c.l.b16 %v516
    %v2456 = vunpack.c.l.b16 %v517
    %v2457 = vunpack.c.l.b16 %v518
    %v2458 = vunpack.c.l.b16 %v519
    %v2459 = vunpack.c.l.b16 %v520
    %v2460 = vunpack.c.l.b16 %v521
    %v2461 = vunpack.c.l.b16 %v522
    %v2462 = vunpack.c.l.b16 %v523
    %v2463 = vunpack.c.l.b16 %v524
    %v2464 = vunpack.c.l.b16 %v525
    %v2465 = vunpack.c.l.b16 %v526
    %v2466 = vunpack.c.l.b16 %v527
    %v2467 = vunpack.c.l.b16 %v528
    %v2468 = vunpack.c.l.b16 %v529
    %v2469 = vunpack.c.l.b16 %v530
    %v2470 = vunpack.c.l.b16 %v531
    %v2471 = vunpack.c.l.b16 %v532
    %v2472 = vunpack.c.l.b16 %v533
    %v2473 = vunpack.c.l.b16 %v534
    %v2474 = vunpack.c.l.b16 %v535
    %v2475 = vunpack.c.l.b16 %v536
    %v2476 = vunpack.c.l.b16 %v537
    %v2477 = vunpack.c.l.b16 %v538
    %v2478 = vunpack.c.l.b16 %v539
    %v2479 = vunpack.c.l.b16 %v540
    %v2480 = vunpack.c.l.b16 %v541
    %v2481 = vunpack.c.l.b16 %v542
    %v2482 = vunpack.c.l.b16 %v543
    %v2483 = vunpack.c.l.b16 %v544
    %v2484 = vunpack.c.l.b16 %v545
    %v2485 = vunpack.c.l.b16 %v546
    %v2486 = vunpack.c.l.b16 %v547
    %v2487 = vunpack.c.l.b16 %v548
    %v2488 = vunpack.c.l.b16 %v549
    %v2489 = vunpack.c.l.b16 %v550
    %v2490 = vunpack.c.l.b16 %v551
    %v2491 = vunpack.c.l.b16 %v552
    %v2492 = vunpack.c.l.b16 %v553
    %v2493 = vunpack.c.l.b16 %v554
    %v2494 = vunpack.c.l.b16 %v555
    %v2495 = vunpack.c.l.b16 %v556
    %v2496 = vunpack.c.l.b16 %v557
    %v2497 = vunpack.c.l.b16 %v558
    %v2498 = vunpack.c.l.b16 %v559
    %v2499 = vunpack.c.l.b16 %v560
    %v2500 = vunpack.c.l.b16 %v561
    %v2501 = vunpack.c.l.b16 %v562
    %v2502 = vunpack.c.l.b16 %v563
    %v2503 = vunpack.c.l.b16 %v564
    %v2504 = vunpack.c.l.b16 %v565
    %v2505 = vunpack.c.l.b16 %v566
    %v2506 = vunpack.c.l.b16 %v567
    %v2507 = vunpack.c.l.b16 %v568
    %v2508 = vunpack.c.l.b16 %v569
    %v2509 = vunpack.c.l.b16 %v570
    %v2510 = vunpack.c.l.b16 %v571
    %v2511 = vunpack.c.l.b16 %v572
    %v2512 = vunpack.c.l.b16 %v573
    %v2513 = vunpack.c.l.b16 %v574
    %v2514 = vunpack.c.l.b16 %v575
    %v2515 = vunpack.c.l.b16 %v576
    %v2516 = vunpack.c.l.b16 %v577
    %v2517 = vunpack.c.l.b16 %v578
    %v2518 = vunpack.c.l.b16 %v579
    %v2519 = vunpack.c.l.b16 %v580
    %v2520 = vunpack.c.l.b16 %v581
    %v2521 = vunpack.c.l.b16 %v582
    %v2522 = vunpack.c.l.b16 %v583
    %v2523 = vunpack.c.l.b16 %v584
    %v2524 = vunpack.c.l.b16 %v585
    %v2525 = vunpack.c.l.b16 %v586
    %v2526 = vunpack.c.l.b16 %v587
    %v2527 = vunpack.c.l.b16 %v588
    %v2528 = vunpack.c.l.b16 %v589
    %v2529 = vunpack.c.l.b16 %v590
    %v2530 = vunpack.c.l.b16 %v591
    %v2531 = vunpack.c.l.b16 %v592
    %v2532 = vunpack.c.l.b16 %v593
    %v2533 = vunpack.c.l.b16 %v594
    %v2534 = vunpack.c.l.b16 %v595
    %v2535 = vunpack.c.l.b16 %v596
    %v2536 = vunpack.c.l.b16 %v597
    %v2537 = vunpack.c.l.b16 %v598
    %v2538 = vunpack.c.l.b16 %v599
    %v2539 = vunpack.c.l.b16 %v600
    %v2540 = vunpack.c.l.b16 %v601
    %v2541 = vunpack.c.l.b16 %v602
    %v2542 = vunpack.c.l.b16 %v603
    %v2543 = vunpack.c.l.b16 %v604
    %v2544 = vunpack.c.l.b16 %v605
    %v2545 = vunpack.c.l.b16 %v606
    %v2546 = vunpack.c.l.b16 %v607
    %v2547 = vunpack.c.l.b16 %v608
    %v2548 = vunpack.c.l.b16 %v609
    %v2549 = vunpack.c.l.b16 %v610
    %v2550 = vunpack.c.l.b16 %v611
    %v2551 = vunpack.c.l.b16 %v612
    %v2552 = vunpack.c.l.b16 %v613
    %v2553 = vunpack.c.l.b16 %v614
    %v2554 = vunpack.c.l.b16 %v615
    %v2555 = vunpack.c.l.b16 %v616
    %v2556 = vunpack.c.l.b16 %v617
    %v2557 = vunpack.c.l.b16 %v618
    %v2558 = vunpack.c.l.b16 %v619
    %v2559 = vunpack.c.l.b16 %v620
    %v2560 = vunpack.c.l.b16 %v621
    %v2561 = vunpack.c.l.b16 %v622
    %v2562 = vunpack.c.l.b16 %v623
    %v2563 = vunpack.c.l.b16 %v624
    %v2564 = vunpack.c.l.b16 %v625
    %v2565 = vunpack.c.l.b16 %v626
    %v2566 = vunpack.c.l.b16 %v627
    %v2567 = vunpack.c.l.b16 %v628
    %v2568 = vunpack.c.l.b16 %v629
    %v2569 = vunpack.c.l.b16 %v630
    %v2570 = vunpack.c.l.b16 %v631
    %v2571 = vunpack.c.l.b16 %v632
    %v2572 = vunpack.c.l.b16 %v633
    %v2573 = vunpack.c.l.b16 %v634
    %v2574 = vunpack.c.l.b16 %v635
    %v2575 = vunpack.c.l.b16 %v636
    %v2576 = vunpack.c.l.b16 %v637
    %v2577 = vunpack.c.l.b16 %v638
    %v2578 = vunpack.c.l.b16 %v639
    %v2579 = vunpack.c.l.b16 %v640
    %v2580 = vunpack.c.l.b16 %v641
    %v2581 = vunpack.c.l.b16 %v642
    %v2582 = vunpack.c.l.b16 %v643
    %v2583 = vunpack.c.l.b16 %v644
    %v2584 = vunpack.c.l.b16 %v645
    %v2585 = vunpack.c.l.b16 %v646
    %v2586 = vunpack.c.l.b16 %v647
    %v2587 = vunpack.c.l.b16 %v648
    %v2588 = vunpack.c.l.b16 %v649
    %v2589 = vunpack.c.l.b16 %v650
    %v2590 = vunpack.c.l.b16 %v651
    %v2591 = vunpack.c.l.b16 %v652
    %v2592 = vunpack.c.l.b16 %v653
    %v2593 = vunpack.c.l.b16 %v654
    %v2594 = vunpack.c.l.b16 %v655
    %v2595 = vunpack.c.l.b16 %v656
    %v2596 = vunpack.c.l.b16 %v657
    %v2597 = vunpack.c.l.b16 %v658
    %v2598 = vunpack.c.l.b16 %v659
    %v2599 = vunpack.c.l.b16 %v660
    %v2600 = vunpack.c.l.b16 %v661
    %v2601 = vunpack.c.l.b16 %v662
    %v2602 = vunpack.c.l.b16 %v663
    %v2603 = vunpack.c.l.b16 %v664
    %v2604 = vunpack.c.l.b16 %v665
    %v2605 = vunpack.c.l.b16 %v666
    %v2606 = vunpack.c.l.b16 %v667
    %v2607 = vunpack.c.l.b16 %v668
    %v2608 = vunpack.c.l.b16 %v669
    %v2609 = vunpack.c.l.b16 %v670
    %v2610 = vunpack.c.l.b16 %v671
    %v2611 = vunpack.c.l.b16 %v672
    %v2612 = vunpack.c.l.b16 %v673
    %v2613 = vunpack.c.l.b16 %v674
    %v2614 = vunpack.c.l.b16 %v675
    %v2615 = vunpack.c.l.b16 %v676
    %v2616 = vunpack.c.l.b16 %v677
    %v2617 = vunpack.c.l.b16 %v678
    %v2618 = vunpack.c.l.b16 %v679
    %v2619 = vunpack.c.l.b16 %v680
    %v2620 = vunpack.c.l.b16 %v681
    %v2621 = vunpack.c.l.b16 %v682
    %v2622 = vunpack.c.l.b16 %v683
    %v2623 = vunpack.c.l.b16 %v684
    %v2624 = vunpack.c.l.b16 %v685
    %v2625 = vunpack.c.l.b16 %v686
    %v2626 = vunpack.c.l.b16 %v687
    %v2627 = vunpack.c.l.b16 %v688
    %v2628 = vunpack.c.l.b16 %v689
    %v2629 = vunpack.c.l.b16 %v690
    %v2630 = vunpack.c.l.b16 %v691
    %v2631 = vunpack.c.l.b16 %v692
    %v2632 = vunpack.c.l.b16 %v693
    %v2633 = vunpack.c.l.b16 %v694
    %v2634 = vunpack.c.l.b16 %v695
    %v2635 = vunpack.c.l.b16 %v696
    %v2636 = vunpack.c.l.b16 %v697
    %v2637 = vunpack.c.l.b16 %v698
    %v2638 = vunpack.c.l.b16 %v699
    %v2639 = vunpack.c.l.b16 %v700
    %v2640 = vunpack.c.l.b16 %v701
    %v2641 = vunpack.c.l.b16 %v702
    %v2642 = vunpack.c.l.b16 %v703
    %v2643 = vunpack.c.l.b16 %v704
    %v2644 = vunpack.c.l.b16 %v705
    %v2645 = vunpack.c.l.b16 %v706
    %v2646 = vunpack.c.l.b16 %v707
    %v2647 = vunpack.c.l.b16 %v708
    %v2648 = vunpack.c.l.b16 %v709
    %v2649 = vunpack.c.l.b16 %v710
    %v2650 = vunpack.c.l.b16 %v711
    %v2651 = vunpack.c.l.b16 %v712
    %v2652 = vunpack.c.l.b16 %v713
    %v2653 = vunpack.c.l.b16 %v714
    %v2654 = vunpack.c.l.b16 %v715
    %v2655 = vunpack.c.l.b16 %v716
    %v2656 = vunpack.c.l.b16 %v717
    %v2657 = vunpack.c.l.b16 %v718
    %v2658 = vunpack.c.l.b16 %v719
    %v2659 = vunpack.c.l.b16 %v720
    %v2660 = vunpack.c.l.b16 %v721
    %v2661 = vunpack.c.l.b16 %v722
    %v2662 = vunpack.c.l.b16 %v723
    %v2663 = vunpack.c.l.b16 %v724
    %v2664 = vunpack.c.l.b16 %v725
    %v2665 = vunpack.c.l.b16 %v726
    %v2666 = vunpack.c.l.b16 %v727
    %v2667 = vunpack.c.l.b16 %v728
    %v2668 = vunpack.c.l.b16 %v729
    %v2669 = vunpack.c.l.b16 %v730
    %v2670 = vunpack.c.l.b16 %v731
    %v2671 = vunpack.c.l.b16 %v732
    %v2672 = vunpack.c.l.b16 %v733
    %v2673 = vunpack.c.l.b16 %v734
    %v2674 = vunpack.c.l.b16 %v735
    %v2675 = vunpack.c.l.b16 %v736
    %v2676 = vunpack.c.l.b16 %v737
    %v2677 = vunpack.c.l.b16 %v738
    %v2678 = vunpack.c.l.b16 %v739
    %v2679 = vunpack.c.l.b16 %v740
    %v2680 = vunpack.c.l.b16 %v741
    %v2681 = vunpack.c.l.b16 %v742
    %v2682 = vunpack.c.l.b16 %v743
    %v2683 = vunpack.c.l.b16 %v744
    %v2684 = vunpack.c.l.b16 %v745
    %v2685 = vunpack.c.l.b16 %v746
    %v2686 = vunpack.c.l.b16 %v747
    %v2687 = vunpack.c.l.b16 %v748
    %v2688 = vunpack.c.l.b16 %v749
    %v2689 = vunpack.c.l.b16 %v750
    %v2690 = vunpack.c.l.b16 %v751
    %v2691 = vunpack.c.l.b16 %v752
    %v2692 = vunpack.c.l.b16 %v753
    %v2693 = vunpack.c.l.b16 %v754
    %v2694 = vunpack.c.l.b16 %v755
    %v2695 = vunpack.c.l.b16 %v756
    %v2696 = vunpack.c.l.b16 %v757
    %v2697 = vunpack.c.l.b16 %v758
    %v2698 = vunpack.c.l.b16 %v759
    %v2699 = vunpack.c.l.b16 %v760
    %v2700 = vunpack.c.l.b16 %v761
    %v2701 = vunpack.c.l.b16 %v762
    %v2702 = vunpack.c.l.b16 %v763
    %v2703 = vunpack.c.l.b16 %v764
    %v2704 = vunpack.c.l.b16 %v765
    %v2705 = vunpack.c.l.b16 %v766
    %v2706 = vunpack.c.l.b16 %v767
    %v2707 = vunpack.c.l.b16 %v768
    %v2708 = vunpack.c.l.b16 %v769
    %v2709 = vunpack.c.l.b16 %v770
    %v2710 = vunpack.c.l.b16 %v771
    %v2711 = vunpack.c.l.b16 %v772
    %v2712 = vunpack.c.l.b16 %v773
    %v2713 = vunpack.c.l.b16 %v774
    %v2714 = vunpack.c.l.b16 %v775
    %v2715 = vunpack.c.l.b16 %v776
    %v2716 = vunpack.c.l.b16 %v777
    %v2717 = vunpack.c.l.b16 %v778
    %v2718 = vunpack.c.l.b16 %v779
    %v2719 = vunpack.c.l.b16 %v780
    %v2720 = vunpack.c.l.b16 %v781
    %v2721 = vunpack.c.l.b16 %v782
    %v2722 = vunpack.c.l.b16 %v783
    %v2723 = vunpack.c.l.b16 %v784
    %v2724 = vunpack.c.l.b16 %v785
    %v2725 = vunpack.c.l.b16 %v786
    %v2726 = vunpack.c.l.b16 %v787
    %v2727 = vunpack.c.l.b16 %v788
    %v2728 = vunpack.c.l.b16 %v789
    %v2729 = vunpack.c.l.b16 %v790
    %v2730 = vunpack.c.l.b16 %v791
    %v2731 = vunpack.c.l.b16 %v792
    %v2732 = vunpack.c.l.b16 %v793
    %v2733 = vunpack.c.l.b16 %v794
    %v2734 = vunpack.c.l.b16 %v795
    %v2735 = vunpack.c.l.b16 %v796
    %v2736 = vunpack.c.l.b16 %v797
    %v2737 = vunpack.c.l.b16 %v798
    %v2738 = vunpack.c.l.b16 %v799
    %v2739 = vunpack.c.l.b16 %v800
    %v2740 = vunpack.c.l.b16 %v801
    %v2741 = vunpack.c.l.b16 %v802
    %v2742 = vunpack.c.l.b16 %v803
    %v2743 = vunpack.c.l.b16 %v804
    %v2744 = vunpack.c.l.b16 %v805
    %v2745 = vunpack.c.l.b16 %v806
    %v2746 = vunpack.c.l.b16 %v807
    %v2747 = vunpack.c.l.b16 %v808
    %v2748 = vunpack.c.l.b16 %v809
    %v2749 = vunpack.c.l.b16 %v810
    %v2750 = vunpack.c.l.b16 %v811
    %v2751 = vunpack.c.l.b16 %v812
    %v2752 = vunpack.c.l.b16 %v813
    %v2753 = vunpack.c.l.b16 %v814
    %v2754 = vunpack.c.l.b16 %v815
    %v2755 = vunpack.c.l.b16 %v816
    %v2756 = vunpack.c.l.b16 %v817
    %v2757 = vunpack.c.l.b16 %v818
    %v2758 = vpack.c.b16 %v1975, %v1974
    %v2759 = vpack.c.b16 %v1977, %v1976
    %v2760 = vpack.c.b16 %v1979, %v1978
    %v2761 = vpack.c.b16 %v1981, %v1980
    %v2762 = vpack.c.b16 %v1983, %v1982
    %v2763 = vpack.c.b16 %v1985, %v1984
    %v2764 = vpack.c.b16 %v1987, %v1986
    %v2765 = vpack.c.b16 %v1989, %v1988
    %v2766 = vpack.c.b16 %v1991, %v1990
    %v2767 = vpack.c.b16 %v1993, %v1992
    %v2768 = vpack.c.b16 %v1995, %v1994
    %v2769 = vpack.c.b16 %v1997, %v1996
    %v2770 = vpack.c.b16 %v1999, %v1998
    %v2771 = vpack.c.b16 %v2001, %v2000
    %v2772 = vpack.c.b16 %v2003, %v2002
    %v2773 = vpack.c.b16 %v2005, %v2004
    %v2774 = vpack.c.b16 %v2007, %v2006
    %v2775 = vpack.c.b16 %v2009, %v2008
    %v2776 = vpack.c.b16 %v2011, %v2010
    %v2777 = vpack.c.b16 %v2013, %v2012
    %v2778 = vpack.c.b16 %v2015, %v2014
    %v2779 = vpack.c.b16 %v2017, %v2016
    %v2780 = vpack.c.b16 %v2019, %v2018
    %v2781 = vpack.c.b16 %v2021, %v2020
    %v2782 = vpack.c.b16 %v2023, %v2022
    %v2783 = vpack.c.b16 %v2025, %v2024
    %v2784 = vpack.c.b16 %v2027, %v2026
    %v2785 = vpack.c.b16 %v2029, %v2028
    %v2786 = vpack.c.b16 %v2031, %v2030
    %v2787 = vpack.c.b16 %v2033, %v2032
    %v2788 = vpack.c.b16 %v2035, %v2034
    %v2789 = vpack.c.b16 %v2037, %v2036
    %v2790 = vpack.c.b16 %v2039, %v2038
    %v2791 = vpack.c.b16 %v2041, %v2040
    %v2792 = vpack.c.b16 %v2043, %v2042
    %v2793 = vpack.c.b16 %v2045, %v2044
    %v2794 = vpack.c.b16 %v2047, %v2046
    %v2795 = vpack.c.b16 %v2049, %v2048
    %v2796 = vpack.c.b16 %v2051, %v2050
    %v2797 = vpack.c.b16 %v2053, %v2052
    %v2798 = vpack.c.b16 %v2055, %v2054
    %v2799 = vpack.c.b16 %v2057, %v2056
    %v2800 = vpack.c.b16 %v2059, %v2058
    %v2801 = vpack.c.b16 %v2061, %v2060
    %v2802 = vpack.c.b16 %v2063, %v2062
    %v2803 = vpack.c.b16 %v2065, %v2064
    %v2804 = vpack.c.b16 %v2067, %v2066
    %v2805 = vpack.c.b16 %v2069, %v2068
    %v2806 = vpack.c.b16 %v2071, %v2070
    %v2807 = vpack.c.b16 %v2073, %v2072
    %v2808 = vpack.c.b16 %v2075, %v2074
    %v2809 = vpack.c.b16 %v2077, %v2076
    %v2810 = vpack.c.b16 %v2079, %v2078
    %v2811 = vpack.c.b16 %v2081, %v2080
    %v2812 = vpack.c.b16 %v2083, %v2082
    %v2813 = vpack.c.b16 %v2085, %v2084
    %v2814 = vpack.c.b16 %v2087, %v2086
    %v2815 = vpack.c.b16 %v2089, %v2088
    %v2816 = vpack.c.b16 %v2091, %v2090
    %v2817 = vpack.c.b16 %v2093, %v2092
    %v2818 = vpack.c.b16 %v2095, %v2094
    %v2819 = vpack.c.b16 %v2097, %v2096
    %v2820 = vpack.c.b16 %v2099, %v2098
    %v2821 = vpack.c.b16 %v2101, %v2100
    %v2822 = vpack.c.b16 %v2103, %v2102
    %v2823 = vpack.c.b16 %v2105, %v2104
    %v2824 = vpack.c.b16 %v2107, %v2106
    %v2825 = vpack.c.b16 %v2109, %v2108
    %v2826 = vpack.c.b16 %v2111, %v2110
    %v2827 = vpack.c.b16 %v2113, %v2112
    %v2828 = vpack.c.b16 %v2115, %v2114
    %v2829 = vpack.c.b16 %v2117, %v2116
    %v2830 = vpack.c.b16 %v2119, %v2118
    %v2831 = vpack.c.b16 %v2121, %v2120
    %v2832 = vpack.c.b16 %v2123, %v2122
    %v2833 = vpack.c.b16 %v2125, %v2124
    %v2834 = vpack.c.b16 %v2127, %v2126
    %v2835 = vpack.c.b16 %v2129, %v2128
    %v2836 = vpack.c.b16 %v2131, %v2130
    %v2837 = vpack.c.b16 %v2133, %v2132
    %v2838 = vpack.c.b16 %v2135, %v2134
    %v2839 = vpack.c.b16 %v2137, %v2136
    %v2840 = vpack.c.b16 %v2139, %v2138
    %v2841 = vpack.c.b16 %v2141, %v2140
    %v2842 = vpack.c.b16 %v2143, %v2142
    %v2843 = vpack.c.b16 %v2145, %v2144
    %v2844 = vpack.c.b16 %v2147, %v2146
    %v2845 = vpack.c.b16 %v2149, %v2148
    %v2846 = vpack.c.b16 %v2151, %v2150
    %v2847 = vpack.c.b16 %v2153, %v2152
    %v2848 = vpack.c.b16 %v2155, %v2154
    %v2849 = vpack.c.b16 %v2157, %v2156
    %v2850 = vpack.c.b16 %v2159, %v2158
    %v2851 = vpack.c.b16 %v2161, %v2160
    %v2852 = vpack.c.b16 %v2163, %v2162
    %v2853 = vpack.c.b16 %v2165, %v2164
    %v2854 = vpack.c.b16 %v2167, %v2166
    %v2855 = vpack.c.b16 %v2169, %v2168
    %v2856 = vpack.c.b16 %v2171, %v2170
    %v2857 = vpack.c.b16 %v2173, %v2172
    %v2858 = vpack.c.b16 %v2175, %v2174
    %v2859 = vpack.c.b16 %v2177, %v2176
    %v2860 = vpack.c.b16 %v2179, %v2178
    %v2861 = vpack.c.b16 %v2181, %v2180
    %v2862 = vpack.c.b16 %v2183, %v2182
    %v2863 = vpack.c.b16 %v2185, %v2184
    %v2864 = vpack.c.b16 %v2187, %v2186
    %v2865 = vpack.c.b16 %v2189, %v2188
    %v2866 = vpack.c.b16 %v2191, %v2190
    %v2867 = vpack.c.b16 %v2193, %v2192
    %v2868 = vpack.c.b16 %v2195, %v2194
    %v2869 = vpack.c.b16 %v2197, %v2196
    %v2870 = vpack.c.b16 %v2199, %v2198
    %v2871 = vpack.c.b16 %v2201, %v2200
    %v2872 = vpack.c.b16 %v2203, %v2202
    %v2873 = vpack.c.b16 %v2205, %v2204
    %v2874 = vpack.c.b16 %v2207, %v2206
    %v2875 = vpack.c.b16 %v2209, %v2208
    %v2876 = vpack.c.b16 %v2211, %v2210
    %v2877 = vpack.c.b16 %v2213, %v2212
    %v2878 = vpack.c.b16 %v2215, %v2214
    %v2879 = vpack.c.b16 %v2217, %v2216
    %v2880 = vpack.c.b16 %v2219, %v2218
    %v2881 = vpack.c.b16 %v2221, %v2220
    %v2882 = vpack.c.b16 %v2223, %v2222
    %v2883 = vpack.c.b16 %v2225, %v2224
    %v2884 = vpack.c.b16 %v2227, %v2226
    %v2885 = vpack.c.b16 %v2229, %v2228
    %v2886 = vpack.c.b16 %v2231, %v2230
    %v2887 = vpack.c.b16 %v2233, %v2232
    %v2888 = vpack.c.b16 %v2235, %v2234
    %v2889 = vpack.c.b16 %v2237, %v2236
    %v2890 = vpack.c.b16 %v2239, %v2238
    %v2891 = vpack.c.b16 %v2241, %v2240
    %v2892 = vpack.c.b16 %v2243, %v2242
    %v2893 = vpack.c.b16 %v2245, %v2244
    %v2894 = vpack.c.b16 %v2247, %v2246
    %v2895 = vpack.c.b16 %v2249, %v2248
    %v2896 = vpack.c.b16 %v2251, %v2250
    %v2897 = vpack.c.b16 %v2253, %v2252
    %v2898 = vpack.c.b16 %v2255, %v2254
    %v2899 = vpack.c.b16 %v2257, %v2256
    %v2900 = vpack.c.b16 %v2259, %v2258
    %v2901 = vpack.c.b16 %v2261, %v2260
    %v2902 = vpack.c.b16 %v2263, %v2262
    %v2903 = vpack.c.b16 %v2265, %v2264
    %v2904 = vpack.c.b16 %v2267, %v2266
    %v2905 = vpack.c.b16 %v2269, %v2268
    %v2906 = vpack.c.b16 %v2271, %v2270
    %v2907 = vpack.c.b16 %v2273, %v2272
    %v2908 = vpack.c.b16 %v2275, %v2274
    %v2909 = vpack.c.b16 %v2277, %v2276
    %v2910 = vpack.c.b16 %v2279, %v2278
    %v2911 = vpack.c.b16 %v2281, %v2280
    %v2912 = vpack.c.b16 %v2283, %v2282
    %v2913 = vpack.c.b16 %v2285, %v2284
    %v2914 = vpack.c.b16 %v2287, %v2286
    %v2915 = vpack.c.b16 %v2289, %v2288
    %v2916 = vpack.c.b16 %v2291, %v2290
    %v2917 = vpack.c.b16 %v2293, %v2292
    %v2918 = vpack.c.b16 %v2295, %v2294
    %v2919 = vpack.c.b16 %v2297, %v2296
    %v2920 = vpack.c.b16 %v2299, %v2298
    %v2921 = vpack.c.b16 %v2301, %v2300
    %v2922 = vpack.c.b16 %v2303, %v2302
    %v2923 = vpack.c.b16 %v2305, %v2304
    %v2924 = vpack.c.b16 %v2307, %v2306
    %v2925 = vpack.c.b16 %v2309, %v2308
    %v2926 = vpack.c.b16 %v2311, %v2310
    %v2927 = vpack.c.b16 %v2313, %v2312
    %v2928 = vpack.c.b16 %v2315, %v2314
    %v2929 = vpack.c.b16 %v2317, %v2316
    %v2930 = vpack.c.b16 %v2319, %v2318
    %v2931 = vpack.c.b16 %v2321, %v2320
    %v2932 = vpack.c.b16 %v2323, %v2322
    %v2933 = vpack.c.b16 %v2325, %v2324
    %v2934 = vpack.c.b16 %v2327, %v2326
    %v2935 = vpack.c.b16 %v2329, %v2328
    %v2936 = vpack.c.b16 %v2331, %v2330
    %v2937 = vpack.c.b16 %v2333, %v2332
    %v2938 = vpack.c.b16 %v2335, %v2334
    %v2939 = vpack.c.b16 %v2337, %v2336
    %v2940 = vpack.c.b16 %v2339, %v2338
    %v2941 = vpack.c.b16 %v2341, %v2340
    %v2942 = vpack.c.b16 %v2343, %v2342
    %v2943 = vpack.c.b16 %v2345, %v2344
    %v2944 = vpack.c.b16 %v2347, %v2346
    %v2945 = vpack.c.b16 %v2349, %v2348
    %v2946 = vpack.c.b16 %v2351, %v2350
    %v2947 = vpack.c.b16 %v2353, %v2352
    %v2948 = vpack.c.b16 %v2355, %v2354
    %v2949 = vpack.c.b16 %v2357, %v2356
    %v2950 = vpack.c.b16 %v2359, %v2358
    %v2951 = vpack.c.b16 %v2361, %v2360
    %v2952 = vpack.c.b16 %v2363, %v2362
    %v2953 = vpack.c.b16 %v2365, %v2364
    %v2954 = vpack.c.b16 %v2367, %v2366
    %v2955 = vpack.c.b16 %v2369, %v2368
    %v2956 = vpack.c.b16 %v2371, %v2370
    %v2957 = vpack.c.b16 %v2373, %v2372
    %v2958 = vpack.c.b16 %v2375, %v2374
    %v2959 = vpack.c.b16 %v2377, %v2376
    %v2960 = vpack.c.b16 %v2379, %v2378
    %v2961 = vpack.c.b16 %v2381, %v2380
    %v2962 = vpack.c.b16 %v2383, %v2382
    %v2963 = vpack.c.b16 %v2385, %v2384
    %v2964 = vpack.c.b16 %v2387, %v2386
    %v2965 = vpack.c.b16 %v2389, %v2388
    %v2966 = vpack.c.b16 %v2391, %v2390
    %v2967 = vpack.c.b16 %v2393, %v2392
    %v2968 = vpack.c.b16 %v2395, %v2394
    %v2969 = vpack.c.b16 %v2397, %v2396
    %v2970 = vpack.c.b16 %v2399, %v2398
    %v2971 = vpack.c.b16 %v2401, %v2400
    %v2972 = vpack.c.b16 %v2403, %v2402
    %v2973 = vpack.c.b16 %v2405, %v2404
    %v2974 = vpack.c.b16 %v2407, %v2406
    %v2975 = vpack.c.b16 %v2409, %v2408
    %v2976 = vpack.c.b16 %v2411, %v2410
    %v2977 = vpack.c.b16 %v2413, %v2412
    %v2978 = vpack.c.b16 %v2415, %v2414
    %v2979 = vpack.c.b16 %v2417, %v2416
    %v2980 = vpack.c.b16 %v2419, %v2418
    %v2981 = vpack.c.b16 %v2421, %v2420
    %v2982 = vpack.c.b16 %v2423, %v2422
    %v2983 = vpack.c.b16 %v2425, %v2424
    %v2984 = vpack.c.b16 %v2427, %v2426
    %v2985 = vpack.c.b16 %v2429, %v2428
    %v2986 = vpack.c.b16 %v2431, %v2430
    %v2987 = vpack.c.b16 %v2433, %v2432
    %v2988 = vpack.c.b16 %v2435, %v2434
    %v2989 = vpack.c.b16 %v2437, %v2436
    %v2990 = vpack.c.b16 %v2439, %v2438
    %v2991 = vpack.c.b16 %v2441, %v2440
    %v2992 = vpack.c.b16 %v2443, %v2442
    %v2993 = vpack.c.b16 %v2445, %v2444
    %v2994 = vpack.c.b16 %v2447, %v2446
    %v2995 = vpack.c.b16 %v2449, %v2448
    %v2996 = vpack.c.b16 %v2451, %v2450
    %v2997 = vpack.c.b16 %v2453, %v2452
    %v2998 = vpack.c.b16 %v2455, %v2454
    %v2999 = vpack.c.b16 %v2457, %v2456
    %v3000 = vpack.c.b16 %v2459, %v2458
    %v3001 = vpack.c.b16 %v2461, %v2460
    %v3002 = vpack.c.b16 %v2463, %v2462
    %v3003 = vpack.c.b16 %v2465, %v2464
    %v3004 = vpack.c.b16 %v2467, %v2466
    %v3005 = vpack.c.b16 %v2469, %v2468
    %v3006 = vpack.c.b16 %v2471, %v2470
    %v3007 = vpack.c.b16 %v2473, %v2472
    %v3008 = vpack.c.b16 %v2475, %v2474
    %v3009 = vpack.c.b16 %v2477, %v2476
    %v3010 = vpack.c.b16 %v2479, %v2478
    %v3011 = vpack.c.b16 %v2481, %v2480
    %v3012 = vpack.c.b16 %v2483, %v2482
    %v3013 = vpack.c.b16 %v2485, %v2484
    %v3014 = vpack.c.b16 %v2487, %v2486
    %v3015 = vpack.c.b16 %v2489, %v2488
    %v3016 = vpack.c.b16 %v2491, %v2490
    %v3017 = vpack.c.b16 %v2493, %v2492
    %v3018 = vpack.c.b16 %v2495, %v2494
    %v3019 = vpack.c.b16 %v2497, %v2496
    %v3020 = vpack.c.b16 %v2499, %v2498
    %v3021 = vpack.c.b16 %v2501, %v2500
    %v3022 = vpack.c.b16 %v2503, %v2502
    %v3023 = vpack.c.b16 %v2505, %v2504
    %v3024 = vpack.c.b16 %v2507, %v2506
    %v3025 = vpack.c.b16 %v2509, %v2508
    %v3026 = vpack.c.b16 %v2511, %v2510
    %v3027 = vpack.c.b16 %v2513, %v2512
    %v3028 = vpack.c.b16 %v2515, %v2514
    %v3029 = vpack.c.b16 %v2517, %v2516
    %v3030 = vpack.c.b16 %v2519, %v2518
    %v3031 = vpack.c.b16 %v2521, %v2520
    %v3032 = vpack.c.b16 %v2523, %v2522
    %v3033 = vpack.c.b16 %v2525, %v2524
    %v3034 = vpack.c.b16 %v2527, %v2526
    %v3035 = vpack.c.b16 %v2529, %v2528
    %v3036 = vpack.c.b16 %v2531, %v2530
    %v3037 = vpack.c.b16 %v2533, %v2532
    %v3038 = vpack.c.b16 %v2535, %v2534
    %v3039 = vpack.c.b16 %v2537, %v2536
    %v3040 = vpack.c.b16 %v2539, %v2538
    %v3041 = vpack.c.b16 %v2541, %v2540
    %v3042 = vpack.c.b16 %v2543, %v2542
    %v3043 = vpack.c.b16 %v2545, %v2544
    %v3044 = vpack.c.b16 %v2547, %v2546
    %v3045 = vpack.c.b16 %v2549, %v2548
    %v3046 = vpack.c.b16 %v2551, %v2550
    %v3047 = vpack.c.b16 %v2553, %v2552
    %v3048 = vpack.c.b16 %v2555, %v2554
    %v3049 = vpack.c.b16 %v2557, %v2556
    %v3050 = vpack.c.b16 %v2559, %v2558
    %v3051 = vpack.c.b16 %v2561, %v2560
    %v3052 = vpack.c.b16 %v2563, %v2562
    %v3053 = vpack.c.b16 %v2565, %v2564
    %v3054 = vpack.c.b16 %v2567, %v2566
    %v3055 = vpack.c.b16 %v2569, %v2568
    %v3056 = vpack.c.b16 %v2571, %v2570
    %v3057 = vpack.c.b16 %v2573, %v2572
    %v3058 = vpack.c.b16 %v2575, %v2574
    %v3059 = vpack.c.b16 %v2577, %v2576
    %v3060 = vpack.c.b16 %v2579, %v2578
    %v3061 = vpack.c.b16 %v2581, %v2580
    %v3062 = vpack.c.b16 %v2583, %v2582
    %v3063 = vpack.c.b16 %v2585, %v2584
    %v3064 = vpack.c.b16 %v2587, %v2586
    %v3065 = vpack.c.b16 %v2589, %v2588
    %v3066 = vpack.c.b16 %v2591, %v2590
    %v3067 = vpack.c.b16 %v2593, %v2592
    %v3068 = vpack.c.b16 %v2595, %v2594
    %v3069 = vpack.c.b16 %v2597, %v2596
    %v3070 = vpack.c.b16 %v2599, %v2598
    %v3071 = vpack.c.b16 %v2601, %v2600
    %v3072 = vpack.c.b16 %v2603, %v2602
    %v3073 = vpack.c.b16 %v2605, %v2604
    %v3074 = vpack.c.b16 %v2607, %v2606
    %v3075 = vpack.c.b16 %v2609, %v2608
    %v3076 = vpack.c.b16 %v2611, %v2610
    %v3077 = vpack.c.b16 %v2613, %v2612
    %v3078 = vpack.c.b16 %v2615, %v2614
    %v3079 = vpack.c.b16 %v2617, %v2616
    %v3080 = vpack.c.b16 %v2619, %v2618
    %v3081 = vpack.c.b16 %v2621, %v2620
    %v3082 = vpack.c.b16 %v2623, %v2622
    %v3083 = vpack.c.b16 %v2625, %v2624
    %v3084 = vpack.c.b16 %v2627, %v2626
    %v3085 = vpack.c.b16 %v2629, %v2628
    %v3086 = vpack.c.b16 %v2631, %v2630
    %v3087 = vpack.c.b16 %v2633, %v2632
    %v3088 = vpack.c.b16 %v2635, %v2634
    %v3089 = vpack.c.b16 %v2637, %v2636
    %v3090 = vpack.c.b16 %v2639, %v2638
    %v3091 = vpack.c.b16 %v2641, %v2640
    %v3092 = vpack.c.b16 %v2643, %v2642
    %v3093 = vpack.c.b16 %v2645, %v2644
    %v3094 = vpack.c.b16 %v2647, %v2646
    %v3095 = vpack.c.b16 %v2649, %v2648
    %v3096 = vpack.c.b16 %v2651, %v2650
    %v3097 = vpack.c.b16 %v2653, %v2652
    %v3098 = vpack.c.b16 %v2655, %v2654
    %v3099 = vpack.c.b16 %v2657, %v2656
    %v3100 = vpack.c.b16 %v2659, %v2658
    %v3101 = vpack.c.b16 %v2661, %v2660
    %v3102 = vpack.c.b16 %v2663, %v2662
    %v3103 = vpack.c.b16 %v2665, %v2664
    %v3104 = vpack.c.b16 %v2667, %v2666
    %v3105 = vpack.c.b16 %v2669, %v2668
    %v3106 = vpack.c.b16 %v2671, %v2670
    %v3107 = vpack.c.b16 %v2673, %v2672
    %v3108 = vpack.c.b16 %v2675, %v2674
    %v3109 = vpack.c.b16 %v2677, %v2676
    %v3110 = vpack.c.b16 %v2679, %v2678
    %v3111 = vpack.c.b16 %v2681, %v2680
    %v3112 = vpack.c.b16 %v2683, %v2682
    %v3113 = vpack.c.b16 %v2685, %v2684
    %v3114 = vpack.c.b16 %v2687, %v2686
    %v3115 = vpack.c.b16 %v2689, %v2688
    %v3116 = vpack.c.b16 %v2691, %v2690
    %v3117 = vpack.c.b16 %v2693, %v2692
    %v3118 = vpack.c.b16 %v2695, %v2694
    %v3119 = vpack.c.b16 %v2697, %v2696
    %v3120 = vpack.c.b16 %v2699, %v2698
    %v3121 = vpack.c.b16 %v2701, %v2700
    %v3122 = vpack.c.b16 %v2703, %v2702
    %v3123 = vpack.c.b16 %v2705, %v2704
    %v3124 = vpack.c.b16 %v2707, %v2706
    %v3125 = vpack.c.b16 %v2709, %v2708
    %v3126 = vpack.c.b16 %v2711, %v2710
    %v3127 = vpack.c.b16 %v2713, %v2712
    %v3128 = vpack.c.b16 %v2715, %v2714
    %v3129 = vpack.c.b16 %v2717, %v2716
    %v3130 = vpack.c.b16 %v2719, %v2718
    %v3131 = vpack.c.b16 %v2721, %v2720
    %v3132 = vpack.c.b16 %v2723, %v2722
    %v3133 = vpack.c.b16 %v2725, %v2724
    %v3134 = vpack.c.b16 %v2727, %v2726
    %v3135 = vpack.c.b16 %v2729, %v2728
    %v3136 = vpack.c.b16 %v2731, %v2730
    %v3137 = vpack.c.b16 %v2733, %v2732
    %v3138 = vpack.c.b16 %v2735, %v2734
    %v3139 = vpack.c.b16 %v2737, %v2736
    %v3140 = vpack.c.b16 %v2739, %v2738
    %v3141 = vpack.c.b16 %v2741, %v2740
    %v3142 = vpack.c.b16 %v2743, %v2742
    %v3143 = vpack.c.b16 %v2745, %v2744
    %v3144 = vpack.c.b16 %v2747, %v2746
    %v3145 = vpack.c.b16 %v2749, %v2748
    %v3146 = vpack.c.b16 %v2751, %v2750
    %v3147 = vpack.c.b16 %v2753, %v2752
    %v3148 = vpack.c.b16 %v2755, %v2754
    %v3149 = vpack.c.b16 %v2757, %v2756
    %3542 = vmatprep.subr.bf16.mxu0 0
    %3543 = vmatpush1.bf16.msra.mxu0 %v2758
    %3544 = vmatprep.subr.bf16.mxu0 0
    %3545 = vmatpush1.bf16.msra.mxu0 %v2759
    %3546 = vmatprep.subr.bf16.mxu0 0
    %3547 = vmatpush1.bf16.msra.mxu0 %v2760
    %3548 = vmatprep.subr.bf16.mxu0 0
    %3549 = vmatpush1.bf16.msra.mxu0 %v2761
    %3550 = vmatprep.subr.bf16.mxu0 0
    %3551 = vmatpush1.bf16.msra.mxu0 %v2762
    %3552 = vmatprep.subr.bf16.mxu0 0
    %3553 = vmatpush1.bf16.msra.mxu0 %v2763
    %3554 = vmatprep.subr.bf16.mxu0 0
    %3555 = vmatpush1.bf16.msra.mxu0 %v2764
    %3556 = vmatprep.subr.bf16.mxu0 0
    %3557 = vmatpush1.bf16.msra.mxu0 %v2765
    %3558 = vmatprep.subr.bf16.mxu0 0
    %3559 = vmatpush1.bf16.msra.mxu0 %v2766
    %3560 = vmatprep.subr.bf16.mxu0 0
    %3561 = vmatpush1.bf16.msra.mxu0 %v2767
    %3562 = vmatprep.subr.bf16.mxu0 0
    %3563 = vmatpush1.bf16.msra.mxu0 %v2768
    %3564 = vmatprep.subr.bf16.mxu0 0
    %3565 = vmatpush1.bf16.msra.mxu0 %v2769
    %3566 = vmatprep.subr.bf16.mxu0 0
    %3567 = vmatpush1.bf16.msra.mxu0 %v2770
    %3568 = vmatprep.subr.bf16.mxu0 0
    %3569 = vmatpush1.bf16.msra.mxu0 %v2771
    %3570 = vmatprep.subr.bf16.mxu0 0
    %3571 = vmatpush1.bf16.msra.mxu0 %v2772
    %3572 = vmatprep.subr.bf16.mxu0 0
    %3573 = vmatpush1.bf16.msra.mxu0 %v2773
    %3574 = vmatprep.mubr.bf16.mxu0 %v870
    %3575 = vmatmul.mubr.bf16.gmra.mrb[0].mxu0 %v856
    %v3576 = vpop.f32.mrb[0].mxu0
    %v3577 = vadd.f32 %v824, %v3576
    %v3578 = vpop.f32.mrb[0].mxu0
    %v3579 = vpop.f32.mrb[0].mxu0
    %v3580 = vpop.f32.mrb[0].mxu0
    %3581 = vdwg.mxu0
    %3582 = vmatprep.subr.bf16.mxu0 0
    %3583 = vmatpush1.bf16.msra.mxu0 %v2774
    %3584 = vmatprep.subr.bf16.mxu0 0
    %3585 = vmatpush1.bf16.msra.mxu0 %v2775
    %3586 = vmatprep.subr.bf16.mxu0 0
    %3587 = vmatpush1.bf16.msra.mxu0 %v2776
    %3588 = vmatprep.subr.bf16.mxu0 0
    %3589 = vmatpush1.bf16.msra.mxu0 %v2777
    %3590 = vmatprep.subr.bf16.mxu0 0
    %3591 = vmatpush1.bf16.msra.mxu0 %v2778
    %3592 = vmatprep.subr.bf16.mxu0 0
    %3593 = vmatpush1.bf16.msra.mxu0 %v2779
    %3594 = vmatprep.subr.bf16.mxu0 0
    %3595 = vmatpush1.bf16.msra.mxu0 %v2780
    %3596 = vmatprep.subr.bf16.mxu0 0
    %3597 = vmatpush1.bf16.msra.mxu0 %v2781
    %3598 = vmatprep.subr.bf16.mxu0 0
    %3599 = vmatpush1.bf16.msra.mxu0 %v2782
    %3600 = vmatprep.subr.bf16.mxu0 0
    %3601 = vmatpush1.bf16.msra.mxu0 %v2783
    %3602 = vmatprep.subr.bf16.mxu0 0
    %3603 = vmatpush1.bf16.msra.mxu0 %v2784
    %3604 = vmatprep.subr.bf16.mxu0 0
    %3605 = vmatpush1.bf16.msra.mxu0 %v2785
    %3606 = vmatprep.subr.bf16.mxu0 0
    %3607 = vmatpush1.bf16.msra.mxu0 %v2786
    %3608 = vmatprep.subr.bf16.mxu0 0
    %3609 = vmatpush1.bf16.msra.mxu0 %v2787
    %3610 = vmatprep.subr.bf16.mxu0 0
    %3611 = vmatpush1.bf16.msra.mxu0 %v2788
    %3612 = vmatprep.subr.bf16.mxu0 0
    %3613 = vmatpush1.bf16.msra.mxu0 %v2789
    %3614 = vmatprep.mubr.bf16.mxu0 %v880
    %3615 = vmatmul.mubr.bf16.gmra.mrb[0].mxu0 %v878
    %v3616 = vpop.f32.mrb[0].mxu0
    %v3617 = vadd.f32 %v3577, %v3616
    %v3618 = vpop.f32.mrb[0].mxu0
    %v3619 = vpop.f32.mrb[0].mxu0
    %v3620 = vpop.f32.mrb[0].mxu0
    %3621 = vdwg.mxu0
    %3622 = vmatprep.subr.bf16.mxu0 0
    %3623 = vmatpush1.bf16.msra.mxu0 %v2790
    %3624 = vmatprep.subr.bf16.mxu0 0
    %3625 = vmatpush1.bf16.msra.mxu0 %v2791
    %3626 = vmatprep.subr.bf16.mxu0 0
    %3627 = vmatpush1.bf16.msra.mxu0 %v2792
    %3628 = vmatprep.subr.bf16.mxu0 0
    %3629 = vmatpush1.bf16.msra.mxu0 %v2793
    %3630 = vmatprep.subr.bf16.mxu0 0
    %3631 = vmatpush1.bf16.msra.mxu0 %v2794
    %3632 = vmatprep.subr.bf16.mxu0 0
    %3633 = vmatpush1.bf16.msra.mxu0 %v2795
    %3634 = vmatprep.subr.bf16.mxu0 0
    %3635 = vmatpush1.bf16.msra.mxu0 %v2796
    %3636 = vmatprep.subr.bf16.mxu0 0
    %3637 = vmatpush1.bf16.msra.mxu0 %v2797
    %3638 = vmatprep.subr.bf16.mxu0 0
    %3639 = vmatpush1.bf16.msra.mxu0 %v2798
    %3640 = vmatprep.subr.bf16.mxu0 0
    %3641 = vmatpush1.bf16.msra.mxu0 %v2799
    %3642 = vmatprep.subr.bf16.mxu0 0
    %3643 = vmatpush1.bf16.msra.mxu0 %v2800
    %3644 = vmatprep.subr.bf16.mxu0 0
    %3645 = vmatpush1.bf16.msra.mxu0 %v2801
    %3646 = vmatprep.subr.bf16.mxu0 0
    %3647 = vmatpush1.bf16.msra.mxu0 %v2802
    %3648 = vmatprep.subr.bf16.mxu0 0
    %3649 = vmatpush1.bf16.msra.mxu0 %v2803
    %3650 = vmatprep.subr.bf16.mxu0 0
    %3651 = vmatpush1.bf16.msra.mxu0 %v2804
    %3652 = vmatprep.subr.bf16.mxu0 0
    %3653 = vmatpush1.bf16.msra.mxu0 %v2805
    %3654 = vmatprep.mubr.bf16.mxu0 %v877
    %3655 = vmatmul.mubr.bf16.gmra.mrb[0].mxu0 %v863
    %v3656 = vpop.f32.mrb[0].mxu0
    %v3657 = vadd.f32 %v3617, %v3656
    %v3658 = vpop.f32.mrb[0].mxu0
    %v3659 = vpop.f32.mrb[0].mxu0
    %v3660 = vpop.f32.mrb[0].mxu0
    %3661 = vdwg.mxu0
    %3662 = vmatprep.subr.bf16.mxu0 0
    %3663 = vmatpush1.bf16.msra.mxu0 %v2806
    %3664 = vmatprep.subr.bf16.mxu0 0
    %3665 = vmatpush1.bf16.msra.mxu0 %v2807
    %3666 = vmatprep.subr.bf16.mxu0 0
    %3667 = vmatpush1.bf16.msra.mxu0 %v2808
    %3668 = vmatprep.subr.bf16.mxu0 0
    %3669 = vmatpush1.bf16.msra.mxu0 %v2809
    %3670 = vmatprep.subr.bf16.mxu0 0
    %3671 = vmatpush1.bf16.msra.mxu0 %v2810
    %3672 = vmatprep.subr.bf16.mxu0 0
    %3673 = vmatpush1.bf16.msra.mxu0 %v2811
    %3674 = vmatprep.subr.bf16.mxu0 0
    %3675 = vmatpush1.bf16.msra.mxu0 %v2812
    %3676 = vmatprep.subr.bf16.mxu0 0
    %3677 = vmatpush1.bf16.msra.mxu0 %v2813
    %3678 = vmatprep.subr.bf16.mxu0 0
    %3679 = vmatpush1.bf16.msra.mxu0 %v2814
    %3680 = vmatprep.subr.bf16.mxu0 0
    %3681 = vmatpush1.bf16.msra.mxu0 %v2815
    %3682 = vmatprep.subr.bf16.mxu0 0
    %3683 = vmatpush1.bf16.msra.mxu0 %v2816
    %3684 = vmatprep.subr.bf16.mxu0 0
    %3685 = vmatpush1.bf16.msra.mxu0 %v2817
    %3686 = vmatprep.subr.bf16.mxu0 0
    %3687 = vmatpush1.bf16.msra.mxu0 %v2818
    %3688 = vmatprep.subr.bf16.mxu0 0
    %3689 = vmatpush1.bf16.msra.mxu0 %v2819
    %3690 = vmatprep.subr.bf16.mxu0 0
    %3691 = vmatpush1.bf16.msra.mxu0 %v2820
    %3692 = vmatprep.subr.bf16.mxu0 0
    %3693 = vmatpush1.bf16.msra.mxu0 %v2821
    %3694 = vmatprep.mubr.bf16.mxu0 %v881
    %3695 = vmatmul.mubr.bf16.gmra.mrb[0].mxu0 %v879
    %v3696 = vpop.f32.mrb[0].mxu0
    %v3697 = vadd.f32 %v3657, %v3696
    %v3698 = vpop.f32.mrb[0].mxu0
    %v3699 = vpop.f32.mrb[0].mxu0
    %v3700 = vpop.f32.mrb[0].mxu0
    %3701 = vdwg.mxu0
    %3702 = vmatprep.subr.bf16.mxu0 0
    %3703 = vmatpush1.bf16.msra.mxu0 %v2822
    %3704 = vmatprep.subr.bf16.mxu0 0
    %3705 = vmatpush1.bf16.msra.mxu0 %v2823
    %3706 = vmatprep.subr.bf16.mxu0 0
    %3707 = vmatpush1.bf16.msra.mxu0 %v2824
    %3708 = vmatprep.subr.bf16.mxu0 0
    %3709 = vmatpush1.bf16.msra.mxu0 %v2825
    %3710 = vmatprep.subr.bf16.mxu0 0
    %3711 = vmatpush1.bf16.msra.mxu0 %v2826
    %3712 = vmatprep.subr.bf16.mxu0 0
    %3713 = vmatpush1.bf16.msra.mxu0 %v2827
    %3714 = vmatprep.subr.bf16.mxu0 0
    %3715 = vmatpush1.bf16.msra.mxu0 %v2828
    %3716 = vmatprep.subr.bf16.mxu0 0
    %3717 = vmatpush1.bf16.msra.mxu0 %v2829
    %3718 = vmatprep.subr.bf16.mxu0 0
    %3719 = vmatpush1.bf16.msra.mxu0 %v2830
    %3720 = vmatprep.subr.bf16.mxu0 0
    %3721 = vmatpush1.bf16.msra.mxu0 %v2831
    %3722 = vmatprep.subr.bf16.mxu0 0
    %3723 = vmatpush1.bf16.msra.mxu0 %v2832
    %3724 = vmatprep.subr.bf16.mxu0 0
    %3725 = vmatpush1.bf16.msra.mxu0 %v2833
    %3726 = vmatprep.subr.bf16.mxu0 0
    %3727 = vmatpush1.bf16.msra.mxu0 %v2834
    %3728 = vmatprep.subr.bf16.mxu0 0
    %3729 = vmatpush1.bf16.msra.mxu0 %v2835
    %3730 = vmatprep.subr.bf16.mxu0 0
    %3731 = vmatpush1.bf16.msra.mxu0 %v2836
    %3732 = vmatprep.subr.bf16.mxu0 0
    %3733 = vmatpush1.bf16.msra.mxu0 %v2837
    %3734 = vmatprep.mubr.bf16.mxu0 %v919
    %3735 = vmatmul.mubr.bf16.gmra.mrb[0].mxu0 %v905
    %v3736 = vpop.f32.mrb[0].mxu0
    %v3737 = vadd.f32 %v3697, %v3736
    %v3738 = vpop.f32.mrb[0].mxu0
    %v3739 = vpop.f32.mrb[0].mxu0
    %v3740 = vpop.f32.mrb[0].mxu0
    %3741 = vdwg.mxu0
    %3742 = vmatprep.subr.bf16.mxu0 0
    %3743 = vmatpush1.bf16.msra.mxu0 %v2838
    %3744 = vmatprep.subr.bf16.mxu0 0
    %3745 = vmatpush1.bf16.msra.mxu0 %v2839
    %3746 = vmatprep.subr.bf16.mxu0 0
    %3747 = vmatpush1.bf16.msra.mxu0 %v2840
    %3748 = vmatprep.subr.bf16.mxu0 0
    %3749 = vmatpush1.bf16.msra.mxu0 %v2841
    %3750 = vmatprep.subr.bf16.mxu0 0
    %3751 = vmatpush1.bf16.msra.mxu0 %v2842
    %3752 = vmatprep.subr.bf16.mxu0 0
    %3753 = vmatpush1.bf16.msra.mxu0 %v2843
    %3754 = vmatprep.subr.bf16.mxu0 0
    %3755 = vmatpush1.bf16.msra.mxu0 %v2844
    %3756 = vmatprep.subr.bf16.mxu0 0
    %3757 = vmatpush1.bf16.msra.mxu0 %v2845
    %3758 = vmatprep.subr.bf16.mxu0 0
    %3759 = vmatpush1.bf16.msra.mxu0 %v2846
    %3760 = vmatprep.subr.bf16.mxu0 0
    %3761 = vmatpush1.bf16.msra.mxu0 %v2847
    %3762 = vmatprep.subr.bf16.mxu0 0
    %3763 = vmatpush1.bf16.msra.mxu0 %v2848
    %3764 = vmatprep.subr.bf16.mxu0 0
    %3765 = vmatpush1.bf16.msra.mxu0 %v2849
    %3766 = vmatprep.subr.bf16.mxu0 0
    %3767 = vmatpush1.bf16.msra.mxu0 %v2850
    %3768 = vmatprep.subr.bf16.mxu0 0
    %3769 = vmatpush1.bf16.msra.mxu0 %v2851
    %3770 = vmatprep.subr.bf16.mxu0 0
    %3771 = vmatpush1.bf16.msra.mxu0 %v2852
    %3772 = vmatprep.subr.bf16.mxu0 0
    %3773 = vmatpush1.bf16.msra.mxu0 %v2853
    %3774 = vmatprep.mubr.bf16.mxu0 %v929
    %3775 = vmatmul.mubr.bf16.gmra.mrb[0].mxu0 %v927
    %v3776 = vpop.f32.mrb[0].mxu0
    %v3777 = vadd.f32 %v3737, %v3776
    %v3778 = vpop.f32.mrb[0].mxu0
    %v3779 = vpop.f32.mrb[0].mxu0
    %v3780 = vpop.f32.mrb[0].mxu0
    %3781 = vdwg.mxu0
    %3782 = vmatprep.subr.bf16.mxu0 0
    %3783 = vmatpush1.bf16.msra.mxu0 %v2854
    %3784 = vmatprep.subr.bf16.mxu0 0
    %3785 = vmatpush1.bf16.msra.mxu0 %v2855
    %3786 = vmatprep.subr.bf16.mxu0 0
    %3787 = vmatpush1.bf16.msra.mxu0 %v2856
    %3788 = vmatprep.subr.bf16.mxu0 0
    %3789 = vmatpush1.bf16.msra.mxu0 %v2857
    %3790 = vmatprep.subr.bf16.mxu0 0
    %3791 = vmatpush1.bf16.msra.mxu0 %v2858
    %3792 = vmatprep.subr.bf16.mxu0 0
    %3793 = vmatpush1.bf16.msra.mxu0 %v2859
    %3794 = vmatprep.subr.bf16.mxu0 0
    %3795 = vmatpush1.bf16.msra.mxu0 %v2860
    %3796 = vmatprep.subr.bf16.mxu0 0
    %3797 = vmatpush1.bf16.msra.mxu0 %v2861
    %3798 = vmatprep.subr.bf16.mxu0 0
    %3799 = vmatpush1.bf16.msra.mxu0 %v2862
    %3800 = vmatprep.subr.bf16.mxu0 0
    %3801 = vmatpush1.bf16.msra.mxu0 %v2863
    %3802 = vmatprep.subr.bf16.mxu0 0
    %3803 = vmatpush1.bf16.msra.mxu0 %v2864
    %3804 = vmatprep.subr.bf16.mxu0 0
    %3805 = vmatpush1.bf16.msra.mxu0 %v2865
    %3806 = vmatprep.subr.bf16.mxu0 0
    %3807 = vmatpush1.bf16.msra.mxu0 %v2866
    %3808 = vmatprep.subr.bf16.mxu0 0
    %3809 = vmatpush1.bf16.msra.mxu0 %v2867
    %3810 = vmatprep.subr.bf16.mxu0 0
    %3811 = vmatpush1.bf16.msra.mxu0 %v2868
    %3812 = vmatprep.subr.bf16.mxu0 0
    %3813 = vmatpush1.bf16.msra.mxu0 %v2869
    %3814 = vmatprep.mubr.bf16.mxu0 %v926
    %3815 = vmatmul.mubr.bf16.gmra.mrb[0].mxu0 %v912
    %v3816 = vpop.f32.mrb[0].mxu0
    %v3817 = vadd.f32 %v3777, %v3816
    %v3818 = vpop.f32.mrb[0].mxu0
    %v3819 = vpop.f32.mrb[0].mxu0
    %v3820 = vpop.f32.mrb[0].mxu0
    %3821 = vdwg.mxu0
    %3822 = vmatprep.subr.bf16.mxu0 0
    %3823 = vmatpush1.bf16.msra.mxu0 %v2870
    %3824 = vmatprep.subr.bf16.mxu0 0
    %3825 = vmatpush1.bf16.msra.mxu0 %v2871
    %3826 = vmatprep.subr.bf16.mxu0 0
    %3827 = vmatpush1.bf16.msra.mxu0 %v2872
    %3828 = vmatprep.subr.bf16.mxu0 0
    %3829 = vmatpush1.bf16.msra.mxu0 %v2873
    %3830 = vmatprep.subr.bf16.mxu0 0
    %3831 = vmatpush1.bf16.msra.mxu0 %v2874
    %3832 = vmatprep.subr.bf16.mxu0 0
    %3833 = vmatpush1.bf16.msra.mxu0 %v2875
    %3834 = vmatprep.subr.bf16.mxu0 0
    %3835 = vmatpush1.bf16.msra.mxu0 %v2876
    %3836 = vmatprep.subr.bf16.mxu0 0
    %3837 = vmatpush1.bf16.msra.mxu0 %v2877
    %3838 = vmatprep.subr.bf16.mxu0 0
    %3839 = vmatpush1.bf16.msra.mxu0 %v2878
    %3840 = vmatprep.subr.bf16.mxu0 0
    %3841 = vmatpush1.bf16.msra.mxu0 %v2879
    %3842 = vmatprep.subr.bf16.mxu0 0
    %3843 = vmatpush1.bf16.msra.mxu0 %v2880
    %3844 = vmatprep.subr.bf16.mxu0 0
    %3845 = vmatpush1.bf16.msra.mxu0 %v2881
    %3846 = vmatprep.subr.bf16.mxu0 0
    %3847 = vmatpush1.bf16.msra.mxu0 %v2882
    %3848 = vmatprep.subr.bf16.mxu0 0
    %3849 = vmatpush1.bf16.msra.mxu0 %v2883
    %3850 = vmatprep.subr.bf16.mxu0 0
    %3851 = vmatpush1.bf16.msra.mxu0 %v2884
    %3852 = vmatprep.subr.bf16.mxu0 0
    %3853 = vmatpush1.bf16.msra.mxu0 %v2885
    %3854 = vmatprep.mubr.bf16.mxu0 %v930
    %3855 = vmatmul.mubr.bf16.gmra.mrb[0].mxu0 %v928
    %v3856 = vpop.f32.mrb[0].mxu0
    %v3857 = vadd.f32 %v3817, %v3856
    %v3858 = vpop.f32.mrb[0].mxu0
    %v3859 = vpop.f32.mrb[0].mxu0
    %v3860 = vpop.f32.mrb[0].mxu0
    %3861 = vdwg.mxu0
    %3862 = vmatprep.subr.bf16.mxu0 0
    %3863 = vmatpush1.bf16.msra.mxu0 %v2886
    %3864 = vmatprep.subr.bf16.mxu0 0
    %3865 = vmatpush1.bf16.msra.mxu0 %v2887
    %3866 = vmatprep.subr.bf16.mxu0 0
    %3867 = vmatpush1.bf16.msra.mxu0 %v2888
    %3868 = vmatprep.subr.bf16.mxu0 0
    %3869 = vmatpush1.bf16.msra.mxu0 %v2889
    %3870 = vmatprep.subr.bf16.mxu0 0
    %3871 = vmatpush1.bf16.msra.mxu0 %v2890
    %3872 = vmatprep.subr.bf16.mxu0 0
    %3873 = vmatpush1.bf16.msra.mxu0 %v2891
    %3874 = vmatprep.subr.bf16.mxu0 0
    %3875 = vmatpush1.bf16.msra.mxu0 %v2892
    %3876 = vmatprep.subr.bf16.mxu0 0
    %3877 = vmatpush1.bf16.msra.mxu0 %v2893
    %3878 = vmatprep.subr.bf16.mxu0 0
    %3879 = vmatpush1.bf16.msra.mxu0 %v2894
    %3880 = vmatprep.subr.bf16.mxu0 0
    %3881 = vmatpush1.bf16.msra.mxu0 %v2895
    %3882 = vmatprep.subr.bf16.mxu0 0
    %3883 = vmatpush1.bf16.msra.mxu0 %v2896
    %3884 = vmatprep.subr.bf16.mxu0 0
    %3885 = vmatpush1.bf16.msra.mxu0 %v2897
    %3886 = vmatprep.subr.bf16.mxu0 0
    %3887 = vmatpush1.bf16.msra.mxu0 %v2898
    %3888 = vmatprep.subr.bf16.mxu0 0
    %3889 = vmatpush1.bf16.msra.mxu0 %v2899
    %3890 = vmatprep.subr.bf16.mxu0 0
    %3891 = vmatpush1.bf16.msra.mxu0 %v2900
    %3892 = vmatprep.subr.bf16.mxu0 0
    %3893 = vmatpush1.bf16.msra.mxu0 %v2901
    %3894 = vmatprep.mubr.bf16.mxu0 %v968
    %3895 = vmatmul.mubr.bf16.gmra.mrb[0].mxu0 %v954
    %v3896 = vpop.f32.mrb[0].mxu0
    %v3897 = vadd.f32 %v3857, %v3896
    %v3898 = vpop.f32.mrb[0].mxu0
    %v3899 = vpop.f32.mrb[0].mxu0
    %v3900 = vpop.f32.mrb[0].mxu0
    %3901 = vdwg.mxu0
    %3902 = vmatprep.subr.bf16.mxu0 0
    %3903 = vmatpush1.bf16.msra.mxu0 %v2902
    %3904 = vmatprep.subr.bf16.mxu0 0
    %3905 = vmatpush1.bf16.msra.mxu0 %v2903
    %3906 = vmatprep.subr.bf16.mxu0 0
    %3907 = vmatpush1.bf16.msra.mxu0 %v2904
    %3908 = vmatprep.subr.bf16.mxu0 0
    %3909 = vmatpush1.bf16.msra.mxu0 %v2905
    %3910 = vmatprep.subr.bf16.mxu0 0
    %3911 = vmatpush1.bf16.msra.mxu0 %v2906
    %3912 = vmatprep.subr.bf16.mxu0 0
    %3913 = vmatpush1.bf16.msra.mxu0 %v2907
    %3914 = vmatprep.subr.bf16.mxu0 0
    %3915 = vmatpush1.bf16.msra.mxu0 %v2908
    %3916 = vmatprep.subr.bf16.mxu0 0
    %3917 = vmatpush1.bf16.msra.mxu0 %v2909
    %3918 = vmatprep.subr.bf16.mxu0 0
    %3919 = vmatpush1.bf16.msra.mxu0 %v2910
    %3920 = vmatprep.subr.bf16.mxu0 0
    %3921 = vmatpush1.bf16.msra.mxu0 %v2911
    %3922 = vmatprep.subr.bf16.mxu0 0
    %3923 = vmatpush1.bf16.msra.mxu0 %v2912
    %3924 = vmatprep.subr.bf16.mxu0 0
    %3925 = vmatpush1.bf16.msra.mxu0 %v2913
    %3926 = vmatprep.subr.bf16.mxu0 0
    %3927 = vmatpush1.bf16.msra.mxu0 %v2914
    %3928 = vmatprep.subr.bf16.mxu0 0
    %3929 = vmatpush1.bf16.msra.mxu0 %v2915
    %3930 = vmatprep.subr.bf16.mxu0 0
    %3931 = vmatpush1.bf16.msra.mxu0 %v2916
    %3932 = vmatprep.subr.bf16.mxu0 0
    %3933 = vmatpush1.bf16.msra.mxu0 %v2917
    %3934 = vmatprep.mubr.bf16.mxu0 %v978
    %3935 = vmatmul.mubr.bf16.gmra.mrb[0].mxu0 %v976
    %v3936 = vpop.f32.mrb[0].mxu0
    %v3937 = vadd.f32 %v3897, %v3936
    %v3938 = vpop.f32.mrb[0].mxu0
    %v3939 = vpop.f32.mrb[0].mxu0
    %v3940 = vpop.f32.mrb[0].mxu0
    %3941 = vdwg.mxu0
    %3942 = vmatprep.subr.bf16.mxu0 0
    %3943 = vmatpush1.bf16.msra.mxu0 %v2918
    %3944 = vmatprep.subr.bf16.mxu0 0
    %3945 = vmatpush1.bf16.msra.mxu0 %v2919
    %3946 = vmatprep.subr.bf16.mxu0 0
    %3947 = vmatpush1.bf16.msra.mxu0 %v2920
    %3948 = vmatprep.subr.bf16.mxu0 0
    %3949 = vmatpush1.bf16.msra.mxu0 %v2921
    %3950 = vmatprep.subr.bf16.mxu0 0
    %3951 = vmatpush1.bf16.msra.mxu0 %v2922
    %3952 = vmatprep.subr.bf16.mxu0 0
    %3953 = vmatpush1.bf16.msra.mxu0 %v2923
    %3954 = vmatprep.subr.bf16.mxu0 0
    %3955 = vmatpush1.bf16.msra.mxu0 %v2924
    %3956 = vmatprep.subr.bf16.mxu0 0
    %3957 = vmatpush1.bf16.msra.mxu0 %v2925
    %3958 = vmatprep.subr.bf16.mxu0 0
    %3959 = vmatpush1.bf16.msra.mxu0 %v2926
    %3960 = vmatprep.subr.bf16.mxu0 0
    %3961 = vmatpush1.bf16.msra.mxu0 %v2927
    %3962 = vmatprep.subr.bf16.mxu0 0
    %3963 = vmatpush1.bf16.msra.mxu0 %v2928
    %3964 = vmatprep.subr.bf16.mxu0 0
    %3965 = vmatpush1.bf16.msra.mxu0 %v2929
    %3966 = vmatprep.subr.bf16.mxu0 0
    %3967 = vmatpush1.bf16.msra.mxu0 %v2930
    %3968 = vmatprep.subr.bf16.mxu0 0
    %3969 = vmatpush1.bf16.msra.mxu0 %v2931
    %3970 = vmatprep.subr.bf16.mxu0 0
    %3971 = vmatpush1.bf16.msra.mxu0 %v2932
    %3972 = vmatprep.subr.bf16.mxu0 0
    %3973 = vmatpush1.bf16.msra.mxu0 %v2933
    %3974 = vmatprep.mubr.bf16.mxu0 %v975
    %3975 = vmatmul.mubr.bf16.gmra.mrb[0].mxu0 %v961
    %v3976 = vpop.f32.mrb[0].mxu0
    %v3977 = vadd.f32 %v3937, %v3976
    %v3978 = vpop.f32.mrb[0].mxu0
    %v3979 = vpop.f32.mrb[0].mxu0
    %v3980 = vpop.f32.mrb[0].mxu0
    %3981 = vdwg.mxu0
    %3982 = vmatprep.subr.bf16.mxu0 0
    %3983 = vmatpush1.bf16.msra.mxu0 %v2934
    %3984 = vmatprep.subr.bf16.mxu0 0
    %3985 = vmatpush1.bf16.msra.mxu0 %v2935
    %3986 = vmatprep.subr.bf16.mxu0 0
    %3987 = vmatpush1.bf16.msra.mxu0 %v2936
    %3988 = vmatprep.subr.bf16.mxu0 0
    %3989 = vmatpush1.bf16.msra.mxu0 %v2937
    %3990 = vmatprep.subr.bf16.mxu0 0
    %3991 = vmatpush1.bf16.msra.mxu0 %v2938
    %3992 = vmatprep.subr.bf16.mxu0 0
    %3993 = vmatpush1.bf16.msra.mxu0 %v2939
    %3994 = vmatprep.subr.bf16.mxu0 0
    %3995 = vmatpush1.bf16.msra.mxu0 %v2940
    %3996 = vmatprep.subr.bf16.mxu0 0
    %3997 = vmatpush1.bf16.msra.mxu0 %v2941
    %3998 = vmatprep.subr.bf16.mxu0 0
    %3999 = vmatpush1.bf16.msra.mxu0 %v2942
    %4000 = vmatprep.subr.bf16.mxu0 0
    %4001 = vmatpush1.bf16.msra.mxu0 %v2943
    %4002 = vmatprep.subr.bf16.mxu0 0
    %4003 = vmatpush1.bf16.msra.mxu0 %v2944
    %4004 = vmatprep.subr.bf16.mxu0 0
    %4005 = vmatpush1.bf16.msra.mxu0 %v2945
    %4006 = vmatprep.subr.bf16.mxu0 0
    %4007 = vmatpush1.bf16.msra.mxu0 %v2946
    %4008 = vmatprep.subr.bf16.mxu0 0
    %4009 = vmatpush1.bf16.msra.mxu0 %v2947
    %4010 = vmatprep.subr.bf16.mxu0 0
    %4011 = vmatpush1.bf16.msra.mxu0 %v2948
    %4012 = vmatprep.subr.bf16.mxu0 0
    %4013 = vmatpush1.bf16.msra.mxu0 %v2949
    %4014 = vmatprep.mubr.bf16.mxu0 %v979
    %4015 = vmatmul.mubr.bf16.gmra.mrb[0].mxu0 %v977
    %v4016 = vpop.f32.mrb[0].mxu0
    %v4017 = vadd.f32 %v3977, %v4016
    %v4018 = vpop.f32.mrb[0].mxu0
    %v4019 = vpop.f32.mrb[0].mxu0
    %v4020 = vpop.f32.mrb[0].mxu0
    %4021 = vdwg.mxu0
    %4022 = vmatprep.subr.bf16.mxu0 0
    %4023 = vmatpush1.bf16.msra.mxu0 %v2950
    %4024 = vmatprep.subr.bf16.mxu0 0
    %4025 = vmatpush1.bf16.msra.mxu0 %v2951
    %4026 = vmatprep.subr.bf16.mxu0 0
    %4027 = vmatpush1.bf16.msra.mxu0 %v2952
    %4028 = vmatprep.subr.bf16.mxu0 0
    %4029 = vmatpush1.bf16.msra.mxu0 %v2953
    %4030 = vmatprep.subr.bf16.mxu0 0
    %4031 = vmatpush1.bf16.msra.mxu0 %v2954
    %4032 = vmatprep.subr.bf16.mxu0 0
    %4033 = vmatpush1.bf16.msra.mxu0 %v2955
    %4034 = vmatprep.subr.bf16.mxu0 0
    %4035 = vmatpush1.bf16.msra.mxu0 %v2956
    %4036 = vmatprep.subr.bf16.mxu0 0
    %4037 = vmatpush1.bf16.msra.mxu0 %v2957
    %4038 = vmatprep.subr.bf16.mxu0 0
    %4039 = vmatpush1.bf16.msra.mxu0 %v2958
    %4040 = vmatprep.subr.bf16.mxu0 0
    %4041 = vmatpush1.bf16.msra.mxu0 %v2959
    %4042 = vmatprep.subr.bf16.mxu0 0
    %4043 = vmatpush1.bf16.msra.mxu0 %v2960
    %4044 = vmatprep.subr.bf16.mxu0 0
    %4045 = vmatpush1.bf16.msra.mxu0 %v2961
    %4046 = vmatprep.subr.bf16.mxu0 0
    %4047 = vmatpush1.bf16.msra.mxu0 %v2962
    %4048 = vmatprep.subr.bf16.mxu0 0
    %4049 = vmatpush1.bf16.msra.mxu0 %v2963
    %4050 = vmatprep.subr.bf16.mxu0 0
    %4051 = vmatpush1.bf16.msra.mxu0 %v2964
    %4052 = vmatprep.subr.bf16.mxu0 0
    %4053 = vmatpush1.bf16.msra.mxu0 %v2965
    %4054 = vmatprep.mubr.bf16.mxu0 %v1017
    %4055 = vmatmul.mubr.bf16.gmra.mrb[0].mxu0 %v1003
    %v4056 = vpop.f32.mrb[0].mxu0
    %v4057 = vadd.f32 %v4017, %v4056
    %v4058 = vpop.f32.mrb[0].mxu0
    %v4059 = vpop.f32.mrb[0].mxu0
    %v4060 = vpop.f32.mrb[0].mxu0
    %4061 = vdwg.mxu0
    %4062 = vmatprep.subr.bf16.mxu0 0
    %4063 = vmatpush1.bf16.msra.mxu0 %v2966
    %4064 = vmatprep.subr.bf16.mxu0 0
    %4065 = vmatpush1.bf16.msra.mxu0 %v2967
    %4066 = vmatprep.subr.bf16.mxu0 0
    %4067 = vmatpush1.bf16.msra.mxu0 %v2968
    %4068 = vmatprep.subr.bf16.mxu0 0
    %4069 = vmatpush1.bf16.msra.mxu0 %v2969
    %4070 = vmatprep.subr.bf16.mxu0 0
    %4071 = vmatpush1.bf16.msra.mxu0 %v2970
    %4072 = vmatprep.subr.bf16.mxu0 0
    %4073 = vmatpush1.bf16.msra.mxu0 %v2971
    %4074 = vmatprep.subr.bf16.mxu0 0
    %4075 = vmatpush1.bf16.msra.mxu0 %v2972
    %4076 = vmatprep.subr.bf16.mxu0 0
    %4077 = vmatpush1.bf16.msra.mxu0 %v2973
    %4078 = vmatprep.subr.bf16.mxu0 0
    %4079 = vmatpush1.bf16.msra.mxu0 %v2974
    %4080 = vmatprep.subr.bf16.mxu0 0
    %4081 = vmatpush1.bf16.msra.mxu0 %v2975
    %4082 = vmatprep.subr.bf16.mxu0 0
    %4083 = vmatpush1.bf16.msra.mxu0 %v2976
    %4084 = vmatprep.subr.bf16.mxu0 0
    %4085 = vmatpush1.bf16.msra.mxu0 %v2977
    %4086 = vmatprep.subr.bf16.mxu0 0
    %4087 = vmatpush1.bf16.msra.mxu0 %v2978
    %4088 = vmatprep.subr.bf16.mxu0 0
    %4089 = vmatpush1.bf16.msra.mxu0 %v2979
    %4090 = vmatprep.subr.bf16.mxu0 0
    %4091 = vmatpush1.bf16.msra.mxu0 %v2980
    %4092 = vmatprep.subr.bf16.mxu0 0
    %4093 = vmatpush1.bf16.msra.mxu0 %v2981
    %4094 = vmatprep.mubr.bf16.mxu0 %v1027
    %4095 = vmatmul.mubr.bf16.gmra.mrb[0].mxu0 %v1025
    %v4096 = vpop.f32.mrb[0].mxu0
    %v4097 = vadd.f32 %v4057, %v4096
    %v4098 = vpop.f32.mrb[0].mxu0
    %v4099 = vpop.f32.mrb[0].mxu0
    %v4100 = vpop.f32.mrb[0].mxu0
    %4101 = vdwg.mxu0
    %4102 = vmatprep.subr.bf16.mxu0 0
    %4103 = vmatpush1.bf16.msra.mxu0 %v2982
    %4104 = vmatprep.subr.bf16.mxu0 0
    %4105 = vmatpush1.bf16.msra.mxu0 %v2983
    %4106 = vmatprep.subr.bf16.mxu0 0
    %4107 = vmatpush1.bf16.msra.mxu0 %v2984
    %4108 = vmatprep.subr.bf16.mxu0 0
    %4109 = vmatpush1.bf16.msra.mxu0 %v2985
    %4110 = vmatprep.subr.bf16.mxu0 0
    %4111 = vmatpush1.bf16.msra.mxu0 %v2986
    %4112 = vmatprep.subr.bf16.mxu0 0
    %4113 = vmatpush1.bf16.msra.mxu0 %v2987
    %4114 = vmatprep.subr.bf16.mxu0 0
    %4115 = vmatpush1.bf16.msra.mxu0 %v2988
    %4116 = vmatprep.subr.bf16.mxu0 0
    %4117 = vmatpush1.bf16.msra.mxu0 %v2989
    %4118 = vmatprep.subr.bf16.mxu0 0
    %4119 = vmatpush1.bf16.msra.mxu0 %v2990
    %4120 = vmatprep.subr.bf16.mxu0 0
    %4121 = vmatpush1.bf16.msra.mxu0 %v2991
    %4122 = vmatprep.subr.bf16.mxu0 0
    %4123 = vmatpush1.bf16.msra.mxu0 %v2992
    %4124 = vmatprep.subr.bf16.mxu0 0
    %4125 = vmatpush1.bf16.msra.mxu0 %v2993
    %4126 = vmatprep.subr.bf16.mxu0 0
    %4127 = vmatpush1.bf16.msra.mxu0 %v2994
    %4128 = vmatprep.subr.bf16.mxu0 0
    %4129 = vmatpush1.bf16.msra.mxu0 %v2995
    %4130 = vmatprep.subr.bf16.mxu0 0
    %4131 = vmatpush1.bf16.msra.mxu0 %v2996
    %4132 = vmatprep.subr.bf16.mxu0 0
    %4133 = vmatpush1.bf16.msra.mxu0 %v2997
    %4134 = vmatprep.mubr.bf16.mxu0 %v1024
    %4135 = vmatmul.mubr.bf16.gmra.mrb[0].mxu0 %v1010
    %v4136 = vpop.f32.mrb[0].mxu0
    %v4137 = vadd.f32 %v4097, %v4136
    %v4138 = vpop.f32.mrb[0].mxu0
    %v4139 = vpop.f32.mrb[0].mxu0
    %v4140 = vpop.f32.mrb[0].mxu0
    %4141 = vdwg.mxu0
    %4142 = vmatprep.subr.bf16.mxu0 0
    %4143 = vmatpush1.bf16.msra.mxu0 %v2998
    %4144 = vmatprep.subr.bf16.mxu0 0
    %4145 = vmatpush1.bf16.msra.mxu0 %v2999
    %4146 = vmatprep.subr.bf16.mxu0 0
    %4147 = vmatpush1.bf16.msra.mxu0 %v3000
    %4148 = vmatprep.subr.bf16.mxu0 0
    %4149 = vmatpush1.bf16.msra.mxu0 %v3001
    %4150 = vmatprep.subr.bf16.mxu0 0
    %4151 = vmatpush1.bf16.msra.mxu0 %v3002
    %4152 = vmatprep.subr.bf16.mxu0 0
    %4153 = vmatpush1.bf16.msra.mxu0 %v3003
    %4154 = vmatprep.subr.bf16.mxu0 0
    %4155 = vmatpush1.bf16.msra.mxu0 %v3004
    %4156 = vmatprep.subr.bf16.mxu0 0
    %4157 = vmatpush1.bf16.msra.mxu0 %v3005
    %4158 = vmatprep.subr.bf16.mxu0 0
    %4159 = vmatpush1.bf16.msra.mxu0 %v3006
    %4160 = vmatprep.subr.bf16.mxu0 0
    %4161 = vmatpush1.bf16.msra.mxu0 %v3007
    %4162 = vmatprep.subr.bf16.mxu0 0
    %4163 = vmatpush1.bf16.msra.mxu0 %v3008
    %4164 = vmatprep.subr.bf16.mxu0 0
    %4165 = vmatpush1.bf16.msra.mxu0 %v3009
    %4166 = vmatprep.subr.bf16.mxu0 0
    %4167 = vmatpush1.bf16.msra.mxu0 %v3010
    %4168 = vmatprep.subr.bf16.mxu0 0
    %4169 = vmatpush1.bf16.msra.mxu0 %v3011
    %4170 = vmatprep.subr.bf16.mxu0 0
    %4171 = vmatpush1.bf16.msra.mxu0 %v3012
    %4172 = vmatprep.subr.bf16.mxu0 0
    %4173 = vmatpush1.bf16.msra.mxu0 %v3013
    %4174 = vmatprep.mubr.bf16.mxu0 %v1028
    %4175 = vmatmul.mubr.bf16.gmra.mrb[0].mxu0 %v1026
    %v4176 = vpop.f32.mrb[0].mxu0
    %v4177 = vadd.f32 %v4137, %v4176
    %v4178 = vpop.f32.mrb[0].mxu0
    %v4179 = vpop.f32.mrb[0].mxu0
    %v4180 = vpop.f32.mrb[0].mxu0
    %4181 = vdwg.mxu0
    %4182 = vmatprep.subr.bf16.mxu0 0
    %4183 = vmatpush1.bf16.msra.mxu0 %v3014
    %4184 = vmatprep.subr.bf16.mxu0 0
    %4185 = vmatpush1.bf16.msra.mxu0 %v3015
    %4186 = vmatprep.subr.bf16.mxu0 0
    %4187 = vmatpush1.bf16.msra.mxu0 %v3016
    %4188 = vmatprep.subr.bf16.mxu0 0
    %4189 = vmatpush1.bf16.msra.mxu0 %v3017
    %4190 = vmatprep.subr.bf16.mxu0 0
    %4191 = vmatpush1.bf16.msra.mxu0 %v3018
    %4192 = vmatprep.subr.bf16.mxu0 0
    %4193 = vmatpush1.bf16.msra.mxu0 %v3019
    %4194 = vmatprep.subr.bf16.mxu0 0
    %4195 = vmatpush1.bf16.msra.mxu0 %v3020
    %4196 = vmatprep.subr.bf16.mxu0 0
    %4197 = vmatpush1.bf16.msra.mxu0 %v3021
    %4198 = vmatprep.subr.bf16.mxu0 0
    %4199 = vmatpush1.bf16.msra.mxu0 %v3022
    %4200 = vmatprep.subr.bf16.mxu0 0
    %4201 = vmatpush1.bf16.msra.mxu0 %v3023
    %4202 = vmatprep.subr.bf16.mxu0 0
    %4203 = vmatpush1.bf16.msra.mxu0 %v3024
    %4204 = vmatprep.subr.bf16.mxu0 0
    %4205 = vmatpush1.bf16.msra.mxu0 %v3025
    %4206 = vmatprep.subr.bf16.mxu0 0
    %4207 = vmatpush1.bf16.msra.mxu0 %v3026
    %4208 = vmatprep.subr.bf16.mxu0 0
    %4209 = vmatpush1.bf16.msra.mxu0 %v3027
    %4210 = vmatprep.subr.bf16.mxu0 0
    %4211 = vmatpush1.bf16.msra.mxu0 %v3028
    %4212 = vmatprep.subr.bf16.mxu0 0
    %4213 = vmatpush1.bf16.msra.mxu0 %v3029
    %4214 = vmatprep.mubr.bf16.mxu0 %v1066
    %4215 = vmatmul.mubr.bf16.gmra.mrb[0].mxu0 %v1052
    %v4216 = vpop.f32.mrb[0].mxu0
    %v4217 = vadd.f32 %v4177, %v4216
    %v4218 = vpop.f32.mrb[0].mxu0
    %v4219 = vpop.f32.mrb[0].mxu0
    %v4220 = vpop.f32.mrb[0].mxu0
    %4221 = vdwg.mxu0
    %4222 = vmatprep.subr.bf16.mxu0 0
    %4223 = vmatpush1.bf16.msra.mxu0 %v3030
    %4224 = vmatprep.subr.bf16.mxu0 0
    %4225 = vmatpush1.bf16.msra.mxu0 %v3031
    %4226 = vmatprep.subr.bf16.mxu0 0
    %4227 = vmatpush1.bf16.msra.mxu0 %v3032
    %4228 = vmatprep.subr.bf16.mxu0 0
    %4229 = vmatpush1.bf16.msra.mxu0 %v3033
    %4230 = vmatprep.subr.bf16.mxu0 0
    %4231 = vmatpush1.bf16.msra.mxu0 %v3034
    %4232 = vmatprep.subr.bf16.mxu0 0
    %4233 = vmatpush1.bf16.msra.mxu0 %v3035
    %4234 = vmatprep.subr.bf16.mxu0 0
    %4235 = vmatpush1.bf16.msra.mxu0 %v3036
    %4236 = vmatprep.subr.bf16.mxu0 0
    %4237 = vmatpush1.bf16.msra.mxu0 %v3037
    %4238 = vmatprep.subr.bf16.mxu0 0
    %4239 = vmatpush1.bf16.msra.mxu0 %v3038
    %4240 = vmatprep.subr.bf16.mxu0 0
    %4241 = vmatpush1.bf16.msra.mxu0 %v3039
    %4242 = vmatprep.subr.bf16.mxu0 0
    %4243 = vmatpush1.bf16.msra.mxu0 %v3040
    %4244 = vmatprep.subr.bf16.mxu0 0
    %4245 = vmatpush1.bf16.msra.mxu0 %v3041
    %4246 = vmatprep.subr.bf16.mxu0 0
    %4247 = vmatpush1.bf16.msra.mxu0 %v3042
    %4248 = vmatprep.subr.bf16.mxu0 0
    %4249 = vmatpush1.bf16.msra.mxu0 %v3043
    %4250 = vmatprep.subr.bf16.mxu0 0
    %4251 = vmatpush1.bf16.msra.mxu0 %v3044
    %4252 = vmatprep.subr.bf16.mxu0 0
    %4253 = vmatpush1.bf16.msra.mxu0 %v3045
    %4254 = vmatprep.mubr.bf16.mxu0 %v1076
    %4255 = vmatmul.mubr.bf16.gmra.mrb[0].mxu0 %v1074
    %v4256 = vpop.f32.mrb[0].mxu0
    %v4257 = vadd.f32 %v4217, %v4256
    %v4258 = vpop.f32.mrb[0].mxu0
    %v4259 = vpop.f32.mrb[0].mxu0
    %v4260 = vpop.f32.mrb[0].mxu0
    %4261 = vdwg.mxu0
    %4262 = vmatprep.subr.bf16.mxu0 0
    %4263 = vmatpush1.bf16.msra.mxu0 %v3046
    %4264 = vmatprep.subr.bf16.mxu0 0
    %4265 = vmatpush1.bf16.msra.mxu0 %v3047
    %4266 = vmatprep.subr.bf16.mxu0 0
    %4267 = vmatpush1.bf16.msra.mxu0 %v3048
    %4268 = vmatprep.subr.bf16.mxu0 0
    %4269 = vmatpush1.bf16.msra.mxu0 %v3049
    %4270 = vmatprep.subr.bf16.mxu0 0
    %4271 = vmatpush1.bf16.msra.mxu0 %v3050
    %4272 = vmatprep.subr.bf16.mxu0 0
    %4273 = vmatpush1.bf16.msra.mxu0 %v3051
    %4274 = vmatprep.subr.bf16.mxu0 0
    %4275 = vmatpush1.bf16.msra.mxu0 %v3052
    %4276 = vmatprep.subr.bf16.mxu0 0
    %4277 = vmatpush1.bf16.msra.mxu0 %v3053
    %4278 = vmatprep.subr.bf16.mxu0 0
    %4279 = vmatpush1.bf16.msra.mxu0 %v3054
    %4280 = vmatprep.subr.bf16.mxu0 0
    %4281 = vmatpush1.bf16.msra.mxu0 %v3055
    %4282 = vmatprep.subr.bf16.mxu0 0
    %4283 = vmatpush1.bf16.msra.mxu0 %v3056
    %4284 = vmatprep.subr.bf16.mxu0 0
    %4285 = vmatpush1.bf16.msra.mxu0 %v3057
    %4286 = vmatprep.subr.bf16.mxu0 0
    %4287 = vmatpush1.bf16.msra.mxu0 %v3058
    %4288 = vmatprep.subr.bf16.mxu0 0
    %4289 = vmatpush1.bf16.msra.mxu0 %v3059
    %4290 = vmatprep.subr.bf16.mxu0 0
    %4291 = vmatpush1.bf16.msra.mxu0 %v3060
    %4292 = vmatprep.subr.bf16.mxu0 0
    %4293 = vmatpush1.bf16.msra.mxu0 %v3061
    %4294 = vmatprep.mubr.bf16.mxu0 %v1073
    %4295 = vmatmul.mubr.bf16.gmra.mrb[0].mxu0 %v1059
    %v4296 = vpop.f32.mrb[0].mxu0
    %v4297 = vadd.f32 %v4257, %v4296
    %v4298 = vpop.f32.mrb[0].mxu0
    %v4299 = vpop.f32.mrb[0].mxu0
    %v4300 = vpop.f32.mrb[0].mxu0
    %4301 = vdwg.mxu0
    %4302 = vmatprep.subr.bf16.mxu0 0
    %4303 = vmatpush1.bf16.msra.mxu0 %v3062
    %4304 = vmatprep.subr.bf16.mxu0 0
    %4305 = vmatpush1.bf16.msra.mxu0 %v3063
    %4306 = vmatprep.subr.bf16.mxu0 0
    %4307 = vmatpush1.bf16.msra.mxu0 %v3064
    %4308 = vmatprep.subr.bf16.mxu0 0
    %4309 = vmatpush1.bf16.msra.mxu0 %v3065
    %4310 = vmatprep.subr.bf16.mxu0 0
    %4311 = vmatpush1.bf16.msra.mxu0 %v3066
    %4312 = vmatprep.subr.bf16.mxu0 0
    %4313 = vmatpush1.bf16.msra.mxu0 %v3067
    %4314 = vmatprep.subr.bf16.mxu0 0
    %4315 = vmatpush1.bf16.msra.mxu0 %v3068
    %4316 = vmatprep.subr.bf16.mxu0 0
    %4317 = vmatpush1.bf16.msra.mxu0 %v3069
    %4318 = vmatprep.subr.bf16.mxu0 0
    %4319 = vmatpush1.bf16.msra.mxu0 %v3070
    %4320 = vmatprep.subr.bf16.mxu0 0
    %4321 = vmatpush1.bf16.msra.mxu0 %v3071
    %4322 = vmatprep.subr.bf16.mxu0 0
    %4323 = vmatpush1.bf16.msra.mxu0 %v3072
    %4324 = vmatprep.subr.bf16.mxu0 0
    %4325 = vmatpush1.bf16.msra.mxu0 %v3073
    %4326 = vmatprep.subr.bf16.mxu0 0
    %4327 = vmatpush1.bf16.msra.mxu0 %v3074
    %4328 = vmatprep.subr.bf16.mxu0 0
    %4329 = vmatpush1.bf16.msra.mxu0 %v3075
    %4330 = vmatprep.subr.bf16.mxu0 0
    %4331 = vmatpush1.bf16.msra.mxu0 %v3076
    %4332 = vmatprep.subr.bf16.mxu0 0
    %4333 = vmatpush1.bf16.msra.mxu0 %v3077
    %4334 = vmatprep.mubr.bf16.mxu0 %v1077
    %4335 = vmatmul.mubr.bf16.gmra.mrb[0].mxu0 %v1075
    %v4336 = vpop.f32.mrb[0].mxu0
    %v4337 = vadd.f32 %v4297, %v4336
    %v4338 = vpop.f32.mrb[0].mxu0
    %v4339 = vpop.f32.mrb[0].mxu0
    %v4340 = vpop.f32.mrb[0].mxu0
    %4341 = vdwg.mxu0
    %4342 = vmatprep.subr.bf16.mxu0 0
    %4343 = vmatpush1.bf16.msra.mxu0 %v3078
    %4344 = vmatprep.subr.bf16.mxu0 0
    %4345 = vmatpush1.bf16.msra.mxu0 %v3079
    %4346 = vmatprep.subr.bf16.mxu0 0
    %4347 = vmatpush1.bf16.msra.mxu0 %v3080
    %4348 = vmatprep.subr.bf16.mxu0 0
    %4349 = vmatpush1.bf16.msra.mxu0 %v3081
    %4350 = vmatprep.subr.bf16.mxu0 0
    %4351 = vmatpush1.bf16.msra.mxu0 %v3082
    %4352 = vmatprep.subr.bf16.mxu0 0
    %4353 = vmatpush1.bf16.msra.mxu0 %v3083
    %4354 = vmatprep.subr.bf16.mxu0 0
    %4355 = vmatpush1.bf16.msra.mxu0 %v3084
    %4356 = vmatprep.subr.bf16.mxu0 0
    %4357 = vmatpush1.bf16.msra.mxu0 %v3085
    %4358 = vmatprep.subr.bf16.mxu0 0
    %4359 = vmatpush1.bf16.msra.mxu0 %v3086
    %4360 = vmatprep.subr.bf16.mxu0 0
    %4361 = vmatpush1.bf16.msra.mxu0 %v3087
    %4362 = vmatprep.subr.bf16.mxu0 0
    %4363 = vmatpush1.bf16.msra.mxu0 %v3088
    %4364 = vmatprep.subr.bf16.mxu0 0
    %4365 = vmatpush1.bf16.msra.mxu0 %v3089
    %4366 = vmatprep.subr.bf16.mxu0 0
    %4367 = vmatpush1.bf16.msra.mxu0 %v3090
    %4368 = vmatprep.subr.bf16.mxu0 0
    %4369 = vmatpush1.bf16.msra.mxu0 %v3091
    %4370 = vmatprep.subr.bf16.mxu0 0
    %4371 = vmatpush1.bf16.msra.mxu0 %v3092
    %4372 = vmatprep.subr.bf16.mxu0 0
    %4373 = vmatpush1.bf16.msra.mxu0 %v3093
    %4374 = vmatprep.mubr.bf16.mxu0 %v1115
    %4375 = vmatmul.mubr.bf16.gmra.mrb[0].mxu0 %v1101
    %v4376 = vpop.f32.mrb[0].mxu0
    %v4377 = vadd.f32 %v4337, %v4376
    %v4378 = vpop.f32.mrb[0].mxu0
    %v4379 = vpop.f32.mrb[0].mxu0
    %v4380 = vpop.f32.mrb[0].mxu0
    %4381 = vdwg.mxu0
    %4382 = vmatprep.subr.bf16.mxu0 0
    %4383 = vmatpush1.bf16.msra.mxu0 %v3094
    %4384 = vmatprep.subr.bf16.mxu0 0
    %4385 = vmatpush1.bf16.msra.mxu0 %v3095
    %4386 = vmatprep.subr.bf16.mxu0 0
    %4387 = vmatpush1.bf16.msra.mxu0 %v3096
    %4388 = vmatprep.subr.bf16.mxu0 0
    %4389 = vmatpush1.bf16.msra.mxu0 %v3097
    %4390 = vmatprep.subr.bf16.mxu0 0
    %4391 = vmatpush1.bf16.msra.mxu0 %v3098
    %4392 = vmatprep.subr.bf16.mxu0 0
    %4393 = vmatpush1.bf16.msra.mxu0 %v3099
    %4394 = vmatprep.subr.bf16.mxu0 0
    %4395 = vmatpush1.bf16.msra.mxu0 %v3100
    %4396 = vmatprep.subr.bf16.mxu0 0
    %4397 = vmatpush1.bf16.msra.mxu0 %v3101
    %4398 = vmatprep.subr.bf16.mxu0 0
    %4399 = vmatpush1.bf16.msra.mxu0 %v3102
    %4400 = vmatprep.subr.bf16.mxu0 0
    %4401 = vmatpush1.bf16.msra.mxu0 %v3103
    %4402 = vmatprep.subr.bf16.mxu0 0
    %4403 = vmatpush1.bf16.msra.mxu0 %v3104
    %4404 = vmatprep.subr.bf16.mxu0 0
    %4405 = vmatpush1.bf16.msra.mxu0 %v3105
    %4406 = vmatprep.subr.bf16.mxu0 0
    %4407 = vmatpush1.bf16.msra.mxu0 %v3106
    %4408 = vmatprep.subr.bf16.mxu0 0
    %4409 = vmatpush1.bf16.msra.mxu0 %v3107
    %4410 = vmatprep.subr.bf16.mxu0 0
    %4411 = vmatpush1.bf16.msra.mxu0 %v3108
    %4412 = vmatprep.subr.bf16.mxu0 0
    %4413 = vmatpush1.bf16.msra.mxu0 %v3109
    %4414 = vmatprep.mubr.bf16.mxu0 %v1125
    %4415 = vmatmul.mubr.bf16.gmra.mrb[0].mxu0 %v1123
    %v4416 = vpop.f32.mrb[0].mxu0
    %v4417 = vadd.f32 %v4377, %v4416
    %v4418 = vpop.f32.mrb[0].mxu0
    %v4419 = vpop.f32.mrb[0].mxu0
    %v4420 = vpop.f32.mrb[0].mxu0
    %4421 = vdwg.mxu0
    %4422 = vmatprep.subr.bf16.mxu0 0
    %4423 = vmatpush1.bf16.msra.mxu0 %v3110
    %4424 = vmatprep.subr.bf16.mxu0 0
    %4425 = vmatpush1.bf16.msra.mxu0 %v3111
    %4426 = vmatprep.subr.bf16.mxu0 0
    %4427 = vmatpush1.bf16.msra.mxu0 %v3112
    %4428 = vmatprep.subr.bf16.mxu0 0
    %4429 = vmatpush1.bf16.msra.mxu0 %v3113
    %4430 = vmatprep.subr.bf16.mxu0 0
    %4431 = vmatpush1.bf16.msra.mxu0 %v3114
    %4432 = vmatprep.subr.bf16.mxu0 0
    %4433 = vmatpush1.bf16.msra.mxu0 %v3115
    %4434 = vmatprep.subr.bf16.mxu0 0
    %4435 = vmatpush1.bf16.msra.mxu0 %v3116
    %4436 = vmatprep.subr.bf16.mxu0 0
    %4437 = vmatpush1.bf16.msra.mxu0 %v3117
    %4438 = vmatprep.subr.bf16.mxu0 0
    %4439 = vmatpush1.bf16.msra.mxu0 %v3118
    %4440 = vmatprep.subr.bf16.mxu0 0
    %4441 = vmatpush1.bf16.msra.mxu0 %v3119
    %4442 = vmatprep.subr.bf16.mxu0 0
    %4443 = vmatpush1.bf16.msra.mxu0 %v3120
    %4444 = vmatprep.subr.bf16.mxu0 0
    %4445 = vmatpush1.bf16.msra.mxu0 %v3121
    %4446 = vmatprep.subr.bf16.mxu0 0
    %4447 = vmatpush1.bf16.msra.mxu0 %v3122
    %4448 = vmatprep.subr.bf16.mxu0 0
    %4449 = vmatpush1.bf16.msra.mxu0 %v3123
    %4450 = vmatprep.subr.bf16.mxu0 0
    %4451 = vmatpush1.bf16.msra.mxu0 %v3124
    %4452 = vmatprep.subr.bf16.mxu0 0
    %4453 = vmatpush1.bf16.msra.mxu0 %v3125
    %4454 = vmatprep.mubr.bf16.mxu0 %v1122
    %4455 = vmatmul.mubr.bf16.gmra.mrb[0].mxu0 %v1108
    %v4456 = vpop.f32.mrb[0].mxu0
    %v4457 = vadd.f32 %v4417, %v4456
    %v4458 = vpop.f32.mrb[0].mxu0
    %v4459 = vpop.f32.mrb[0].mxu0
    %v4460 = vpop.f32.mrb[0].mxu0
    %4461 = vdwg.mxu0
    %4462 = vmatprep.subr.bf16.mxu0 0
    %4463 = vmatpush1.bf16.msra.mxu0 %v3126
    %4464 = vmatprep.subr.bf16.mxu0 0
    %4465 = vmatpush1.bf16.msra.mxu0 %v3127
    %4466 = vmatprep.subr.bf16.mxu0 0
    %4467 = vmatpush1.bf16.msra.mxu0 %v3128
    %4468 = vmatprep.subr.bf16.mxu0 0
    %4469 = vmatpush1.bf16.msra.mxu0 %v3129
    %4470 = vmatprep.subr.bf16.mxu0 0
    %4471 = vmatpush1.bf16.msra.mxu0 %v3130
    %4472 = vmatprep.subr.bf16.mxu0 0
    %4473 = vmatpush1.bf16.msra.mxu0 %v3131
    %4474 = vmatprep.subr.bf16.mxu0 0
    %4475 = vmatpush1.bf16.msra.mxu0 %v3132
    %4476 = vmatprep.subr.bf16.mxu0 0
    %4477 = vmatpush1.bf16.msra.mxu0 %v3133
    %4478 = vmatprep.subr.bf16.mxu0 0
    %4479 = vmatpush1.bf16.msra.mxu0 %v3134
    %4480 = vmatprep.subr.bf16.mxu0 0
    %4481 = vmatpush1.bf16.msra.mxu0 %v3135
    %4482 = vmatprep.subr.bf16.mxu0 0
    %4483 = vmatpush1.bf16.msra.mxu0 %v3136
    %4484 = vmatprep.subr.bf16.mxu0 0
    %4485 = vmatpush1.bf16.msra.mxu0 %v3137
    %4486 = vmatprep.subr.bf16.mxu0 0
    %4487 = vmatpush1.bf16.msra.mxu0 %v3138
    %4488 = vmatprep.subr.bf16.mxu0 0
    %4489 = vmatpush1.bf16.msra.mxu0 %v3139
    %4490 = vmatprep.subr.bf16.mxu0 0
    %4491 = vmatpush1.bf16.msra.mxu0 %v3140
    %4492 = vmatprep.subr.bf16.mxu0 0
    %4493 = vmatpush1.bf16.msra.mxu0 %v3141
    %4494 = vmatprep.mubr.bf16.mxu0 %v1126
    %4495 = vmatmul.mubr.bf16.gmra.mrb[0].mxu0 %v1124
    %v4496 = vpop.f32.mrb[0].mxu0
    %v4497 = vadd.f32 %v4457, %v4496
    %v4498 = vpop.f32.mrb[0].mxu0
    %v4499 = vpop.f32.mrb[0].mxu0
    %v4500 = vpop.f32.mrb[0].mxu0
    %4501 = vdwg.mxu0
    %4502 = vmatprep.subr.bf16.mxu0 0
    %4503 = vmatpush1.bf16.msra.mxu0 %v3142
    %4504 = vmatprep.subr.bf16.mxu0 0
    %4505 = vmatpush1.bf16.msra.mxu0 %v3143
    %4506 = vmatprep.subr.bf16.mxu0 0
    %4507 = vmatpush1.bf16.msra.mxu0 %v3144
    %4508 = vmatprep.subr.bf16.mxu0 0
    %4509 = vmatpush1.bf16.msra.mxu0 %v3145
    %4510 = vmatprep.subr.bf16.mxu0 0
    %4511 = vmatpush1.bf16.msra.mxu0 %v3146
    %4512 = vmatprep.subr.bf16.mxu0 0
    %4513 = vmatpush1.bf16.msra.mxu0 %v3147
    %4514 = vmatprep.subr.bf16.mxu0 0
    %4515 = vmatpush1.bf16.msra.mxu0 %v3148
    %4516 = vmatprep.subr.bf16.mxu0 0
    %4517 = vmatpush1.bf16.msra.mxu0 %v3149
    %4518 = vmatprep.subr.bf16.mxu0 0
    %4519 = vmatpush1.bf16.msra.mxu0 0
    %4520 = vmatprep.subr.bf16.mxu0 0
    %4521 = vmatpush1.bf16.msra.mxu0 0
    %4522 = vmatprep.subr.bf16.mxu0 0
    %4523 = vmatpush1.bf16.msra.mxu0 0
    %4524 = vmatprep.subr.bf16.mxu0 0
    %4525 = vmatpush1.bf16.msra.mxu0 0
    %4526 = vmatprep.subr.bf16.mxu0 0
    %4527 = vmatpush1.bf16.msra.mxu0 0
    %4528 = vmatprep.subr.bf16.mxu0 0
    %4529 = vmatpush1.bf16.msra.mxu0 0
    %4530 = vmatprep.subr.bf16.mxu0 0
    %4531 = vmatpush1.bf16.msra.mxu0 0
    %4532 = vmatprep.subr.bf16.mxu0 0
    %4533 = vmatpush1.bf16.msra.mxu0 0
    %4534 = vmatprep.mubr.bf16.mxu0 0
    %4535 = vmatmul.mubr.bf16.gmra.mrb[0].mxu0 %v1140
    %v4536 = vpop.f32.mrb[0].mxu0
    %v4537 = vadd.f32 %v4497, %v4536
    %v4538 = vpop.f32.mrb[0].mxu0
    %v4539 = vpop.f32.mrb[0].mxu0
    %v4540 = vpop.f32.mrb[0].mxu0
    %4541 = vdwg.mxu0
    %v4542 = vmax.f32 %v4537, 0.0
    %v4543 = vpack.c.bf16 %v4542, %v4542
    %v4544 = vld [vmem:[%s3] sm:$0xf]
    %v4545 = vld [vmem:[%s3 + $0x4] sm:$0xf]
    %v4546 = vld [vmem:[%s3 + $0x8] sm:$0xf]
    %v4547 = vld [vmem:[%s3 + $0xc] sm:$0xf]
    %v4548 = vld [vmem:[%s3 + $0x10] sm:$0xf]
    %v4549 = vld [vmem:[%s3 + $0x14] sm:$0xf]
    %v4550 = vld [vmem:[%s3 + $0x18] sm:$0xf]
    %v4551 = vld [vmem:[%s3 + $0x1c] sm:$0xf]
    %v4552 = vld [vmem:[%s3 + $0x20] sm:$0xf]
    %v4553 = vld [vmem:[%s3 + $0x24] sm:$0xf]
    %v4554 = vld [vmem:[%s3 + $0x28] sm:$0xf]
    %v4555 = vld [vmem:[%s3 + $0x2c] sm:$0xf]
    %v4556 = vld [vmem:[%s3 + $0x30] sm:$0x3]
    %v4557 = vld [vmem:[%s4] sm:$0x1]
    %v4559 = vlaneseq
    %v4560 = vshrl.u32 %v4559, 7
    %v4561 = vsub.s32 0, %v4560
    %v4562 = vrot.slane %v4557, %v4561
    %v4577 = vunpack.c.l.b16 %v4544
    %v4578 = vunpack.c.l.b16 %v4545
    %v4579 = vunpack.c.l.b16 %v4546
    %v4580 = vunpack.c.l.b16 %v4547
    %v4581 = vunpack.c.l.b16 %v4548
    %v4582 = vunpack.c.l.b16 %v4549
    %v4583 = vunpack.c.l.b16 %v4550
    %v4584 = vunpack.c.l.b16 %v4551
    %v4585 = vunpack.c.l.b16 %v4552
    %v4586 = vunpack.c.l.b16 %v4553
    %v4587 = vunpack.c.l.b16 %v4554
    %v4588 = vunpack.c.l.b16 %v4555
    %v4589 = vunpack.c.l.b16 %v4556
    %v4590 = vpack.c.b16 %v4578, %v4577
    %v4591 = vpack.c.b16 %v4580, %v4579
    %v4592 = vpack.c.b16 %v4582, %v4581
    %v4593 = vpack.c.b16 %v4584, %v4583
    %v4594 = vpack.c.b16 %v4586, %v4585
    %v4595 = vpack.c.b16 %v4588, %v4587
    %v4596 = vpack.c.b16 %v4589, %v4589
    %vm4603 = vcmask 818176
    %v4605 = vsel %vm4603, %v4543, 0
    %vm4607 = vcmask 1041408
    %v4609 = vsel %vm4607, %v4596, 0
    %4611 = vmatprep.subr.bf16.mxu0 0
    %4612 = vmatpush1.bf16.msra.mxu0 %v4590
    %4613 = vmatprep.subr.bf16.mxu0 0
    %4614 = vmatpush1.bf16.msra.mxu0 %v4591
    %4615 = vmatprep.subr.bf16.mxu0 0
    %4616 = vmatpush1.bf16.msra.mxu0 %v4592
    %4617 = vmatprep.subr.bf16.mxu0 0
    %4618 = vmatpush1.bf16.msra.mxu0 %v4593
    %4619 = vmatprep.subr.bf16.mxu0 0
    %4620 = vmatpush1.bf16.msra.mxu0 %v4594
    %4621 = vmatprep.subr.bf16.mxu0 0
    %4622 = vmatpush1.bf16.msra.mxu0 %v4595
    %4623 = vmatprep.subr.bf16.mxu0 0
    %4624 = vmatpush1.bf16.msra.mxu0 %v4609
    %4625 = vmatprep.subr.bf16.mxu0 0
    %4626 = vmatpush1.bf16.msra.mxu0 0
    %4627 = vmatprep.subr.bf16.mxu0 0
    %4628 = vmatpush1.bf16.msra.mxu0 0
    %4629 = vmatprep.subr.bf16.mxu0 0
    %4630 = vmatpush1.bf16.msra.mxu0 0
    %4631 = vmatprep.subr.bf16.mxu0 0
    %4632 = vmatpush1.bf16.msra.mxu0 0
    %4633 = vmatprep.subr.bf16.mxu0 0
    %4634 = vmatpush1.bf16.msra.mxu0 0
    %4635 = vmatprep.subr.bf16.mxu0 0
    %4636 = vmatpush1.bf16.msra.mxu0 0
    %4637 = vmatprep.subr.bf16.mxu0 0
    %4638 = vmatpush1.bf16.msra.mxu0 0
    %4639 = vmatprep.subr.bf16.mxu0 0
    %4640 = vmatpush1.bf16.msra.mxu0 0
    %4641 = vmatprep.subr.bf16.mxu0 0
    %4642 = vmatpush1.bf16.msra.mxu0 0
    %4643 = vmatprep.mubr.bf16.mxu0 0
    %4644 = vmatmul.mubr.bf16.gmra.mrb[0].mxu0 %v4605
    %v4645 = vpop.f32.mrb[0].mxu0
    %v4646 = vadd.f32 %v4562, %v4645
    %v4647 = vpop.f32.mrb[0].mxu0
    %v4648 = vpop.f32.mrb[0].mxu0
    %v4649 = vpop.f32.mrb[0].mxu0
    %4650 = vdwg.mxu0
    %v4651 = vmax.f32 %v4646, 0.0
    %v4652 = vpack.c.bf16 %v4651, %v4651
    %v4653 = vld [vmem:[%s5] sm:$0xf]
    %v4654 = vld [vmem:[%s5 + $0x4] sm:$0xf]
    %v4655 = vld [vmem:[%s5 + $0x8] sm:$0xf]
    %v4656 = vld [vmem:[%s5 + $0xc] sm:$0xf]
    %v4657 = vld [vmem:[%s5 + $0x10] sm:$0xf]
    %v4658 = vld [vmem:[%s5 + $0x14] sm:$0xf]
    %v4659 = vld [vmem:[%s5 + $0x18] sm:$0x1]
    %v4660 = vld [vmem:[%s6] sm:$0x1]
    %v4662 = vlaneseq
    %v4663 = vshrl.u32 %v4662, 7
    %v4664 = vsub.s32 0, %v4663
    %v4665 = vrot.slane %v4660, %v4664
    %v4674 = vunpack.c.l.b16 %v4653
    %v4675 = vunpack.c.l.b16 %v4654
    %v4676 = vunpack.c.l.b16 %v4655
    %v4677 = vunpack.c.l.b16 %v4656
    %v4678 = vunpack.c.l.b16 %v4657
    %v4679 = vunpack.c.l.b16 %v4658
    %v4680 = vunpack.c.l.b16 %v4659
    %v4681 = vpack.c.b16 %v4675, %v4674
    %v4682 = vpack.c.b16 %v4677, %v4676
    %v4683 = vpack.c.b16 %v4679, %v4678
    %v4684 = vpack.c.b16 %v4680, %v4680
    %vm4688 = vcmask 408576
    %v4690 = vsel %vm4688, %v4652, 0
    %vm4692 = vcmask 1040384
    %v4694 = vsel %vm4692, %v4684, 0
    %4696 = vmatprep.subr.bf16.mxu0 0
    %4697 = vmatpush1.bf16.msra.mxu0 %v4681
    %4698 = vmatprep.subr.bf16.mxu0 0
    %4699 = vmatpush1.bf16.msra.mxu0 %v4682
    %4700 = vmatprep.subr.bf16.mxu0 0
    %4701 = vmatpush1.bf16.msra.mxu0 %v4683
    %4702 = vmatprep.subr.bf16.mxu0 0
    %4703 = vmatpush1.bf16.msra.mxu0 %v4694
    %4704 = vmatprep.subr.bf16.mxu0 0
    %4705 = vmatpush1.bf16.msra.mxu0 0
    %4706 = vmatprep.subr.bf16.mxu0 0
    %4707 = vmatpush1.bf16.msra.mxu0 0
    %4708 = vmatprep.subr.bf16.mxu0 0
    %4709 = vmatpush1.bf16.msra.mxu0 0
    %4710 = vmatprep.subr.bf16.mxu0 0
    %4711 = vmatpush1.bf16.msra.mxu0 0
    %4712 = vmatprep.subr.bf16.mxu0 0
    %4713 = vmatpush1.bf16.msra.mxu0 0
    %4714 = vmatprep.subr.bf16.mxu0 0
    %4715 = vmatpush1.bf16.msra.mxu0 0
    %4716 = vmatprep.subr.bf16.mxu0 0
    %4717 = vmatpush1.bf16.msra.mxu0 0
    %4718 = vmatprep.subr.bf16.mxu0 0
    %4719 = vmatpush1.bf16.msra.mxu0 0
    %4720 = vmatprep.subr.bf16.mxu0 0
    %4721 = vmatpush1.bf16.msra.mxu0 0
    %4722 = vmatprep.subr.bf16.mxu0 0
    %4723 = vmatpush1.bf16.msra.mxu0 0
    %4724 = vmatprep.subr.bf16.mxu0 0
    %4725 = vmatpush1.bf16.msra.mxu0 0
    %4726 = vmatprep.subr.bf16.mxu0 0
    %4727 = vmatpush1.bf16.msra.mxu0 0
    %4728 = vmatprep.mubr.bf16.mxu0 0
    %4729 = vmatmul.mubr.bf16.gmra.mrb[0].mxu0 %v4690
    %v4730 = vpop.f32.mrb[0].mxu0
    %v4731 = vadd.f32 %v4665, %v4730
    %v4732 = vpop.f32.mrb[0].mxu0
    %v4733 = vpop.f32.mrb[0].mxu0
    %v4734 = vpop.f32.mrb[0].mxu0
    %4735 = vdwg.mxu0
    %vm4736 = vcmask 74752
    %4737 = vst.msk [vmem:[#allocation2] sm:$0x3] %vm4736, %v4731
    // Predicated region
    $region30: #{hdr_forward.3} parent=1 // pred_check
      _
    $region31: #{hdr_forward.3} parent=1 // pred_check_branch
      %4739 = sbr.rel (0) target = $region33
    $region32: #{hdr_forward.3} parent=1 // pred_region
      %s4741 = ssub.s32 32, 32
      %4742 = vsyncadd [#allocation3], %s4741
      %s4744 = sshll.u32 [#allocation2], 4
      %s4745 = int_to_ptr.vmem [resolvable:$true] %s4744
      %4747 = dma.vmem_to_hbm [thread:$0]  %s4745, 32, %s7, [#allocation3]
    $region33: #{hdr_forward.3} parent=1 // pred_fallthru
      _
    // Predicated region
    $region34: #{hdr_forward.3} parent=1 // pred_check
      _
    $region35: #{hdr_forward.3} parent=1 // pred_check_branch
      %4749 = sbr.rel (0) target = $region37
    $region36: #{hdr_forward.3} parent=1 // pred_region
      %4750 = dma.done [#allocation3], 32
    $region37: #{hdr_forward.3} parent=1 // pred_fallthru
      _
    %4751 = vsyncpa [#allocation3], 1

</llo_original>
